<compile_context>
chip_gen: v7x
topology: tpu7x:2x2x1
jax: 0.10.0
libtpu: 0.0.40
codegen_flags: <defaults>
</compile_context>

<pallas_src>
import functools

import numpy as np

import jax
import jax.numpy as jnp
from jax.experimental import pallas as pl
from jax.experimental.pallas import tpu as pltpu


_SLACK = 16  # zero head/tail rows of the flat t1 buffer; 16 keeps every bf16
             # store/slice offset sublane-pack aligned and provides the zero
             # read for the "column -1" wrap of the 3x3 conv.


# ----------------------------------------------------------------------------
# Fused Bottleneck kernel: one (batch n, row-tile i) grid step.
#
# Flat "padded width" layout: image row r, column c of the tile lives at flat
# row  _SLACK + (r+1)*wp + c  of the t1 scratch (one halo row above/below the
# core, right zero-pad columns [W, wp)).  With that layout every 3x3 tap is a
# contiguous flat slice, and the dx = -1/+1 neighbours are obtained from the
# zero pad column of the adjacent flat row.
# ----------------------------------------------------------------------------
def _bottleneck_kernel(*refs, th, wp, has_halo):
    if has_halo:
        (xc_ref, xu_ref, xd_ref, w1_ref, w2_ref, w3_ref,
         b1_ref, b2_ref, b3_ref, cm_ref, o_ref, t1_ref) = refs
    else:
        (xc_ref, w1_ref, w2_ref, w3_ref,
         b1_ref, b2_ref, b3_ref, cm_ref, o_ref, t1_ref) = refs
        xu_ref = xd_ref = None

    s = _SLACK
    planes = w1_ref.shape[1]
    cout = w3_ref.shape[1]
    cin = xc_ref.shape[2]
    W = o_ref.shape[2]
    mid = th * wp                       # flat rows of one output tile
    core0 = s + wp                      # first core row in the flat buffer
    p_alloc = t1_ref.shape[0]

    w1 = w1_ref[...]
    b1 = b1_ref[...]

    def stage1(x_chunk, keep):
        # 1x1 conv (BN scale folded into w1) + bias + ReLU + NaN-safe mask.
        z = jnp.dot(x_chunk, w1, preferred_element_type=jnp.float32) + b1
        z = jnp.maximum(z, 0.0)
        return jnp.where(keep, z, 0.0).astype(jnp.bfloat16)

    # ---- stage 1: write planes-wide activations into the flat t1 scratch ---
    t1_ref[0:s, :] = jnp.zeros((s, planes), jnp.bfloat16)          # head slack
    tail = p_alloc - (core0 + mid + wp)
    t1_ref[core0 + mid + wp:p_alloc, :] = jnp.zeros((tail, planes), jnp.bfloat16)

    cm_core = cm_ref[core0:core0 + mid, :] != 0.0                  # (mid, 1)
    t1_ref[core0:core0 + mid, :] = stage1(xc_ref[0], cm_core)

    if has_halo:
        cm_row = cm_ref[s:core0, :] != 0.0                         # (wp, 1)
        i = pl.program_id(1)
        keep_top = jnp.logical_and(cm_row, i != 0)
        keep_bot = jnp.logical_and(cm_row, i != pl.num_programs(1) - 1)
        t1_ref[s:core0, :] = stage1(xu_ref[0], keep_top)
        t1_ref[core0 + mid:core0 + mid + wp, :] = stage1(xd_ref[0], keep_bot)
    else:
        zero_row = jnp.zeros((wp, planes), jnp.bfloat16)
        t1_ref[s:core0, :] = zero_row                              # image row -1
        t1_ref[core0 + mid:core0 + mid + wp, :] = zero_row         # image row H

    # ---- stage 2: 3x3 conv as 3 matmuls with K = 3*planes ------------------
    # Pack the three dx taps into the K dimension: two shifted-by-one-row
    # loads of t1 plus the centre view, lane-concatenated.  The subsequent
    # per-dy LHS slices (row offsets dy*wp) are all sublane-aligned.
    span = mid + 2 * wp
    t1c = jnp.concatenate(
        [t1_ref[s - 1:s - 1 + span, :],     # dx = 0 (left neighbour column)
         t1_ref[s:s + span, :],             # dx = 1 (centre)
         t1_ref[s + 1:s + 1 + span, :]],    # dx = 2 (right neighbour column)
        axis=1)                             # (span, 3*planes) bf16
    acc = jnp.dot(t1c[0:mid, :], w2_ref[0], preferred_element_type=jnp.float32)
    acc = acc + jnp.dot(t1c[wp:wp + mid, :], w2_ref[1],
                        preferred_element_type=jnp.float32)
    acc = acc + jnp.dot(t1c[2 * wp:2 * wp + mid, :], w2_ref[2],
                        preferred_element_type=jnp.float32)
    y2 = jnp.maximum(acc + b2_ref[...], 0.0).astype(jnp.bfloat16)

    # ---- stage 3: 1x1 conv + bias + residual + ReLU, compact bf16 store ----
    z3 = jnp.dot(y2, w3_ref[...], preferred_element_type=jnp.float32)
    z3 = z3.reshape(th, wp, cout)[:, :W, :]                        # drop pad cols
    res = xc_ref[0].astype(jnp.float32).reshape(th, wp, cin)[:, :W, :]
    out = jnp.maximum(z3 + b3_ref[...] + res, 0.0)
    o_ref[...] = out[None].astype(o_ref.dtype)


# ----------------------------------------------------------------------------
# Host-side helpers
# ----------------------------------------------------------------------------
def _round_up(x, m):
    return (x + m - 1) // m * m


def _fold_bn(w_oihw, bn, eps=1e-5):
    """Fold frozen BatchNorm (gamma,beta,mean,var) into conv weight + bias."""
    gamma, beta, mean, var = bn
    s = gamma / jnp.sqrt(var + eps)
    return w_oihw * s[:, None, None, None], beta - mean * s


def _vmem_bytes(th, wp, W, cin, planes, cout, has_halo):
    """Rough per-step VMEM requirement (blocks double-buffered + scratch + temps)."""
    mid = th * wp
    p_alloc = mid + 2 * wp + 2 * _SLACK
    bf2, f4 = 2, 4
    b = 2 * mid * cin * bf2                                        # x core
    if has_halo:
        b += 2 * 2 * wp * cin * bf2                                # row halos
    b += 2 * (cin * planes + 9 * planes * planes + planes * cout) * bf2
    b += 2 * ((2 * planes + cout) * f4 + p_alloc * f4)             # biases+mask
    b += 2 * th * W * cout * bf2                                   # bf16 output
    b += p_alloc * planes * bf2                                    # t1 scratch
    b += (p_alloc * 3 * planes * bf2                               # t1c value
          + mid * planes * f4 + mid * cout * f4                    # acc, z3
          + 2 * th * W * cout * f4)                                # epilogue
    return b


@functools.partial(jax.jit, static_argnames=("force_th",))
def bottleneck_forward(x_nchw, params, force_th=None):
    N, cin, H, W = x_nchw.shape
    planes = params["w1"].shape[0]
    cout = params["w3"].shape[0]
    # stride=1, downsample=None => residual requires cout == cin.
    assert cout == cin, "downsample branch not implemented"

    # ---- fold BN into conv weights / biases (host side, done once) ---------
    w1f, b1 = _fold_bn(params["w1"], params["bn1"])
    w2f, b2 = _fold_bn(params["w2"], params["bn2"])
    w3f, b3 = _fold_bn(params["w3"], params["bn3"])
    w1m = jnp.transpose(w1f[:, :, 0, 0], (1, 0)).astype(jnp.bfloat16)   # (cin, planes)
    # (dy, dx*planes + in, out): the dx taps stacked along K, one matrix per dy.
    w2dy = jnp.transpose(w2f, (2, 3, 1, 0)).reshape(
        3, 3 * planes, planes).astype(jnp.bfloat16)
    w3m = jnp.transpose(w3f[:, :, 0, 0], (1, 0)).astype(jnp.bfloat16)   # (planes, cout)
    b1 = b1.reshape(1, planes).astype(jnp.float32)
    b2 = b2.reshape(1, planes).astype(jnp.float32)
    b3 = b3.reshape(1, cout).astype(jnp.float32)

    # ---- tile geometry ------------------------------------------------------
    s = _SLACK
    wp = _round_up(W + 1, 16)           # >=1 zero pad column, 16-row aligned
    budget = 28 * 1024 * 1024           # per-step VMEM budget (v7x-safe)
    if force_th is not None:
        assert H % force_th == 0
        th = force_th
    else:
        th = H                          # prefer a full-image tile (no halos)
        if _vmem_bytes(H, wp, W, cin, planes, cout, False) > budget:
            th = 1
            for d in range(H - 1, 0, -1):
                if H % d == 0 and _vmem_bytes(d, wp, W, cin, planes, cout, True) <= budget:
                    th = d
                    break
    has_halo = th != H
    ht = H // th
    mid = th * wp
    p_alloc = mid + 2 * wp + 2 * _SLACK

    # NCHW -> NHWC bf16 + right zero-pad width to wp + flatten (H,wp) -> rows.
    # One fused XLA layout pass (the layout change is needed anyway).
    xp = jnp.transpose(x_nchw, (0, 2, 3, 1)).astype(jnp.bfloat16)
    xp = jnp.pad(xp, ((0, 0), (0, 0), (0, wp - W), (0, 0)))
    xp = xp.reshape(N, H * wp, cin)

    # Column mask over the flat padded layout: 1.0 on real image columns.
    pos = np.arange(p_alloc)
    colmask = (((pos - s) % wp) < W).astype(np.float32).reshape(p_alloc, 1)
    colmask = jnp.asarray(colmask)

    kernel = functools.partial(_bottleneck_kernel, th=th, wp=wp,
                               has_halo=has_halo)

    in_specs = [pl.BlockSpec((1, mid, cin), lambda n, i: (n, i, 0))]   # core rows
    inputs = [xp]
    if has_halo:
        in_specs += [
            # 1-row halo above / below the tile (clamped at the image edge;
            # masked to zero in-kernel at the edges).
            pl.BlockSpec((1, wp, cin),
                         lambda n, i: (n, jnp.maximum(i * th - 1, 0), 0)),
            pl.BlockSpec((1, wp, cin),
                         lambda n, i: (n, jnp.minimum(i * th + th, H - 1), 0)),
        ]
        inputs += [xp, xp]
    in_specs += [
        pl.BlockSpec((cin, planes), lambda n, i: (0, 0)),              # w1
        pl.BlockSpec((3, 3 * planes, planes), lambda n, i: (0, 0, 0)), # w2 (per dy)
        pl.BlockSpec((planes, cout), lambda n, i: (0, 0)),             # w3
        pl.BlockSpec((1, planes), lambda n, i: (0, 0)),                # b1
        pl.BlockSpec((1, planes), lambda n, i: (0, 0)),                # b2
        pl.BlockSpec((1, cout), lambda n, i: (0, 0)),                  # b3
        pl.BlockSpec((p_alloc, 1), lambda n, i: (0, 0)),               # colmask
    ]
    inputs += [w1m, w2dy, w3m, b1, b2, b3, colmask]

    vmem_need = _vmem_bytes(th, wp, W, cin, planes, cout, has_halo)
    vmem_limit = int(min(max(2 * vmem_need, 8 * 1024 * 1024), 40 * 1024 * 1024))

    out_nhwc = pl.pallas_call(
        kernel,
        out_shape=jax.ShapeDtypeStruct((N, H, W, cout), jnp.bfloat16),
        grid_spec=pltpu.PrefetchScalarGridSpec(
            num_scalar_prefetch=0,
            grid=(N, ht),
            in_specs=in_specs,
            out_specs=pl.BlockSpec((1, th, W, cout), lambda n, i: (n, i, 0, 0)),
            scratch_shapes=[pltpu.VMEM((p_alloc, planes), jnp.bfloat16)],
        ),
        compiler_params=pltpu.CompilerParams(
            dimension_semantics=("parallel", "parallel"),
            vmem_limit_bytes=vmem_limit,
        ),
    )(*inputs)

    # Demo epilogue only: a single bf16-read / f32-write transpose back to the
    # module's NCHW layout.  Chained Bottlenecks would keep the NHWC bf16.
    return jnp.transpose(out_nhwc, (0, 3, 1, 2)).astype(jnp.float32)


# ----------------------------------------------------------------------------
# Pure-JAX f32 reference (for correctness check)
# ----------------------------------------------------------------------------
def bottleneck_reference(x, params, eps=1e-5):
    def conv(x, w, stride=1, pad=0):
        return jax.lax.conv_general_dilated(
            x, w, (stride, stride), [(pad, pad), (pad, pad)],
            dimension_numbers=("NCHW", "OIHW", "NCHW"))

    def bn(x, stats):
        gamma, beta, mean, var = stats
        s = gamma / jnp.sqrt(var + eps)
        b = beta - mean * s
        return x * s[None, :, None, None] + b[None, :, None, None]

    out = jax.nn.relu(bn(conv(x, params["w1"]), params["bn1"]))
    out = jax.nn.relu(bn(conv(out, params["w2"], 1, 1), params["bn2"]))
    out = bn(conv(out, params["w3"]), params["bn3"])
    return jax.nn.relu(out + x)


# ----------------------------------------------------------------------------
def make_params(inplanes, planes, key):
    k1, k2, k3 = jax.random.split(key, 3)

    def bn_stats(c, base):
        gamma = jnp.linspace(0.9, 1.1, c, dtype=jnp.float32)
        beta = jnp.linspace(-0.1, 0.1, c, dtype=jnp.float32)
        mean = jnp.linspace(-0.05, 0.05, c, dtype=jnp.float32) * base
        var = jnp.linspace(0.5, 1.5, c, dtype=jnp.float32)
        return (gamma, beta, mean, var)

    return {
        "w1": 0.1 * jax.random.normal(k1, (planes, inplanes, 1, 1), jnp.float32),
        "bn1": bn_stats(planes, 1.0),
        "w2": 0.1 * jax.random.normal(k2, (planes, planes, 3, 3), jnp.float32),
        "bn2": bn_stats(planes, 0.5),
        "w3": 0.1 * jax.random.normal(k3, (planes * 4, planes, 1, 1), jnp.float32),
        "bn3": bn_stats(planes * 4, 0.25),
    }


if __name__ == "__main__":
    inplanes, planes = 16, 4          # residual add requires inplanes == planes*4
    N, H, W = 2, 16, 16

    key = jax.random.PRNGKey(0)
    kx, kp = jax.random.split(key)
    x = jax.random.normal(kx, (N, inplanes, H, W), jnp.float32)
    params = make_params(inplanes, planes, kp)

    ref = jax.block_until_ready(bottleneck_reference(x, params))

    # Default path: full-image tile, no halo inputs.
    out = jax.block_until_ready(bottleneck_forward(x, params))
    assert out.shape == (N, planes * 4, H, W), out.shape
    err = float(jnp.max(jnp.abs(out - ref)))
    # bf16 MXU operands + bf16 output vs. an all-f32 reference.
    assert jnp.allclose(out, ref, atol=5e-2, rtol=5e-2), err

    # Row-tiled path with 1-row halos (exercised explicitly for coverage).
    out2 = jax.block_until_ready(bottleneck_forward(x, params, force_th=H // 2))
    err2 = float(jnp.max(jnp.abs(out2 - ref)))
    assert jnp.allclose(out2, ref, atol=5e-2, rtol=5e-2), err2

    print("KERNEL_OK")
</pallas_src>

<mosaic_0001>
module attributes {stable_mosaic.version = 11 : i64} {
  func.func @_bottleneck_kernel(%arg0: i32, %arg1: i32, %arg2: memref<1x512x16xbf16, #tpu.memory_space<vmem>>, %arg3: memref<16x4xbf16, #tpu.memory_space<vmem>>, %arg4: memref<3x12x4xbf16, #tpu.memory_space<vmem>>, %arg5: memref<4x16xbf16, #tpu.memory_space<vmem>>, %arg6: memref<1x4xf32, #tpu.memory_space<vmem>>, %arg7: memref<1x4xf32, #tpu.memory_space<vmem>>, %arg8: memref<1x16xf32, #tpu.memory_space<vmem>>, %arg9: memref<608x1xf32, #tpu.memory_space<vmem>>, %arg10: memref<1x16x16x16xbf16, #tpu.memory_space<vmem>>, %arg11: memref<608x4xbf16, #tpu.memory_space<vmem>>) attributes {dimension_semantics = [#tpu.dimension_semantics<parallel>, #tpu.dimension_semantics<parallel>], iteration_bounds = array<i64: 2, 1>, scalar_prefetch = 0 : i64, scratch_operands = 1 : i64, tpu.core_type = #tpu.core_type<tc>, window_params = [{transform_indices = @transform_0, window_bounds = array<i64: 1, 512, 16>}, {pipeline_mode = #tpu.pipeline_mode<synchronous>, transform_indices = @transform_1, window_bounds = array<i64: 16, 4>}, {pipeline_mode = #tpu.pipeline_mode<synchronous>, transform_indices = @transform_2, window_bounds = array<i64: 3, 12, 4>}, {pipeline_mode = #tpu.pipeline_mode<synchronous>, transform_indices = @transform_3, window_bounds = array<i64: 4, 16>}, {pipeline_mode = #tpu.pipeline_mode<synchronous>, transform_indices = @transform_4, window_bounds = array<i64: 1, 4>}, {pipeline_mode = #tpu.pipeline_mode<synchronous>, transform_indices = @transform_5, window_bounds = array<i64: 1, 4>}, {pipeline_mode = #tpu.pipeline_mode<synchronous>, transform_indices = @transform_6, window_bounds = array<i64: 1, 16>}, {pipeline_mode = #tpu.pipeline_mode<synchronous>, transform_indices = @transform_7, window_bounds = array<i64: 608, 1>}, {transform_indices = @transform_8, window_bounds = array<i64: 1, 16, 16, 16>}]} {
    %c0 = arith.constant 0 : index
    %c0_0 = arith.constant 0 : index
    %0 = vector.load %arg3[%c0, %c0_0] : memref<16x4xbf16, #tpu.memory_space<vmem>>, vector<16x4xbf16>
    %c0_1 = arith.constant 0 : index
    %c0_2 = arith.constant 0 : index
    %1 = vector.load %arg6[%c0_1, %c0_2] : memref<1x4xf32, #tpu.memory_space<vmem>>, vector<1x4xf32>
    %cst = arith.constant 0.000000e+00 : bf16
    %2 = vector.broadcast %cst : bf16 to vector<16x4xbf16>
    %c0_3 = arith.constant 0 : index
    %c0_4 = arith.constant 0 : index
    %3 = vector.load %arg11[%c0_3, %c0_4] : memref<608x4xbf16, #tpu.memory_space<vmem>>, vector<16x4xbf16>
    tpu.vector_store %arg11[%c0_3, %c0_4], %2 {strides = array<i32>} : memref<608x4xbf16, #tpu.memory_space<vmem>>, vector<16x4xbf16>,
    %cst_5 = arith.constant 0.000000e+00 : bf16
    %4 = vector.broadcast %cst_5 : bf16 to vector<16x4xbf16>
    %c592 = arith.constant 592 : index
    %c0_6 = arith.constant 0 : index
    %5 = vector.load %arg11[%c592, %c0_6] : memref<608x4xbf16, #tpu.memory_space<vmem>>, vector<16x4xbf16>
    tpu.vector_store %arg11[%c592, %c0_6], %4 {strides = array<i32>} : memref<608x4xbf16, #tpu.memory_space<vmem>>, vector<16x4xbf16>,
    %c48 = arith.constant 48 : index
    %c0_7 = arith.constant 0 : index
    %6 = vector.load %arg9[%c48, %c0_7] : memref<608x1xf32, #tpu.memory_space<vmem>>, vector<512x1xf32>
    %cst_8 = arith.constant 0.000000e+00 : f32
    %7 = vector.broadcast %cst_8 : f32 to vector<512x1xf32>
    %8 = arith.cmpf one, %6, %7 : vector<512x1xf32>
    %c0_9 = arith.constant 0 : index
    %c0_10 = arith.constant 0 : index
    %c0_11 = arith.constant 0 : index
    %9 = vector.load %arg2[%c0_9, %c0_10, %c0_11] : memref<1x512x16xbf16, #tpu.memory_space<vmem>>, vector<1x512x16xbf16>
    %10 = vector.shape_cast %9 : vector<1x512x16xbf16> to vector<512x16xbf16>
    %cst_12 = arith.constant dense<0.000000e+00> : vector<512x4xf32>
    %11 = tpu.matmul %10, %0, %cst_12 {dimension_numbers = #tpu.dot_dimension_numbers<[1], [0], [0], [1], [0, 0, 1, 1], [], []>} : vector<512x16xbf16>, vector<16x4xbf16>, vector<512x4xf32> -> vector<512x4xf32>
    %12 = vector.broadcast %1 : vector<1x4xf32> to vector<512x4xf32>
    %13 = arith.addf %11, %12 : vector<512x4xf32>
    %cst_13 = arith.constant 0.000000e+00 : f32
    %14 = vector.broadcast %cst_13 : f32 to vector<512x4xf32>
    %15 = arith.maximumf %13, %14 : vector<512x4xf32>
    %cst_14 = arith.constant 0.000000e+00 : f32
    %16 = vector.shape_cast %8 : vector<512x1xi1> to vector<512x1xi1>
    %17 = vector.broadcast %16 : vector<512x1xi1> to vector<512x4xi1>
    %18 = vector.broadcast %cst_14 : f32 to vector<512x4xf32>
    %19 = arith.select %17, %15, %18 : vector<512x4xi1>, vector<512x4xf32>
    %20 = arith.truncf %19 : vector<512x4xf32> to vector<512x4xbf16>
    %c48_15 = arith.constant 48 : index
    %c0_16 = arith.constant 0 : index
    %21 = vector.load %arg11[%c48_15, %c0_16] : memref<608x4xbf16, #tpu.memory_space<vmem>>, vector<512x4xbf16>
    tpu.vector_store %arg11[%c48_15, %c0_16], %20 {strides = array<i32>} : memref<608x4xbf16, #tpu.memory_space<vmem>>, vector<512x4xbf16>,
    %cst_17 = arith.constant 0.000000e+00 : bf16
    %22 = vector.broadcast %cst_17 : bf16 to vector<32x4xbf16>
    %c16 = arith.constant 16 : index
    %c0_18 = arith.constant 0 : index
    %23 = vector.load %arg11[%c16, %c0_18] : memref<608x4xbf16, #tpu.memory_space<vmem>>, vector<32x4xbf16>
    tpu.vector_store %arg11[%c16, %c0_18], %22 {strides = array<i32>} : memref<608x4xbf16, #tpu.memory_space<vmem>>, vector<32x4xbf16>,
    %c560 = arith.constant 560 : index
    %c0_19 = arith.constant 0 : index
    %24 = vector.load %arg11[%c560, %c0_19] : memref<608x4xbf16, #tpu.memory_space<vmem>>, vector<32x4xbf16>
    tpu.vector_store %arg11[%c560, %c0_19], %22 {strides = array<i32>} : memref<608x4xbf16, #tpu.memory_space<vmem>>, vector<32x4xbf16>,
    %c15 = arith.constant 15 : index
    %c0_20 = arith.constant 0 : index
    %25 = vector.load %arg11[%c15, %c0_20] : memref<608x4xbf16, #tpu.memory_space<vmem>>, vector<576x4xbf16>
    %c16_21 = arith.constant 16 : index
    %c0_22 = arith.constant 0 : index
    %26 = vector.load %arg11[%c16_21, %c0_22] : memref<608x4xbf16, #tpu.memory_space<vmem>>, vector<576x4xbf16>
    %c17 = arith.constant 17 : index
    %c0_23 = arith.constant 0 : index
    %27 = vector.load %arg11[%c17, %c0_23] : memref<608x4xbf16, #tpu.memory_space<vmem>>, vector<576x4xbf16>
    %28 = tpu.concatenate %25, %26, %27 in 1 : vector<576x4xbf16>, vector<576x4xbf16>, vector<576x4xbf16> -> vector<576x12xbf16>
    %29 = vector.extract_strided_slice %28 {offsets = [0, 0], sizes = [512, 12], strides = [1, 1]} : vector<576x12xbf16> to vector<512x12xbf16>
    %c0_24 = arith.constant 0 : index
    %c0_25 = arith.constant 0 : index
    %c0_26 = arith.constant 0 : index
    %30 = vector.load %arg4[%c0_24, %c0_25, %c0_26] : memref<3x12x4xbf16, #tpu.memory_space<vmem>>, vector<1x12x4xbf16>
    %31 = vector.shape_cast %30 : vector<1x12x4xbf16> to vector<12x4xbf16>
    %cst_27 = arith.constant dense<0.000000e+00> : vector<512x4xf32>
    %32 = tpu.matmul %29, %31, %cst_27 {dimension_numbers = #tpu.dot_dimension_numbers<[1], [0], [0], [1], [0, 0, 1, 1], [], []>} : vector<512x12xbf16>, vector<12x4xbf16>, vector<512x4xf32> -> vector<512x4xf32>
    %33 = vector.extract_strided_slice %28 {offsets = [32, 0], sizes = [512, 12], strides = [1, 1]} : vector<576x12xbf16> to vector<512x12xbf16>
    %c1 = arith.constant 1 : index
    %c0_28 = arith.constant 0 : index
    %c0_29 = arith.constant 0 : index
    %34 = vector.load %arg4[%c1, %c0_28, %c0_29] : memref<3x12x4xbf16, #tpu.memory_space<vmem>>, vector<1x12x4xbf16>
    %35 = vector.shape_cast %34 : vector<1x12x4xbf16> to vector<12x4xbf16>
    %cst_30 = arith.constant dense<0.000000e+00> : vector<512x4xf32>
    %36 = tpu.matmul %33, %35, %cst_30 {dimension_numbers = #tpu.dot_dimension_numbers<[1], [0], [0], [1], [0, 0, 1, 1], [], []>} : vector<512x12xbf16>, vector<12x4xbf16>, vector<512x4xf32> -> vector<512x4xf32>
    %37 = arith.addf %32, %36 : vector<512x4xf32>
    %38 = vector.extract_strided_slice %28 {offsets = [64, 0], sizes = [512, 12], strides = [1, 1]} : vector<576x12xbf16> to vector<512x12xbf16>
    %c2 = arith.constant 2 : index
    %c0_31 = arith.constant 0 : index
    %c0_32 = arith.constant 0 : index
    %39 = vector.load %arg4[%c2, %c0_31, %c0_32] : memref<3x12x4xbf16, #tpu.memory_space<vmem>>, vector<1x12x4xbf16>
    %40 = vector.shape_cast %39 : vector<1x12x4xbf16> to vector<12x4xbf16>
    %cst_33 = arith.constant dense<0.000000e+00> : vector<512x4xf32>
    %41 = tpu.matmul %38, %40, %cst_33 {dimension_numbers = #tpu.dot_dimension_numbers<[1], [0], [0], [1], [0, 0, 1, 1], [], []>} : vector<512x12xbf16>, vector<12x4xbf16>, vector<512x4xf32> -> vector<512x4xf32>
    %42 = arith.addf %37, %41 : vector<512x4xf32>
    %c0_34 = arith.constant 0 : index
    %c0_35 = arith.constant 0 : index
    %43 = vector.load %arg7[%c0_34, %c0_35] : memref<1x4xf32, #tpu.memory_space<vmem>>, vector<1x4xf32>
    %44 = vector.broadcast %43 : vector<1x4xf32> to vector<512x4xf32>
    %45 = arith.addf %42, %44 : vector<512x4xf32>
    %cst_36 = arith.constant 0.000000e+00 : f32
    %46 = vector.broadcast %cst_36 : f32 to vector<512x4xf32>
    %47 = arith.maximumf %45, %46 : vector<512x4xf32>
    %48 = arith.truncf %47 : vector<512x4xf32> to vector<512x4xbf16>
    %c0_37 = arith.constant 0 : index
    %c0_38 = arith.constant 0 : index
    %49 = vector.load %arg5[%c0_37, %c0_38] : memref<4x16xbf16, #tpu.memory_space<vmem>>, vector<4x16xbf16>
    %cst_39 = arith.constant dense<0.000000e+00> : vector<512x16xf32>
    %50 = tpu.matmul %48, %49, %cst_39 {dimension_numbers = #tpu.dot_dimension_numbers<[1], [0], [0], [1], [0, 0, 1, 1], [], []>} : vector<512x4xbf16>, vector<4x16xbf16>, vector<512x16xf32> -> vector<512x16xf32>
    %51 = vector.shape_cast %50 : vector<512x16xf32> to vector<16x32x16xf32>
    %52 = vector.extract_strided_slice %51 {offsets = [0, 0, 0], sizes = [16, 16, 16], strides = [1, 1, 1]} : vector<16x32x16xf32> to vector<16x16x16xf32>
    %c0_40 = arith.constant 0 : index
    %c0_41 = arith.constant 0 : index
    %c0_42 = arith.constant 0 : index
    %53 = vector.load %arg2[%c0_40, %c0_41, %c0_42] : memref<1x512x16xbf16, #tpu.memory_space<vmem>>, vector<1x512x16xbf16>
    %54 = vector.shape_cast %53 : vector<1x512x16xbf16> to vector<512x16xbf16>
    %55 = arith.extf %54 : vector<512x16xbf16> to vector<512x16xf32>
    %56 = vector.shape_cast %55 : vector<512x16xf32> to vector<16x32x16xf32>
    %57 = vector.extract_strided_slice %56 {offsets = [0, 0, 0], sizes = [16, 16, 16], strides = [1, 1, 1]} : vector<16x32x16xf32> to vector<16x16x16xf32>
    %c0_43 = arith.constant 0 : index
    %c0_44 = arith.constant 0 : index
    %58 = vector.load %arg8[%c0_43, %c0_44] : memref<1x16xf32, #tpu.memory_space<vmem>>, vector<1x16xf32>
    %59 = vector.shape_cast %58 : vector<1x16xf32> to vector<1x1x16xf32>
    %60 = vector.broadcast %59 : vector<1x1x16xf32> to vector<16x16x16xf32>
    %61 = arith.addf %52, %60 : vector<16x16x16xf32>
    %62 = arith.addf %61, %57 : vector<16x16x16xf32>
    %cst_45 = arith.constant 0.000000e+00 : f32
    %63 = vector.broadcast %cst_45 : f32 to vector<16x16x16xf32>
    %64 = arith.maximumf %62, %63 : vector<16x16x16xf32>
    %65 = vector.shape_cast %64 : vector<16x16x16xf32> to vector<1x16x16x16xf32>
    %66 = arith.truncf %65 : vector<1x16x16x16xf32> to vector<1x16x16x16xbf16>
    %c0_46 = arith.constant 0 : index
    %c0_47 = arith.constant 0 : index
    %c0_48 = arith.constant 0 : index
    %c0_49 = arith.constant 0 : index
    %67 = vector.load %arg10[%c0_46, %c0_47, %c0_48, %c0_49] : memref<1x16x16x16xbf16, #tpu.memory_space<vmem>>, vector<1x16x16x16xbf16>
    tpu.vector_store %arg10[%c0_46, %c0_47, %c0_48, %c0_49], %66 {strides = array<i32>} : memref<1x16x16x16xbf16, #tpu.memory_space<vmem>>, vector<1x16x16x16xbf16>,
    return
  }
  func.func @transform_0(%arg0: i32, %arg1: i32) -> (i32, i32, i32) {
    %c0_i32 = arith.constant 0 : i32
    %c0_i32_0 = arith.constant 0 : i32
    return %arg0, %arg1, %c0_i32 : i32, i32, i32
  }
  func.func @transform_1(%arg0: i32, %arg1: i32) -> (i32, i32) {
    %c0_i32 = arith.constant 0 : i32
    %c0_i32_0 = arith.constant 0 : i32
    %c0_i32_1 = arith.constant 0 : i32
    return %c0_i32, %c0_i32_0 : i32, i32
  }
  func.func @transform_2(%arg0: i32, %arg1: i32) -> (i32, i32, i32) {
    %c0_i32 = arith.constant 0 : i32
    %c0_i32_0 = arith.constant 0 : i32
    %c0_i32_1 = arith.constant 0 : i32
    %c0_i32_2 = arith.constant 0 : i32
    return %c0_i32, %c0_i32_0, %c0_i32_1 : i32, i32, i32
  }
  func.func @transform_3(%arg0: i32, %arg1: i32) -> (i32, i32) {
    %c0_i32 = arith.constant 0 : i32
    %c0_i32_0 = arith.constant 0 : i32
    %c0_i32_1 = arith.constant 0 : i32
    return %c0_i32, %c0_i32_0 : i32, i32
  }
  func.func @transform_4(%arg0: i32, %arg1: i32) -> (i32, i32) {
    %c0_i32 = arith.constant 0 : i32
    %c0_i32_0 = arith.constant 0 : i32
    %c0_i32_1 = arith.constant 0 : i32
    return %c0_i32, %c0_i32_0 : i32, i32
  }
  func.func @transform_5(%arg0: i32, %arg1: i32) -> (i32, i32) {
    %c0_i32 = arith.constant 0 : i32
    %c0_i32_0 = arith.constant 0 : i32
    %c0_i32_1 = arith.constant 0 : i32
    return %c0_i32, %c0_i32_0 : i32, i32
  }
  func.func @transform_6(%arg0: i32, %arg1: i32) -> (i32, i32) {
    %c0_i32 = arith.constant 0 : i32
    %c0_i32_0 = arith.constant 0 : i32
    %c0_i32_1 = arith.constant 0 : i32
    return %c0_i32, %c0_i32_0 : i32, i32
  }
  func.func @transform_7(%arg0: i32, %arg1: i32) -> (i32, i32) {
    %c0_i32 = arith.constant 0 : i32
    %c0_i32_0 = arith.constant 0 : i32
    %c0_i32_1 = arith.constant 0 : i32
    return %c0_i32, %c0_i32_0 : i32, i32
  }
  func.func @transform_8(%arg0: i32, %arg1: i32) -> (i32, i32, i32, i32) {
    %c0_i32 = arith.constant 0 : i32
    %c0_i32_0 = arith.constant 0 : i32
    %c0_i32_1 = arith.constant 0 : i32
    return %arg0, %arg1, %c0_i32, %c0_i32_0 : i32, i32, i32, i32
  }
}

</mosaic_0001>

<llo_original>
// kernel: bottleneck_forward.1
$region0: #{bottleneck_forward.1}
  #allocation0 [shape = 'u32[]', space=smem, size = 0x4, offset = 0x4, fixed_abs, tag = 'smem constant byte address 0x4 - core index']
  #allocation1 [shape = 'u32[144,128]{1,0:T(1,128)}', space=vmem, size = 0x12000, scoped, tag = 'internal scratch']
  #allocation2 [shape = 'bf16[608,4]{1,0:T(16,128)(2,1)}', space=vmem, size = 0x26000, scoped, tag = 'scratch operand']
  %s0 = inlined_call_operand.vmem [shape: bf16[2,512,16], index: 0, kind: input, shape index: {}]
  %s1 = inlined_call_operand.vmem [shape: bf16[16,4], index: 1, kind: input, shape index: {}]
  %s2 = inlined_call_operand.vmem [shape: bf16[3,12,4], index: 2, kind: input, shape index: {}]
  %s3 = inlined_call_operand.vmem [shape: bf16[4,16], index: 3, kind: input, shape index: {}]
  %s4 = inlined_call_operand.vmem [shape: f32[1,4], index: 4, kind: input, shape index: {}]
  %s5 = inlined_call_operand.vmem [shape: f32[1,4], index: 5, kind: input, shape index: {}]
  %s6 = inlined_call_operand.vmem [shape: f32[1,16], index: 6, kind: input, shape index: {}]
  %s7 = inlined_call_operand.vmem [shape: f32[608,1], index: 7, kind: input, shape index: {}]
  %s8 = inlined_call_operand.vmem [shape: bf16[2,16,16,16], index: 8, kind: output, shape index: {}]
  %s9 = sld [smem:[#allocation0]]
  $region65: #{bottleneck_forward.1} parent=0
    _
  %s11 = ssub.s32 1, %s9
  %s12 = scalar_select 0, %s11, %s9
  loop: start=0, step=1, limit=4
  $region2: #{bottleneck_forward.1} parent=0 // loop_pre_header
    _
  $region3: #{bottleneck_forward.1} parent=0 // loop_header
    %s14 = sphi 0, %s18
    %p15 = scmp.ge.s32.totalorder %s14, 4
    %s21 = sphi 0, %s33
    %s22 = sphi 0, %s29
    %s23 = sphi 0, %s21
    %s24 = sphi 0, %s22
    %s25 = sphi 0, %s23
    %s26 = sphi 0, %s24
    %s38 = sphi 0, %s40
    %s41 = sphi 0, %s38
    %s42 = sphi 0, %s41
    %s58 = sphi 0, %s42
    %s62 = sphi 0, %s62
    %s64 = sphi 0, %s62
    %s65 = sphi 0, %s64
    %s79 = sphi 0, %s65
    %s83 = sphi 0, %s83
    %s85 = sphi 0, %s83
    %s86 = sphi 0, %s85
    %s100 = sphi 0, %s86
    %s104 = sphi 0, %s104
    %s106 = sphi 0, %s104
    %s107 = sphi 0, %s106
    %s121 = sphi 0, %s107
    %s125 = sphi 0, %s125
    %s127 = sphi 0, %s125
    %s128 = sphi 0, %s127
    %s142 = sphi 0, %s128
    %s146 = sphi 0, %s146
    %s148 = sphi 0, %s146
    %s149 = sphi 0, %s148
    %s163 = sphi 0, %s149
    %s167 = sphi 0, %s167
    %s169 = sphi 0, %s167
    %s170 = sphi 0, %s169
    %s184 = sphi 0, %s170
    %s188 = sphi 0, %s188
    %s190 = sphi 0, %s188
    %s191 = sphi 0, %s190
    %s205 = sphi 0, %s191
    %s213 = sphi 0, %s215
    %s216 = sphi 0, %s213
    %s217 = sphi 0, %s216
    %s233 = sphi 0, %s217
  $region4: #{bottleneck_forward.1} parent=0 // loop_header_branch
    %17 = sbr.rel (%p15) target = $region8
  $region5: #{bottleneck_forward.1} parent=0 // loop_body
    %s19 = ssub.s32 %s14, 1
    %s20 = ssub.s32 %s14, 2
    %s27 = sadd.s32 1, %s22
    %p28 = scmp.ge.s32.totalorder %s27, 1
    %s29 = scalar_select %p28, 0, %s27
    %s30 = sadd.s32 1, %s21
    %s31 = scalar_select %p28, %s30, %s21
    %p32 = scmp.ge.s32.totalorder %s31, 2
    %s33 = scalar_select %p32, 0, %s31
    %s34 = ssub.s32 %s21, %s33
    %s35 = ssub.s32 %s22, %s29
    %s36 = sor.u32 %s34, %s35
    %p37 = scmp.eq.s32.totalorder %s36, 0
    %s39 = sadd.s32 %s38, 1
    %s40 = scalar_select %p37, %s38, %s39
    %p43 = pneg %p37
    %p44 = scmp.eq.s32.totalorder %s14, 1
    %p45 = por %p43, %p44
    %p46 = scmp.ne.s32.totalorder %s38, %s41
    %p47 = scmp.eq.s32.totalorder %s14, 0
    %p48 = por %p46, %p47
    %p49 = scmp.ne.s32.totalorder %s38, %s41
    %p50 = scmp.eq.s32.totalorder %s19, 1
    %p51 = por %p49, %p50
    %p52 = scmp.ne.s32.totalorder %s41, %s42
    %p53 = scmp.eq.s32.totalorder %s19, 0
    %p54 = por %p52, %p53
    %p55 = scmp.ne.s32.totalorder %s41, %s42
    %p56 = scmp.eq.s32.totalorder %s20, 1
    %p57 = por %p55, %p56
    %p59 = scmp.ne.s32.totalorder %s42, %s58
    %p60 = scmp.eq.s32.totalorder %s20, 0
    %p61 = por %p59, %p60
    %s63 = sadd.s32 %s62, 1
    %p66 = scmp.eq.s32.totalorder %s14, 1
    %p67 = scmp.ne.s32.totalorder %s62, %s64
    %p68 = scmp.eq.s32.totalorder %s14, 0
    %p69 = por %p67, %p68
    %p70 = scmp.ne.s32.totalorder %s62, %s64
    %p71 = scmp.eq.s32.totalorder %s19, 1
    %p72 = por %p70, %p71
    %p73 = scmp.ne.s32.totalorder %s64, %s65
    %p74 = scmp.eq.s32.totalorder %s19, 0
    %p75 = por %p73, %p74
    %p76 = scmp.ne.s32.totalorder %s64, %s65
    %p77 = scmp.eq.s32.totalorder %s20, 1
    %p78 = por %p76, %p77
    %p80 = scmp.ne.s32.totalorder %s65, %s79
    %p81 = scmp.eq.s32.totalorder %s20, 0
    %p82 = por %p80, %p81
    %s84 = sadd.s32 %s83, 1
    %p87 = scmp.eq.s32.totalorder %s14, 1
    %p88 = scmp.ne.s32.totalorder %s83, %s85
    %p89 = scmp.eq.s32.totalorder %s14, 0
    %p90 = por %p88, %p89
    %p91 = scmp.ne.s32.totalorder %s83, %s85
    %p92 = scmp.eq.s32.totalorder %s19, 1
    %p93 = por %p91, %p92
    %p94 = scmp.ne.s32.totalorder %s85, %s86
    %p95 = scmp.eq.s32.totalorder %s19, 0
    %p96 = por %p94, %p95
    %p97 = scmp.ne.s32.totalorder %s85, %s86
    %p98 = scmp.eq.s32.totalorder %s20, 1
    %p99 = por %p97, %p98
    %p101 = scmp.ne.s32.totalorder %s86, %s100
    %p102 = scmp.eq.s32.totalorder %s20, 0
    %p103 = por %p101, %p102
    %s105 = sadd.s32 %s104, 1
    %p108 = scmp.eq.s32.totalorder %s14, 1
    %p109 = scmp.ne.s32.totalorder %s104, %s106
    %p110 = scmp.eq.s32.totalorder %s14, 0
    %p111 = por %p109, %p110
    %p112 = scmp.ne.s32.totalorder %s104, %s106
    %p113 = scmp.eq.s32.totalorder %s19, 1
    %p114 = por %p112, %p113
    %p115 = scmp.ne.s32.totalorder %s106, %s107
    %p116 = scmp.eq.s32.totalorder %s19, 0
    %p117 = por %p115, %p116
    %p118 = scmp.ne.s32.totalorder %s106, %s107
    %p119 = scmp.eq.s32.totalorder %s20, 1
    %p120 = por %p118, %p119
    %p122 = scmp.ne.s32.totalorder %s107, %s121
    %p123 = scmp.eq.s32.totalorder %s20, 0
    %p124 = por %p122, %p123
    %s126 = sadd.s32 %s125, 1
    %p129 = scmp.eq.s32.totalorder %s14, 1
    %p130 = scmp.ne.s32.totalorder %s125, %s127
    %p131 = scmp.eq.s32.totalorder %s14, 0
    %p132 = por %p130, %p131
    %p133 = scmp.ne.s32.totalorder %s125, %s127
    %p134 = scmp.eq.s32.totalorder %s19, 1
    %p135 = por %p133, %p134
    %p136 = scmp.ne.s32.totalorder %s127, %s128
    %p137 = scmp.eq.s32.totalorder %s19, 0
    %p138 = por %p136, %p137
    %p139 = scmp.ne.s32.totalorder %s127, %s128
    %p140 = scmp.eq.s32.totalorder %s20, 1
    %p141 = por %p139, %p140
    %p143 = scmp.ne.s32.totalorder %s128, %s142
    %p144 = scmp.eq.s32.totalorder %s20, 0
    %p145 = por %p143, %p144
    %s147 = sadd.s32 %s146, 1
    %p150 = scmp.eq.s32.totalorder %s14, 1
    %p151 = scmp.ne.s32.totalorder %s146, %s148
    %p152 = scmp.eq.s32.totalorder %s14, 0
    %p153 = por %p151, %p152
    %p154 = scmp.ne.s32.totalorder %s146, %s148
    %p155 = scmp.eq.s32.totalorder %s19, 1
    %p156 = por %p154, %p155
    %p157 = scmp.ne.s32.totalorder %s148, %s149
    %p158 = scmp.eq.s32.totalorder %s19, 0
    %p159 = por %p157, %p158
    %p160 = scmp.ne.s32.totalorder %s148, %s149
    %p161 = scmp.eq.s32.totalorder %s20, 1
    %p162 = por %p160, %p161
    %p164 = scmp.ne.s32.totalorder %s149, %s163
    %p165 = scmp.eq.s32.totalorder %s20, 0
    %p166 = por %p164, %p165
    %s168 = sadd.s32 %s167, 1
    %p171 = scmp.eq.s32.totalorder %s14, 1
    %p172 = scmp.ne.s32.totalorder %s167, %s169
    %p173 = scmp.eq.s32.totalorder %s14, 0
    %p174 = por %p172, %p173
    %p175 = scmp.ne.s32.totalorder %s167, %s169
    %p176 = scmp.eq.s32.totalorder %s19, 1
    %p177 = por %p175, %p176
    %p178 = scmp.ne.s32.totalorder %s169, %s170
    %p179 = scmp.eq.s32.totalorder %s19, 0
    %p180 = por %p178, %p179
    %p181 = scmp.ne.s32.totalorder %s169, %s170
    %p182 = scmp.eq.s32.totalorder %s20, 1
    %p183 = por %p181, %p182
    %p185 = scmp.ne.s32.totalorder %s170, %s184
    %p186 = scmp.eq.s32.totalorder %s20, 0
    %p187 = por %p185, %p186
    %s189 = sadd.s32 %s188, 1
    %p192 = scmp.eq.s32.totalorder %s14, 1
    %p193 = scmp.ne.s32.totalorder %s188, %s190
    %p194 = scmp.eq.s32.totalorder %s14, 0
    %p195 = por %p193, %p194
    %p196 = scmp.ne.s32.totalorder %s188, %s190
    %p197 = scmp.eq.s32.totalorder %s19, 1
    %p198 = por %p196, %p197
    %p199 = scmp.ne.s32.totalorder %s190, %s191
    %p200 = scmp.eq.s32.totalorder %s19, 0
    %p201 = por %p199, %p200
    %p202 = scmp.ne.s32.totalorder %s190, %s191
    %p203 = scmp.eq.s32.totalorder %s20, 1
    %p204 = por %p202, %p203
    %p206 = scmp.ne.s32.totalorder %s191, %s205
    %p207 = scmp.eq.s32.totalorder %s20, 0
    %p208 = por %p206, %p207
    %s209 = ssub.s32 %s21, %s33
    %s210 = ssub.s32 %s22, %s29
    %s211 = sor.u32 %s209, %s210
    %p212 = scmp.eq.s32.totalorder %s211, 0
    %s214 = sadd.s32 %s213, 1
    %s215 = scalar_select %p212, %s213, %s214
    %p218 = pneg %p212
    %p219 = scmp.eq.s32.totalorder %s14, 1
    %p220 = por %p218, %p219
    %p221 = scmp.ne.s32.totalorder %s213, %s216
    %p222 = scmp.eq.s32.totalorder %s14, 0
    %p223 = por %p221, %p222
    %p224 = scmp.ne.s32.totalorder %s213, %s216
    %p225 = scmp.eq.s32.totalorder %s19, 1
    %p226 = por %p224, %p225
    %p227 = scmp.ne.s32.totalorder %s216, %s217
    %p228 = scmp.eq.s32.totalorder %s19, 0
    %p229 = por %p227, %p228
    %p230 = scmp.ne.s32.totalorder %s216, %s217
    %p231 = scmp.eq.s32.totalorder %s20, 1
    %p232 = por %p230, %p231
    %p234 = scmp.ne.s32.totalorder %s217, %s233
    %p235 = scmp.eq.s32.totalorder %s20, 0
    %p236 = por %p234, %p235
    %p237 = scmp.le.s32.totalorder 1, %s14
    %p238 = scmp.lt.s32.totalorder %s14, 3
    %p239 = pnand %p237, %p238
    %p240 = pneg %p239
    // Predicated region
    $region9: #{bottleneck_forward.1} parent=5 // pred_check
      _
    $region10: #{bottleneck_forward.1} parent=5 // pred_check_branch
      %242 = sbr.rel (%p239) target = $region12
    $region11: #{bottleneck_forward.1} parent=5 // pred_region
      %s243 = ssub.s32 %s14, 1
      // Predicated region
      $region13: #{bottleneck_forward.1} parent=11 // pred_check
        %p244 = pneg %p75
      $region14: #{bottleneck_forward.1} parent=11 // pred_check_branch
        %246 = sbr.rel (%p244) target = $region16
      $region15: #{bottleneck_forward.1} parent=11 // pred_region
        _
      $region16: #{bottleneck_forward.1} parent=11 // pred_fallthru
        _
      // Predicated region
      $region17: #{bottleneck_forward.1} parent=11 // pred_check
        %p247 = pneg %p96
      $region18: #{bottleneck_forward.1} parent=11 // pred_check_branch
        %249 = sbr.rel (%p247) target = $region20
      $region19: #{bottleneck_forward.1} parent=11 // pred_region
        _
      $region20: #{bottleneck_forward.1} parent=11 // pred_fallthru
        _
      // Predicated region
      $region21: #{bottleneck_forward.1} parent=11 // pred_check
        %p250 = pneg %p117
      $region22: #{bottleneck_forward.1} parent=11 // pred_check_branch
        %252 = sbr.rel (%p250) target = $region24
      $region23: #{bottleneck_forward.1} parent=11 // pred_region
        _
      $region24: #{bottleneck_forward.1} parent=11 // pred_fallthru
        _
      // Predicated region
      $region25: #{bottleneck_forward.1} parent=11 // pred_check
        %p253 = pneg %p138
      $region26: #{bottleneck_forward.1} parent=11 // pred_check_branch
        %255 = sbr.rel (%p253) target = $region28
      $region27: #{bottleneck_forward.1} parent=11 // pred_region
        _
      $region28: #{bottleneck_forward.1} parent=11 // pred_fallthru
        _
      // Predicated region
      $region29: #{bottleneck_forward.1} parent=11 // pred_check
        %p256 = pneg %p159
      $region30: #{bottleneck_forward.1} parent=11 // pred_check_branch
        %258 = sbr.rel (%p256) target = $region32
      $region31: #{bottleneck_forward.1} parent=11 // pred_region
        _
      $region32: #{bottleneck_forward.1} parent=11 // pred_fallthru
        _
      // Predicated region
      $region33: #{bottleneck_forward.1} parent=11 // pred_check
        %p259 = pneg %p180
      $region34: #{bottleneck_forward.1} parent=11 // pred_check_branch
        %261 = sbr.rel (%p259) target = $region36
      $region35: #{bottleneck_forward.1} parent=11 // pred_region
        _
      $region36: #{bottleneck_forward.1} parent=11 // pred_fallthru
        _
      // Predicated region
      $region37: #{bottleneck_forward.1} parent=11 // pred_check
        %p262 = pneg %p201
      $region38: #{bottleneck_forward.1} parent=11 // pred_check_branch
        %264 = sbr.rel (%p262) target = $region40
      $region39: #{bottleneck_forward.1} parent=11 // pred_region
        _
      $region40: #{bottleneck_forward.1} parent=11 // pred_fallthru
        _
    $region12: #{bottleneck_forward.1} parent=5 // pred_fallthru
      _
    %p265 = scmp.lt.s32.totalorder %s14, 2
    // Predicated region
    $region41: #{bottleneck_forward.1} parent=5 // pred_check
      %p266 = pneg %p265
    $region42: #{bottleneck_forward.1} parent=5 // pred_check_branch
      %268 = sbr.rel (%p266) target = $region44
    $region43: #{bottleneck_forward.1} parent=5 // pred_region
      // Predicated region
      $region45: #{bottleneck_forward.1} parent=43 // pred_check
        %p269 = pneg %p48
      $region46: #{bottleneck_forward.1} parent=43 // pred_check_branch
        %271 = sbr.rel (%p269) target = $region48
      $region47: #{bottleneck_forward.1} parent=43 // pred_region
        %s272 = smul.u32 64, %s22
        %p273 = scmp.lt.s32.totalorder %s21, 1
        %s274 = scalar_select %p273, %s21, 1
        %p275 = scmp.lt.s32.totalorder %s272, 63
        %s276 = scalar_select %p275, %s272, 63
        %s277 = smul.addr %s274, 64
        %s278 = sadd.s32 %s276, %s277
        %s279 = smul.addr %s278, 4
        %s280 = scalar_lea.vmem %s0, %s279
        %s281 = smul.u32 64, %s22
      $region48: #{bottleneck_forward.1} parent=43 // pred_fallthru
        _
    $region44: #{bottleneck_forward.1} parent=5 // pred_fallthru
      _
    %p282 = scmp.le.s32.totalorder 1, %s14
    %p283 = scmp.lt.s32.totalorder %s14, 3
    %p284 = pnand %p282, %p283
    %p285 = pneg %p284
    // Predicated region
    $region49: #{bottleneck_forward.1} parent=5 // pred_check
      _
    $region50: #{bottleneck_forward.1} parent=5 // pred_check_branch
      %287 = sbr.rel (%p284) target = $region52
    $region51: #{bottleneck_forward.1} parent=5 // pred_region
      %s288 = ssub.s32 %s14, 1
      %s289 = smul.u32 64, %s24
      %p290 = scmp.lt.s32.totalorder %s23, 1
      %s291 = scalar_select %p290, %s23, 1
      %p292 = scmp.lt.s32.totalorder %s289, 63
      %s293 = scalar_select %p292, %s289, 63
      %s294 = smul.addr %s291, 64
      %s295 = sadd.s32 %s293, %s294
      %s296 = smul.addr %s295, 4
      %s297 = scalar_lea.vmem %s0, %s296
      %p298 = pneg %p54
      %p299 = pneg %p51
      %p300 = pneg %p75
      %p301 = pneg %p72
      %p302 = pneg %p96
      %p303 = pneg %p93
      %p304 = pneg %p117
      %p305 = pneg %p114
      %p306 = pneg %p138
      %p307 = pneg %p135
      %p308 = pneg %p159
      %p309 = pneg %p156
      %p310 = pneg %p180
      %p311 = pneg %p177
      %p312 = pneg %p201
      %p313 = pneg %p198
      %p314 = pneg %p229
      %p315 = pneg %p226
      %s316 = smul.u32 16, %s24
      %p317 = scmp.lt.s32.totalorder %s23, 1
      %s318 = scalar_select %p317, %s23, 1
      %p319 = scmp.lt.s32.totalorder %s316, 15
      %s320 = scalar_select %p319, %s316, 15
      %s321 = smul.addr %s320, 2
      %s322 = smul.addr %s318, 32
      %s323 = sadd.s32 %s321, %s322
      %s324 = smul.addr %s323, 4
      %s325 = scalar_lea.vmem %s8, %s324
      %s326 = smul.u32 64, %s24
      %p327 = scmp.lt.s32.totalorder %s23, 1
      %s328 = scalar_select %p327, %s23, 1
      %p329 = scmp.lt.s32.totalorder %s326, 63
      %s330 = scalar_select %p329, %s326, 63
      %s331 = smul.addr %s328, 64
      %s332 = sadd.s32 %s330, %s331
      %s333 = smul.addr %s332, 4
      %s334 = scalar_lea.vmem %s0, %s333
      %s335 = smul.u32 64, %s24
      %s336 = smul.u32 16, %s24
      %p337 = scmp.lt.s32.totalorder %s23, 1
      %s338 = scalar_select %p337, %s23, 1
      %p339 = scmp.lt.s32.totalorder %s336, 15
      %s340 = scalar_select %p339, %s336, 15
      %s341 = smul.addr %s340, 2
      %s342 = smul.addr %s338, 32
      %s343 = sadd.s32 %s341, %s342
      %s344 = smul.addr %s343, 4
      %s345 = scalar_lea.vmem %s8, %s344
      %s346 = smul.u32 16, %s24
      %v348 = vld [vmem:[%s1] sm:$0xf]
      %v349 = vld [vmem:[%s1 + $0x4] sm:$0xf]
      %v350 = vld [vmem:[%s4] sm:$0x1]
      %vm351 = vcmask 31744
      %352 = vst.msk [vmem:[#allocation2] sm:$0xff] %vm351, 0
      %353 = vst.msk [vmem:[#allocation2 + $0x128] sm:$0xff] %vm351, 0
      %v354 = vld [vmem:[%s7 + $0x30] sm:$0xff]
      %v355 = vld [vmem:[%s7 + $0x38] sm:$0xff]
      %v356 = vld [vmem:[%s7 + $0x40] sm:$0xff]
      %v357 = vld [vmem:[%s7 + $0x48] sm:$0xff]
      %v358 = vld [vmem:[%s7 + $0x50] sm:$0xff]
      %v359 = vld [vmem:[%s7 + $0x58] sm:$0xff]
      %v360 = vld [vmem:[%s7 + $0x60] sm:$0xff]
      %v361 = vld [vmem:[%s7 + $0x68] sm:$0xff]
      %v362 = vld [vmem:[%s7 + $0x70] sm:$0xff]
      %v363 = vld [vmem:[%s7 + $0x78] sm:$0xff]
      %v364 = vld [vmem:[%s7 + $0x80] sm:$0xff]
      %v365 = vld [vmem:[%s7 + $0x88] sm:$0xff]
      %v366 = vld [vmem:[%s7 + $0x90] sm:$0xff]
      %v367 = vld [vmem:[%s7 + $0x98] sm:$0xff]
      %v368 = vld [vmem:[%s7 + $0xa0] sm:$0xff]
      %v369 = vld [vmem:[%s7 + $0xa8] sm:$0xff]
      %v370 = vld [vmem:[%s7 + $0xb0] sm:$0xff]
      %v371 = vld [vmem:[%s7 + $0xb8] sm:$0xff]
      %v372 = vld [vmem:[%s7 + $0xc0] sm:$0xff]
      %v373 = vld [vmem:[%s7 + $0xc8] sm:$0xff]
      %v374 = vld [vmem:[%s7 + $0xd0] sm:$0xff]
      %v375 = vld [vmem:[%s7 + $0xd8] sm:$0xff]
      %v376 = vld [vmem:[%s7 + $0xe0] sm:$0xff]
      %v377 = vld [vmem:[%s7 + $0xe8] sm:$0xff]
      %v378 = vld [vmem:[%s7 + $0xf0] sm:$0xff]
      %v379 = vld [vmem:[%s7 + $0xf8] sm:$0xff]
      %v380 = vld [vmem:[%s7 + $0x100] sm:$0xff]
      %v381 = vld [vmem:[%s7 + $0x108] sm:$0xff]
      %v382 = vld [vmem:[%s7 + $0x110] sm:$0xff]
      %v383 = vld [vmem:[%s7 + $0x118] sm:$0xff]
      %v384 = vld [vmem:[%s7 + $0x120] sm:$0xff]
      %v385 = vld [vmem:[%s7 + $0x128] sm:$0xff]
      %v386 = vld [vmem:[%s7 + $0x130] sm:$0xff]
      %v387 = vld [vmem:[%s7 + $0x138] sm:$0xff]
      %v388 = vld [vmem:[%s7 + $0x140] sm:$0xff]
      %v389 = vld [vmem:[%s7 + $0x148] sm:$0xff]
      %v390 = vld [vmem:[%s7 + $0x150] sm:$0xff]
      %v391 = vld [vmem:[%s7 + $0x158] sm:$0xff]
      %v392 = vld [vmem:[%s7 + $0x160] sm:$0xff]
      %v393 = vld [vmem:[%s7 + $0x168] sm:$0xff]
      %v394 = vld [vmem:[%s7 + $0x170] sm:$0xff]
      %v395 = vld [vmem:[%s7 + $0x178] sm:$0xff]
      %v396 = vld [vmem:[%s7 + $0x180] sm:$0xff]
      %v397 = vld [vmem:[%s7 + $0x188] sm:$0xff]
      %v398 = vld [vmem:[%s7 + $0x190] sm:$0xff]
      %v399 = vld [vmem:[%s7 + $0x198] sm:$0xff]
      %v400 = vld [vmem:[%s7 + $0x1a0] sm:$0xff]
      %v401 = vld [vmem:[%s7 + $0x1a8] sm:$0xff]
      %v402 = vld [vmem:[%s7 + $0x1b0] sm:$0xff]
      %v403 = vld [vmem:[%s7 + $0x1b8] sm:$0xff]
      %v404 = vld [vmem:[%s7 + $0x1c0] sm:$0xff]
      %v405 = vld [vmem:[%s7 + $0x1c8] sm:$0xff]
      %v406 = vld [vmem:[%s7 + $0x1d0] sm:$0xff]
      %v407 = vld [vmem:[%s7 + $0x1d8] sm:$0xff]
      %v408 = vld [vmem:[%s7 + $0x1e0] sm:$0xff]
      %v409 = vld [vmem:[%s7 + $0x1e8] sm:$0xff]
      %v410 = vld [vmem:[%s7 + $0x1f0] sm:$0xff]
      %v411 = vld [vmem:[%s7 + $0x1f8] sm:$0xff]
      %v412 = vld [vmem:[%s7 + $0x200] sm:$0xff]
      %v413 = vld [vmem:[%s7 + $0x208] sm:$0xff]
      %v414 = vld [vmem:[%s7 + $0x210] sm:$0xff]
      %v415 = vld [vmem:[%s7 + $0x218] sm:$0xff]
      %v416 = vld [vmem:[%s7 + $0x220] sm:$0xff]
      %v417 = vld [vmem:[%s7 + $0x228] sm:$0xff]
      %vm418 = vcmp.ne.f32.partialorder %v354, 0.0
      %vm419 = vcmp.ne.f32.partialorder %v355, 0.0
      %vm420 = vcmp.ne.f32.partialorder %v356, 0.0
      %vm421 = vcmp.ne.f32.partialorder %v357, 0.0
      %vm422 = vcmp.ne.f32.partialorder %v358, 0.0
      %vm423 = vcmp.ne.f32.partialorder %v359, 0.0
      %vm424 = vcmp.ne.f32.partialorder %v360, 0.0
      %vm425 = vcmp.ne.f32.partialorder %v361, 0.0
      %vm426 = vcmp.ne.f32.partialorder %v362, 0.0
      %vm427 = vcmp.ne.f32.partialorder %v363, 0.0
      %vm428 = vcmp.ne.f32.partialorder %v364, 0.0
      %vm429 = vcmp.ne.f32.partialorder %v365, 0.0
      %vm430 = vcmp.ne.f32.partialorder %v366, 0.0
      %vm431 = vcmp.ne.f32.partialorder %v367, 0.0
      %vm432 = vcmp.ne.f32.partialorder %v368, 0.0
      %vm433 = vcmp.ne.f32.partialorder %v369, 0.0
      %vm434 = vcmp.ne.f32.partialorder %v370, 0.0
      %vm435 = vcmp.ne.f32.partialorder %v371, 0.0
      %vm436 = vcmp.ne.f32.partialorder %v372, 0.0
      %vm437 = vcmp.ne.f32.partialorder %v373, 0.0
      %vm438 = vcmp.ne.f32.partialorder %v374, 0.0
      %vm439 = vcmp.ne.f32.partialorder %v375, 0.0
      %vm440 = vcmp.ne.f32.partialorder %v376, 0.0
      %vm441 = vcmp.ne.f32.partialorder %v377, 0.0
      %vm442 = vcmp.ne.f32.partialorder %v378, 0.0
      %vm443 = vcmp.ne.f32.partialorder %v379, 0.0
      %vm444 = vcmp.ne.f32.partialorder %v380, 0.0
      %vm445 = vcmp.ne.f32.partialorder %v381, 0.0
      %vm446 = vcmp.ne.f32.partialorder %v382, 0.0
      %vm447 = vcmp.ne.f32.partialorder %v383, 0.0
      %vm448 = vcmp.ne.f32.partialorder %v384, 0.0
      %vm449 = vcmp.ne.f32.partialorder %v385, 0.0
      %vm450 = vcmp.ne.f32.partialorder %v386, 0.0
      %vm451 = vcmp.ne.f32.partialorder %v387, 0.0
      %vm452 = vcmp.ne.f32.partialorder %v388, 0.0
      %vm453 = vcmp.ne.f32.partialorder %v389, 0.0
      %vm454 = vcmp.ne.f32.partialorder %v390, 0.0
      %vm455 = vcmp.ne.f32.partialorder %v391, 0.0
      %vm456 = vcmp.ne.f32.partialorder %v392, 0.0
      %vm457 = vcmp.ne.f32.partialorder %v393, 0.0
      %vm458 = vcmp.ne.f32.partialorder %v394, 0.0
      %vm459 = vcmp.ne.f32.partialorder %v395, 0.0
      %vm460 = vcmp.ne.f32.partialorder %v396, 0.0
      %vm461 = vcmp.ne.f32.partialorder %v397, 0.0
      %vm462 = vcmp.ne.f32.partialorder %v398, 0.0
      %vm463 = vcmp.ne.f32.partialorder %v399, 0.0
      %vm464 = vcmp.ne.f32.partialorder %v400, 0.0
      %vm465 = vcmp.ne.f32.partialorder %v401, 0.0
      %vm466 = vcmp.ne.f32.partialorder %v402, 0.0
      %vm467 = vcmp.ne.f32.partialorder %v403, 0.0
      %vm468 = vcmp.ne.f32.partialorder %v404, 0.0
      %vm469 = vcmp.ne.f32.partialorder %v405, 0.0
      %vm470 = vcmp.ne.f32.partialorder %v406, 0.0
      %vm471 = vcmp.ne.f32.partialorder %v407, 0.0
      %vm472 = vcmp.ne.f32.partialorder %v408, 0.0
      %vm473 = vcmp.ne.f32.partialorder %v409, 0.0
      %vm474 = vcmp.ne.f32.partialorder %v410, 0.0
      %vm475 = vcmp.ne.f32.partialorder %v411, 0.0
      %vm476 = vcmp.ne.f32.partialorder %v412, 0.0
      %vm477 = vcmp.ne.f32.partialorder %v413, 0.0
      %vm478 = vcmp.ne.f32.partialorder %v414, 0.0
      %vm479 = vcmp.ne.f32.partialorder %v415, 0.0
      %vm480 = vcmp.ne.f32.partialorder %v416, 0.0
      %vm481 = vcmp.ne.f32.partialorder %v417, 0.0
      %v482 = vld [vmem:[%s334] sm:$0xf]
      %v483 = vld [vmem:[%s334 + $0x4] sm:$0xf]
      %v484 = vld [vmem:[%s334 + $0x8] sm:$0xf]
      %v485 = vld [vmem:[%s334 + $0xc] sm:$0xf]
      %v486 = vld [vmem:[%s334 + $0x10] sm:$0xf]
      %v487 = vld [vmem:[%s334 + $0x14] sm:$0xf]
      %v488 = vld [vmem:[%s334 + $0x18] sm:$0xf]
      %v489 = vld [vmem:[%s334 + $0x1c] sm:$0xf]
      %v490 = vld [vmem:[%s334 + $0x20] sm:$0xf]
      %v491 = vld [vmem:[%s334 + $0x24] sm:$0xf]
      %v492 = vld [vmem:[%s334 + $0x28] sm:$0xf]
      %v493 = vld [vmem:[%s334 + $0x2c] sm:$0xf]
      %v494 = vld [vmem:[%s334 + $0x30] sm:$0xf]
      %v495 = vld [vmem:[%s334 + $0x34] sm:$0xf]
      %v496 = vld [vmem:[%s334 + $0x38] sm:$0xf]
      %v497 = vld [vmem:[%s334 + $0x3c] sm:$0xf]
      %v498 = vld [vmem:[%s334 + $0x40] sm:$0xf]
      %v499 = vld [vmem:[%s334 + $0x44] sm:$0xf]
      %v500 = vld [vmem:[%s334 + $0x48] sm:$0xf]
      %v501 = vld [vmem:[%s334 + $0x4c] sm:$0xf]
      %v502 = vld [vmem:[%s334 + $0x50] sm:$0xf]
      %v503 = vld [vmem:[%s334 + $0x54] sm:$0xf]
      %v504 = vld [vmem:[%s334 + $0x58] sm:$0xf]
      %v505 = vld [vmem:[%s334 + $0x5c] sm:$0xf]
      %v506 = vld [vmem:[%s334 + $0x60] sm:$0xf]
      %v507 = vld [vmem:[%s334 + $0x64] sm:$0xf]
      %v508 = vld [vmem:[%s334 + $0x68] sm:$0xf]
      %v509 = vld [vmem:[%s334 + $0x6c] sm:$0xf]
      %v510 = vld [vmem:[%s334 + $0x70] sm:$0xf]
      %v511 = vld [vmem:[%s334 + $0x74] sm:$0xf]
      %v512 = vld [vmem:[%s334 + $0x78] sm:$0xf]
      %v513 = vld [vmem:[%s334 + $0x7c] sm:$0xf]
      %v514 = vld [vmem:[%s334 + $0x80] sm:$0xf]
      %v515 = vld [vmem:[%s334 + $0x84] sm:$0xf]
      %v516 = vld [vmem:[%s334 + $0x88] sm:$0xf]
      %v517 = vld [vmem:[%s334 + $0x8c] sm:$0xf]
      %v518 = vld [vmem:[%s334 + $0x90] sm:$0xf]
      %v519 = vld [vmem:[%s334 + $0x94] sm:$0xf]
      %v520 = vld [vmem:[%s334 + $0x98] sm:$0xf]
      %v521 = vld [vmem:[%s334 + $0x9c] sm:$0xf]
      %v522 = vld [vmem:[%s334 + $0xa0] sm:$0xf]
      %v523 = vld [vmem:[%s334 + $0xa4] sm:$0xf]
      %v524 = vld [vmem:[%s334 + $0xa8] sm:$0xf]
      %v525 = vld [vmem:[%s334 + $0xac] sm:$0xf]
      %v526 = vld [vmem:[%s334 + $0xb0] sm:$0xf]
      %v527 = vld [vmem:[%s334 + $0xb4] sm:$0xf]
      %v528 = vld [vmem:[%s334 + $0xb8] sm:$0xf]
      %v529 = vld [vmem:[%s334 + $0xbc] sm:$0xf]
      %v530 = vld [vmem:[%s334 + $0xc0] sm:$0xf]
      %v531 = vld [vmem:[%s334 + $0xc4] sm:$0xf]
      %v532 = vld [vmem:[%s334 + $0xc8] sm:$0xf]
      %v533 = vld [vmem:[%s334 + $0xcc] sm:$0xf]
      %v534 = vld [vmem:[%s334 + $0xd0] sm:$0xf]
      %v535 = vld [vmem:[%s334 + $0xd4] sm:$0xf]
      %v536 = vld [vmem:[%s334 + $0xd8] sm:$0xf]
      %v537 = vld [vmem:[%s334 + $0xdc] sm:$0xf]
      %v538 = vld [vmem:[%s334 + $0xe0] sm:$0xf]
      %v539 = vld [vmem:[%s334 + $0xe4] sm:$0xf]
      %v540 = vld [vmem:[%s334 + $0xe8] sm:$0xf]
      %v541 = vld [vmem:[%s334 + $0xec] sm:$0xf]
      %v542 = vld [vmem:[%s334 + $0xf0] sm:$0xf]
      %v543 = vld [vmem:[%s334 + $0xf4] sm:$0xf]
      %v544 = vld [vmem:[%s334 + $0xf8] sm:$0xf]
      %v545 = vld [vmem:[%s334 + $0xfc] sm:$0xf]
      %v547 = vlaneseq
      %v548 = vshrl.u32 %v547, 7
      %v549 = vsub.s32 0, %v548
      %v550 = vrot.slane %v350, %v549
      %v616 = vunpack.c.l.b16 %v482
      %v617 = vunpack.c.l.b16 %v483
      %v618 = vunpack.c.l.b16 %v484
      %v619 = vunpack.c.l.b16 %v485
      %v620 = vunpack.c.l.b16 %v486
      %v621 = vunpack.c.l.b16 %v487
      %v622 = vunpack.c.l.b16 %v488
      %v623 = vunpack.c.l.b16 %v489
      %v624 = vunpack.c.l.b16 %v490
      %v625 = vunpack.c.l.b16 %v491
      %v626 = vunpack.c.l.b16 %v492
      %v627 = vunpack.c.l.b16 %v493
      %v628 = vunpack.c.l.b16 %v494
      %v629 = vunpack.c.l.b16 %v495
      %v630 = vunpack.c.l.b16 %v496
      %v631 = vunpack.c.l.b16 %v497
      %v632 = vunpack.c.l.b16 %v498
      %v633 = vunpack.c.l.b16 %v499
      %v634 = vunpack.c.l.b16 %v500
      %v635 = vunpack.c.l.b16 %v501
      %v636 = vunpack.c.l.b16 %v502
      %v637 = vunpack.c.l.b16 %v503
      %v638 = vunpack.c.l.b16 %v504
      %v639 = vunpack.c.l.b16 %v505
      %v640 = vunpack.c.l.b16 %v506
      %v641 = vunpack.c.l.b16 %v507
      %v642 = vunpack.c.l.b16 %v508
      %v643 = vunpack.c.l.b16 %v509
      %v644 = vunpack.c.l.b16 %v510
      %v645 = vunpack.c.l.b16 %v511
      %v646 = vunpack.c.l.b16 %v512
      %v647 = vunpack.c.l.b16 %v513
      %v648 = vunpack.c.l.b16 %v514
      %v649 = vunpack.c.l.b16 %v515
      %v650 = vunpack.c.l.b16 %v516
      %v651 = vunpack.c.l.b16 %v517
      %v652 = vunpack.c.l.b16 %v518
      %v653 = vunpack.c.l.b16 %v519
      %v654 = vunpack.c.l.b16 %v520
      %v655 = vunpack.c.l.b16 %v521
      %v656 = vunpack.c.l.b16 %v522
      %v657 = vunpack.c.l.b16 %v523
      %v658 = vunpack.c.l.b16 %v524
      %v659 = vunpack.c.l.b16 %v525
      %v660 = vunpack.c.l.b16 %v526
      %v661 = vunpack.c.l.b16 %v527
      %v662 = vunpack.c.l.b16 %v528
      %v663 = vunpack.c.l.b16 %v529
      %v664 = vunpack.c.l.b16 %v530
      %v665 = vunpack.c.l.b16 %v531
      %v666 = vunpack.c.l.b16 %v532
      %v667 = vunpack.c.l.b16 %v533
      %v668 = vunpack.c.l.b16 %v534
      %v669 = vunpack.c.l.b16 %v535
      %v670 = vunpack.c.l.b16 %v536
      %v671 = vunpack.c.l.b16 %v537
      %v672 = vunpack.c.l.b16 %v538
      %v673 = vunpack.c.l.b16 %v539
      %v674 = vunpack.c.l.b16 %v540
      %v675 = vunpack.c.l.b16 %v541
      %v676 = vunpack.c.l.b16 %v542
      %v677 = vunpack.c.l.b16 %v543
      %v678 = vunpack.c.l.b16 %v544
      %v679 = vunpack.c.l.b16 %v545
      %v680 = vpack.c.b16 %v617, %v616
      %v681 = vpack.c.b16 %v619, %v618
      %v682 = vpack.c.b16 %v621, %v620
      %v683 = vpack.c.b16 %v623, %v622
      %v684 = vpack.c.b16 %v625, %v624
      %v685 = vpack.c.b16 %v627, %v626
      %v686 = vpack.c.b16 %v629, %v628
      %v687 = vpack.c.b16 %v631, %v630
      %v688 = vpack.c.b16 %v633, %v632
      %v689 = vpack.c.b16 %v635, %v634
      %v690 = vpack.c.b16 %v637, %v636
      %v691 = vpack.c.b16 %v639, %v638
      %v692 = vpack.c.b16 %v641, %v640
      %v693 = vpack.c.b16 %v643, %v642
      %v694 = vpack.c.b16 %v645, %v644
      %v695 = vpack.c.b16 %v647, %v646
      %v696 = vpack.c.b16 %v649, %v648
      %v697 = vpack.c.b16 %v651, %v650
      %v698 = vpack.c.b16 %v653, %v652
      %v699 = vpack.c.b16 %v655, %v654
      %v700 = vpack.c.b16 %v657, %v656
      %v701 = vpack.c.b16 %v659, %v658
      %v702 = vpack.c.b16 %v661, %v660
      %v703 = vpack.c.b16 %v663, %v662
      %v704 = vpack.c.b16 %v665, %v664
      %v705 = vpack.c.b16 %v667, %v666
      %v706 = vpack.c.b16 %v669, %v668
      %v707 = vpack.c.b16 %v671, %v670
      %v708 = vpack.c.b16 %v673, %v672
      %v709 = vpack.c.b16 %v675, %v674
      %v710 = vpack.c.b16 %v677, %v676
      %v711 = vpack.c.b16 %v679, %v678
      %v714 = vunpack.c.l.b16 %v348
      %v715 = vunpack.c.l.b16 %v349
      %v716 = vpack.c.b16 %v715, %v714
      %vm718 = vcmask 130048
      %v720 = vsel %vm718, %v680, 0
      %v723 = vsel %vm718, %v681, 0
      %v726 = vsel %vm718, %v682, 0
      %v729 = vsel %vm718, %v683, 0
      %v732 = vsel %vm718, %v684, 0
      %v735 = vsel %vm718, %v685, 0
      %v738 = vsel %vm718, %v686, 0
      %v741 = vsel %vm718, %v687, 0
      %v744 = vsel %vm718, %v688, 0
      %v747 = vsel %vm718, %v689, 0
      %v750 = vsel %vm718, %v690, 0
      %v753 = vsel %vm718, %v691, 0
      %v756 = vsel %vm718, %v692, 0
      %v759 = vsel %vm718, %v693, 0
      %v762 = vsel %vm718, %v694, 0
      %v765 = vsel %vm718, %v695, 0
      %v768 = vsel %vm718, %v696, 0
      %v771 = vsel %vm718, %v697, 0
      %v774 = vsel %vm718, %v698, 0
      %v777 = vsel %vm718, %v699, 0
      %v780 = vsel %vm718, %v700, 0
      %v783 = vsel %vm718, %v701, 0
      %v786 = vsel %vm718, %v702, 0
      %v789 = vsel %vm718, %v703, 0
      %v792 = vsel %vm718, %v704, 0
      %v795 = vsel %vm718, %v705, 0
      %v798 = vsel %vm718, %v706, 0
      %v801 = vsel %vm718, %v707, 0
      %v804 = vsel %vm718, %v708, 0
      %v807 = vsel %vm718, %v709, 0
      %v810 = vsel %vm718, %v710, 0
      %v813 = vsel %vm718, %v711, 0
      %815 = vmatprep.subr.bf16.mxu0 0
      %816 = vmatpush1.bf16.msra.mxu0 %v716
      %817 = vmatprep.subr.bf16.mxu0 0
      %818 = vmatpush1.bf16.msra.mxu0 0
      %819 = vmatprep.subr.bf16.mxu0 0
      %820 = vmatpush1.bf16.msra.mxu0 0
      %821 = vmatprep.subr.bf16.mxu0 0
      %822 = vmatpush1.bf16.msra.mxu0 0
      %823 = vmatprep.subr.bf16.mxu0 0
      %824 = vmatpush1.bf16.msra.mxu0 0
      %825 = vmatprep.subr.bf16.mxu0 0
      %826 = vmatpush1.bf16.msra.mxu0 0
      %827 = vmatprep.subr.bf16.mxu0 0
      %828 = vmatpush1.bf16.msra.mxu0 0
      %829 = vmatprep.subr.bf16.mxu0 0
      %830 = vmatpush1.bf16.msra.mxu0 0
      %831 = vmatprep.subr.bf16.mxu0 0
      %832 = vmatpush1.bf16.msra.mxu0 0
      %833 = vmatprep.subr.bf16.mxu0 0
      %834 = vmatpush1.bf16.msra.mxu0 0
      %835 = vmatprep.subr.bf16.mxu0 0
      %836 = vmatpush1.bf16.msra.mxu0 0
      %837 = vmatprep.subr.bf16.mxu0 0
      %838 = vmatpush1.bf16.msra.mxu0 0
      %839 = vmatprep.subr.bf16.mxu0 0
      %840 = vmatpush1.bf16.msra.mxu0 0
      %841 = vmatprep.subr.bf16.mxu0 0
      %842 = vmatpush1.bf16.msra.mxu0 0
      %843 = vmatprep.subr.bf16.mxu0 0
      %844 = vmatpush1.bf16.msra.mxu0 0
      %845 = vmatprep.subr.bf16.mxu0 0
      %846 = vmatpush1.bf16.msra.mxu0 0
      %847 = vmatprep.mubr.bf16.mxu0 0
      %848 = vmatmul.mubr.bf16.gmra.mrb[0].mxu0 %v720
      %v849 = vpop.f32.mrb[0].mxu0
      %v850 = vadd.f32 %v550, %v849
      %v851 = vpop.f32.mrb[0].mxu0
      %v852 = vpop.f32.mrb[0].mxu0
      %v853 = vadd.f32 %v550, %v852
      %v854 = vpop.f32.mrb[0].mxu0
      %855 = vmatprep.mubr.bf16.mxu0 0
      %856 = vmatmul.mubr.bf16.gmra.mrb[0].mxu0 %v723
      %v857 = vpop.f32.mrb[0].mxu0
      %v858 = vadd.f32 %v550, %v857
      %v859 = vpop.f32.mrb[0].mxu0
      %v860 = vpop.f32.mrb[0].mxu0
      %v861 = vadd.f32 %v550, %v860
      %v862 = vpop.f32.mrb[0].mxu0
      %863 = vmatprep.mubr.bf16.mxu0 0
      %864 = vmatmul.mubr.bf16.gmra.mrb[0].mxu0 %v726
      %v865 = vpop.f32.mrb[0].mxu0
      %v866 = vadd.f32 %v550, %v865
      %v867 = vpop.f32.mrb[0].mxu0
      %v868 = vpop.f32.mrb[0].mxu0
      %v869 = vadd.f32 %v550, %v868
      %v870 = vpop.f32.mrb[0].mxu0
      %871 = vmatprep.mubr.bf16.mxu0 0
      %872 = vmatmul.mubr.bf16.gmra.mrb[0].mxu0 %v729
      %v873 = vpop.f32.mrb[0].mxu0
      %v874 = vadd.f32 %v550, %v873
      %v875 = vpop.f32.mrb[0].mxu0
      %v876 = vpop.f32.mrb[0].mxu0
      %v877 = vadd.f32 %v550, %v876
      %v878 = vpop.f32.mrb[0].mxu0
      %879 = vmatprep.mubr.bf16.mxu0 0
      %880 = vmatmul.mubr.bf16.gmra.mrb[0].mxu0 %v732
      %v881 = vpop.f32.mrb[0].mxu0
      %v882 = vadd.f32 %v550, %v881
      %v883 = vpop.f32.mrb[0].mxu0
      %v884 = vpop.f32.mrb[0].mxu0
      %v885 = vadd.f32 %v550, %v884
      %v886 = vpop.f32.mrb[0].mxu0
      %887 = vmatprep.mubr.bf16.mxu0 0
      %888 = vmatmul.mubr.bf16.gmra.mrb[0].mxu0 %v735
      %v889 = vpop.f32.mrb[0].mxu0
      %v890 = vadd.f32 %v550, %v889
      %v891 = vpop.f32.mrb[0].mxu0
      %v892 = vpop.f32.mrb[0].mxu0
      %v893 = vadd.f32 %v550, %v892
      %v894 = vpop.f32.mrb[0].mxu0
      %895 = vmatprep.mubr.bf16.mxu0 0
      %896 = vmatmul.mubr.bf16.gmra.mrb[0].mxu0 %v738
      %v897 = vpop.f32.mrb[0].mxu0
      %v898 = vadd.f32 %v550, %v897
      %v899 = vpop.f32.mrb[0].mxu0
      %v900 = vpop.f32.mrb[0].mxu0
      %v901 = vadd.f32 %v550, %v900
      %v902 = vpop.f32.mrb[0].mxu0
      %903 = vmatprep.mubr.bf16.mxu0 0
      %904 = vmatmul.mubr.bf16.gmra.mrb[0].mxu0 %v741
      %v905 = vpop.f32.mrb[0].mxu0
      %v906 = vadd.f32 %v550, %v905
      %v907 = vpop.f32.mrb[0].mxu0
      %v908 = vpop.f32.mrb[0].mxu0
      %v909 = vadd.f32 %v550, %v908
      %v910 = vpop.f32.mrb[0].mxu0
      %911 = vmatprep.mubr.bf16.mxu0 0
      %912 = vmatmul.mubr.bf16.gmra.mrb[0].mxu0 %v744
      %v913 = vpop.f32.mrb[0].mxu0
      %v914 = vadd.f32 %v550, %v913
      %v915 = vpop.f32.mrb[0].mxu0
      %v916 = vpop.f32.mrb[0].mxu0
      %v917 = vadd.f32 %v550, %v916
      %v918 = vpop.f32.mrb[0].mxu0
      %919 = vmatprep.mubr.bf16.mxu0 0
      %920 = vmatmul.mubr.bf16.gmra.mrb[0].mxu0 %v747
      %v921 = vpop.f32.mrb[0].mxu0
      %v922 = vadd.f32 %v550, %v921
      %v923 = vpop.f32.mrb[0].mxu0
      %v924 = vpop.f32.mrb[0].mxu0
      %v925 = vadd.f32 %v550, %v924
      %v926 = vpop.f32.mrb[0].mxu0
      %927 = vmatprep.mubr.bf16.mxu0 0
      %928 = vmatmul.mubr.bf16.gmra.mrb[0].mxu0 %v750
      %v929 = vpop.f32.mrb[0].mxu0
      %v930 = vadd.f32 %v550, %v929
      %v931 = vpop.f32.mrb[0].mxu0
      %v932 = vpop.f32.mrb[0].mxu0
      %v933 = vadd.f32 %v550, %v932
      %v934 = vpop.f32.mrb[0].mxu0
      %935 = vmatprep.mubr.bf16.mxu0 0
      %936 = vmatmul.mubr.bf16.gmra.mrb[0].mxu0 %v753
      %v937 = vpop.f32.mrb[0].mxu0
      %v938 = vadd.f32 %v550, %v937
      %v939 = vpop.f32.mrb[0].mxu0
      %v940 = vpop.f32.mrb[0].mxu0
      %v941 = vadd.f32 %v550, %v940
      %v942 = vpop.f32.mrb[0].mxu0
      %943 = vmatprep.mubr.bf16.mxu0 0
      %944 = vmatmul.mubr.bf16.gmra.mrb[0].mxu0 %v756
      %v945 = vpop.f32.mrb[0].mxu0
      %v946 = vadd.f32 %v550, %v945
      %v947 = vpop.f32.mrb[0].mxu0
      %v948 = vpop.f32.mrb[0].mxu0
      %v949 = vadd.f32 %v550, %v948
      %v950 = vpop.f32.mrb[0].mxu0
      %951 = vmatprep.mubr.bf16.mxu0 0
      %952 = vmatmul.mubr.bf16.gmra.mrb[0].mxu0 %v759
      %v953 = vpop.f32.mrb[0].mxu0
      %v954 = vadd.f32 %v550, %v953
      %v955 = vpop.f32.mrb[0].mxu0
      %v956 = vpop.f32.mrb[0].mxu0
      %v957 = vadd.f32 %v550, %v956
      %v958 = vpop.f32.mrb[0].mxu0
      %959 = vmatprep.mubr.bf16.mxu0 0
      %960 = vmatmul.mubr.bf16.gmra.mrb[0].mxu0 %v762
      %v961 = vpop.f32.mrb[0].mxu0
      %v962 = vadd.f32 %v550, %v961
      %v963 = vpop.f32.mrb[0].mxu0
      %v964 = vpop.f32.mrb[0].mxu0
      %v965 = vadd.f32 %v550, %v964
      %v966 = vpop.f32.mrb[0].mxu0
      %967 = vmatprep.mubr.bf16.mxu0 0
      %968 = vmatmul.mubr.bf16.gmra.mrb[0].mxu0 %v765
      %v969 = vpop.f32.mrb[0].mxu0
      %v970 = vadd.f32 %v550, %v969
      %v971 = vpop.f32.mrb[0].mxu0
      %v972 = vpop.f32.mrb[0].mxu0
      %v973 = vadd.f32 %v550, %v972
      %v974 = vpop.f32.mrb[0].mxu0
      %975 = vmatprep.mubr.bf16.mxu0 0
      %976 = vmatmul.mubr.bf16.gmra.mrb[0].mxu0 %v768
      %v977 = vpop.f32.mrb[0].mxu0
      %v978 = vadd.f32 %v550, %v977
      %v979 = vpop.f32.mrb[0].mxu0
      %v980 = vpop.f32.mrb[0].mxu0
      %v981 = vadd.f32 %v550, %v980
      %v982 = vpop.f32.mrb[0].mxu0
      %983 = vmatprep.mubr.bf16.mxu0 0
      %984 = vmatmul.mubr.bf16.gmra.mrb[0].mxu0 %v771
      %v985 = vpop.f32.mrb[0].mxu0
      %v986 = vadd.f32 %v550, %v985
      %v987 = vpop.f32.mrb[0].mxu0
      %v988 = vpop.f32.mrb[0].mxu0
      %v989 = vadd.f32 %v550, %v988
      %v990 = vpop.f32.mrb[0].mxu0
      %991 = vmatprep.mubr.bf16.mxu0 0
      %992 = vmatmul.mubr.bf16.gmra.mrb[0].mxu0 %v774
      %v993 = vpop.f32.mrb[0].mxu0
      %v994 = vadd.f32 %v550, %v993
      %v995 = vpop.f32.mrb[0].mxu0
      %v996 = vpop.f32.mrb[0].mxu0
      %v997 = vadd.f32 %v550, %v996
      %v998 = vpop.f32.mrb[0].mxu0
      %999 = vmatprep.mubr.bf16.mxu0 0
      %1000 = vmatmul.mubr.bf16.gmra.mrb[0].mxu0 %v777
      %v1001 = vpop.f32.mrb[0].mxu0
      %v1002 = vadd.f32 %v550, %v1001
      %v1003 = vpop.f32.mrb[0].mxu0
      %v1004 = vpop.f32.mrb[0].mxu0
      %v1005 = vadd.f32 %v550, %v1004
      %v1006 = vpop.f32.mrb[0].mxu0
      %1007 = vmatprep.mubr.bf16.mxu0 0
      %1008 = vmatmul.mubr.bf16.gmra.mrb[0].mxu0 %v780
      %v1009 = vpop.f32.mrb[0].mxu0
      %v1010 = vadd.f32 %v550, %v1009
      %v1011 = vpop.f32.mrb[0].mxu0
      %v1012 = vpop.f32.mrb[0].mxu0
      %v1013 = vadd.f32 %v550, %v1012
      %v1014 = vpop.f32.mrb[0].mxu0
      %1015 = vmatprep.mubr.bf16.mxu0 0
      %1016 = vmatmul.mubr.bf16.gmra.mrb[0].mxu0 %v783
      %v1017 = vpop.f32.mrb[0].mxu0
      %v1018 = vadd.f32 %v550, %v1017
      %v1019 = vpop.f32.mrb[0].mxu0
      %v1020 = vpop.f32.mrb[0].mxu0
      %v1021 = vadd.f32 %v550, %v1020
      %v1022 = vpop.f32.mrb[0].mxu0
      %1023 = vmatprep.mubr.bf16.mxu0 0
      %1024 = vmatmul.mubr.bf16.gmra.mrb[0].mxu0 %v786
      %v1025 = vpop.f32.mrb[0].mxu0
      %v1026 = vadd.f32 %v550, %v1025
      %v1027 = vpop.f32.mrb[0].mxu0
      %v1028 = vpop.f32.mrb[0].mxu0
      %v1029 = vadd.f32 %v550, %v1028
      %v1030 = vpop.f32.mrb[0].mxu0
      %1031 = vmatprep.mubr.bf16.mxu0 0
      %1032 = vmatmul.mubr.bf16.gmra.mrb[0].mxu0 %v789
      %v1033 = vpop.f32.mrb[0].mxu0
      %v1034 = vadd.f32 %v550, %v1033
      %v1035 = vpop.f32.mrb[0].mxu0
      %v1036 = vpop.f32.mrb[0].mxu0
      %v1037 = vadd.f32 %v550, %v1036
      %v1038 = vpop.f32.mrb[0].mxu0
      %1039 = vmatprep.mubr.bf16.mxu0 0
      %1040 = vmatmul.mubr.bf16.gmra.mrb[0].mxu0 %v792
      %v1041 = vpop.f32.mrb[0].mxu0
      %v1042 = vadd.f32 %v550, %v1041
      %v1043 = vpop.f32.mrb[0].mxu0
      %v1044 = vpop.f32.mrb[0].mxu0
      %v1045 = vadd.f32 %v550, %v1044
      %v1046 = vpop.f32.mrb[0].mxu0
      %1047 = vmatprep.mubr.bf16.mxu0 0
      %1048 = vmatmul.mubr.bf16.gmra.mrb[0].mxu0 %v795
      %v1049 = vpop.f32.mrb[0].mxu0
      %v1050 = vadd.f32 %v550, %v1049
      %v1051 = vpop.f32.mrb[0].mxu0
      %v1052 = vpop.f32.mrb[0].mxu0
      %v1053 = vadd.f32 %v550, %v1052
      %v1054 = vpop.f32.mrb[0].mxu0
      %1055 = vmatprep.mubr.bf16.mxu0 0
      %1056 = vmatmul.mubr.bf16.gmra.mrb[0].mxu0 %v798
      %v1057 = vpop.f32.mrb[0].mxu0
      %v1058 = vadd.f32 %v550, %v1057
      %v1059 = vpop.f32.mrb[0].mxu0
      %v1060 = vpop.f32.mrb[0].mxu0
      %v1061 = vadd.f32 %v550, %v1060
      %v1062 = vpop.f32.mrb[0].mxu0
      %1063 = vmatprep.mubr.bf16.mxu0 0
      %1064 = vmatmul.mubr.bf16.gmra.mrb[0].mxu0 %v801
      %v1065 = vpop.f32.mrb[0].mxu0
      %v1066 = vadd.f32 %v550, %v1065
      %v1067 = vpop.f32.mrb[0].mxu0
      %v1068 = vpop.f32.mrb[0].mxu0
      %v1069 = vadd.f32 %v550, %v1068
      %v1070 = vpop.f32.mrb[0].mxu0
      %1071 = vmatprep.mubr.bf16.mxu0 0
      %1072 = vmatmul.mubr.bf16.gmra.mrb[0].mxu0 %v804
      %v1073 = vpop.f32.mrb[0].mxu0
      %v1074 = vadd.f32 %v550, %v1073
      %v1075 = vpop.f32.mrb[0].mxu0
      %v1076 = vpop.f32.mrb[0].mxu0
      %v1077 = vadd.f32 %v550, %v1076
      %v1078 = vpop.f32.mrb[0].mxu0
      %1079 = vmatprep.mubr.bf16.mxu0 0
      %1080 = vmatmul.mubr.bf16.gmra.mrb[0].mxu0 %v807
      %v1081 = vpop.f32.mrb[0].mxu0
      %v1082 = vadd.f32 %v550, %v1081
      %v1083 = vpop.f32.mrb[0].mxu0
      %v1084 = vpop.f32.mrb[0].mxu0
      %v1085 = vadd.f32 %v550, %v1084
      %v1086 = vpop.f32.mrb[0].mxu0
      %1087 = vmatprep.mubr.bf16.mxu0 0
      %1088 = vmatmul.mubr.bf16.gmra.mrb[0].mxu0 %v810
      %v1089 = vpop.f32.mrb[0].mxu0
      %v1090 = vadd.f32 %v550, %v1089
      %v1091 = vpop.f32.mrb[0].mxu0
      %v1092 = vpop.f32.mrb[0].mxu0
      %v1093 = vadd.f32 %v550, %v1092
      %v1094 = vpop.f32.mrb[0].mxu0
      %1095 = vmatprep.mubr.bf16.mxu0 0
      %1096 = vmatmul.mubr.bf16.gmra.mrb[0].mxu0 %v813
      %v1097 = vpop.f32.mrb[0].mxu0
      %v1098 = vadd.f32 %v550, %v1097
      %v1099 = vpop.f32.mrb[0].mxu0
      %v1100 = vpop.f32.mrb[0].mxu0
      %v1101 = vadd.f32 %v550, %v1100
      %v1102 = vpop.f32.mrb[0].mxu0
      %1103 = vdwg.mxu0
      %v1104 = vmax.f32 %v850, 0.0
      %v1105 = vmax.f32 %v853, 0.0
      %v1106 = vmax.f32 %v858, 0.0
      %v1107 = vmax.f32 %v861, 0.0
      %v1108 = vmax.f32 %v866, 0.0
      %v1109 = vmax.f32 %v869, 0.0
      %v1110 = vmax.f32 %v874, 0.0
      %v1111 = vmax.f32 %v877, 0.0
      %v1112 = vmax.f32 %v882, 0.0
      %v1113 = vmax.f32 %v885, 0.0
      %v1114 = vmax.f32 %v890, 0.0
      %v1115 = vmax.f32 %v893, 0.0
      %v1116 = vmax.f32 %v898, 0.0
      %v1117 = vmax.f32 %v901, 0.0
      %v1118 = vmax.f32 %v906, 0.0
      %v1119 = vmax.f32 %v909, 0.0
      %v1120 = vmax.f32 %v914, 0.0
      %v1121 = vmax.f32 %v917, 0.0
      %v1122 = vmax.f32 %v922, 0.0
      %v1123 = vmax.f32 %v925, 0.0
      %v1124 = vmax.f32 %v930, 0.0
      %v1125 = vmax.f32 %v933, 0.0
      %v1126 = vmax.f32 %v938, 0.0
      %v1127 = vmax.f32 %v941, 0.0
      %v1128 = vmax.f32 %v946, 0.0
      %v1129 = vmax.f32 %v949, 0.0
      %v1130 = vmax.f32 %v954, 0.0
      %v1131 = vmax.f32 %v957, 0.0
      %v1132 = vmax.f32 %v962, 0.0
      %v1133 = vmax.f32 %v965, 0.0
      %v1134 = vmax.f32 %v970, 0.0
      %v1135 = vmax.f32 %v973, 0.0
      %v1136 = vmax.f32 %v978, 0.0
      %v1137 = vmax.f32 %v981, 0.0
      %v1138 = vmax.f32 %v986, 0.0
      %v1139 = vmax.f32 %v989, 0.0
      %v1140 = vmax.f32 %v994, 0.0
      %v1141 = vmax.f32 %v997, 0.0
      %v1142 = vmax.f32 %v1002, 0.0
      %v1143 = vmax.f32 %v1005, 0.0
      %v1144 = vmax.f32 %v1010, 0.0
      %v1145 = vmax.f32 %v1013, 0.0
      %v1146 = vmax.f32 %v1018, 0.0
      %v1147 = vmax.f32 %v1021, 0.0
      %v1148 = vmax.f32 %v1026, 0.0
      %v1149 = vmax.f32 %v1029, 0.0
      %v1150 = vmax.f32 %v1034, 0.0
      %v1151 = vmax.f32 %v1037, 0.0
      %v1152 = vmax.f32 %v1042, 0.0
      %v1153 = vmax.f32 %v1045, 0.0
      %v1154 = vmax.f32 %v1050, 0.0
      %v1155 = vmax.f32 %v1053, 0.0
      %v1156 = vmax.f32 %v1058, 0.0
      %v1157 = vmax.f32 %v1061, 0.0
      %v1158 = vmax.f32 %v1066, 0.0
      %v1159 = vmax.f32 %v1069, 0.0
      %v1160 = vmax.f32 %v1074, 0.0
      %v1161 = vmax.f32 %v1077, 0.0
      %v1162 = vmax.f32 %v1082, 0.0
      %v1163 = vmax.f32 %v1085, 0.0
      %v1164 = vmax.f32 %v1090, 0.0
      %v1165 = vmax.f32 %v1093, 0.0
      %v1166 = vmax.f32 %v1098, 0.0
      %v1167 = vmax.f32 %v1101, 0.0
      %v1168 = vsel %vm418, 1, 0
      %v1169 = vsel %vm419, 1, 0
      %v1170 = vsel %vm420, 1, 0
      %v1171 = vsel %vm421, 1, 0
      %v1172 = vsel %vm422, 1, 0
      %v1173 = vsel %vm423, 1, 0
      %v1174 = vsel %vm424, 1, 0
      %v1175 = vsel %vm425, 1, 0
      %v1176 = vsel %vm426, 1, 0
      %v1177 = vsel %vm427, 1, 0
      %v1178 = vsel %vm428, 1, 0
      %v1179 = vsel %vm429, 1, 0
      %v1180 = vsel %vm430, 1, 0
      %v1181 = vsel %vm431, 1, 0
      %v1182 = vsel %vm432, 1, 0
      %v1183 = vsel %vm433, 1, 0
      %v1184 = vsel %vm434, 1, 0
      %v1185 = vsel %vm435, 1, 0
      %v1186 = vsel %vm436, 1, 0
      %v1187 = vsel %vm437, 1, 0
      %v1188 = vsel %vm438, 1, 0
      %v1189 = vsel %vm439, 1, 0
      %v1190 = vsel %vm440, 1, 0
      %v1191 = vsel %vm441, 1, 0
      %v1192 = vsel %vm442, 1, 0
      %v1193 = vsel %vm443, 1, 0
      %v1194 = vsel %vm444, 1, 0
      %v1195 = vsel %vm445, 1, 0
      %v1196 = vsel %vm446, 1, 0
      %v1197 = vsel %vm447, 1, 0
      %v1198 = vsel %vm448, 1, 0
      %v1199 = vsel %vm449, 1, 0
      %v1200 = vsel %vm450, 1, 0
      %v1201 = vsel %vm451, 1, 0
      %v1202 = vsel %vm452, 1, 0
      %v1203 = vsel %vm453, 1, 0
      %v1204 = vsel %vm454, 1, 0
      %v1205 = vsel %vm455, 1, 0
      %v1206 = vsel %vm456, 1, 0
      %v1207 = vsel %vm457, 1, 0
      %v1208 = vsel %vm458, 1, 0
      %v1209 = vsel %vm459, 1, 0
      %v1210 = vsel %vm460, 1, 0
      %v1211 = vsel %vm461, 1, 0
      %v1212 = vsel %vm462, 1, 0
      %v1213 = vsel %vm463, 1, 0
      %v1214 = vsel %vm464, 1, 0
      %v1215 = vsel %vm465, 1, 0
      %v1216 = vsel %vm466, 1, 0
      %v1217 = vsel %vm467, 1, 0
      %v1218 = vsel %vm468, 1, 0
      %v1219 = vsel %vm469, 1, 0
      %v1220 = vsel %vm470, 1, 0
      %v1221 = vsel %vm471, 1, 0
      %v1222 = vsel %vm472, 1, 0
      %v1223 = vsel %vm473, 1, 0
      %v1224 = vsel %vm474, 1, 0
      %v1225 = vsel %vm475, 1, 0
      %v1226 = vsel %vm476, 1, 0
      %v1227 = vsel %vm477, 1, 0
      %v1228 = vsel %vm478, 1, 0
      %v1229 = vsel %vm479, 1, 0
      %v1230 = vsel %vm480, 1, 0
      %v1231 = vsel %vm481, 1, 0
      %1232 = vset.pattern.permute.xlu0 0
      %1233 = vperm.xlu0 %1232, %v1168
      %v1234 = vpop.permute.xlu0 %1233
      %1235 = vset.pattern.permute.xlu0 0
      %1236 = vperm.xlu0 %1235, %v1169
      %v1237 = vpop.permute.xlu0 %1236
      %1238 = vset.pattern.permute.xlu0 0
      %1239 = vperm.xlu0 %1238, %v1170
      %v1240 = vpop.permute.xlu0 %1239
      %1241 = vset.pattern.permute.xlu0 0
      %1242 = vperm.xlu0 %1241, %v1171
      %v1243 = vpop.permute.xlu0 %1242
      %1244 = vset.pattern.permute.xlu0 0
      %1245 = vperm.xlu0 %1244, %v1172
      %v1246 = vpop.permute.xlu0 %1245
      %1247 = vset.pattern.permute.xlu0 0
      %1248 = vperm.xlu0 %1247, %v1173
      %v1249 = vpop.permute.xlu0 %1248
      %1250 = vset.pattern.permute.xlu0 0
      %1251 = vperm.xlu0 %1250, %v1174
      %v1252 = vpop.permute.xlu0 %1251
      %1253 = vset.pattern.permute.xlu0 0
      %1254 = vperm.xlu0 %1253, %v1175
      %v1255 = vpop.permute.xlu0 %1254
      %1256 = vset.pattern.permute.xlu0 0
      %1257 = vperm.xlu0 %1256, %v1176
      %v1258 = vpop.permute.xlu0 %1257
      %1259 = vset.pattern.permute.xlu0 0
      %1260 = vperm.xlu0 %1259, %v1177
      %v1261 = vpop.permute.xlu0 %1260
      %1262 = vset.pattern.permute.xlu0 0
      %1263 = vperm.xlu0 %1262, %v1178
      %v1264 = vpop.permute.xlu0 %1263
      %1265 = vset.pattern.permute.xlu0 0
      %1266 = vperm.xlu0 %1265, %v1179
      %v1267 = vpop.permute.xlu0 %1266
      %1268 = vset.pattern.permute.xlu0 0
      %1269 = vperm.xlu0 %1268, %v1180
      %v1270 = vpop.permute.xlu0 %1269
      %1271 = vset.pattern.permute.xlu0 0
      %1272 = vperm.xlu0 %1271, %v1181
      %v1273 = vpop.permute.xlu0 %1272
      %1274 = vset.pattern.permute.xlu0 0
      %1275 = vperm.xlu0 %1274, %v1182
      %v1276 = vpop.permute.xlu0 %1275
      %1277 = vset.pattern.permute.xlu0 0
      %1278 = vperm.xlu0 %1277, %v1183
      %v1279 = vpop.permute.xlu0 %1278
      %1280 = vset.pattern.permute.xlu0 0
      %1281 = vperm.xlu0 %1280, %v1184
      %v1282 = vpop.permute.xlu0 %1281
      %1283 = vset.pattern.permute.xlu0 0
      %1284 = vperm.xlu0 %1283, %v1185
      %v1285 = vpop.permute.xlu0 %1284
      %1286 = vset.pattern.permute.xlu0 0
      %1287 = vperm.xlu0 %1286, %v1186
      %v1288 = vpop.permute.xlu0 %1287
      %1289 = vset.pattern.permute.xlu0 0
      %1290 = vperm.xlu0 %1289, %v1187
      %v1291 = vpop.permute.xlu0 %1290
      %1292 = vset.pattern.permute.xlu0 0
      %1293 = vperm.xlu0 %1292, %v1188
      %v1294 = vpop.permute.xlu0 %1293
      %1295 = vset.pattern.permute.xlu0 0
      %1296 = vperm.xlu0 %1295, %v1189
      %v1297 = vpop.permute.xlu0 %1296
      %1298 = vset.pattern.permute.xlu0 0
      %1299 = vperm.xlu0 %1298, %v1190
      %v1300 = vpop.permute.xlu0 %1299
      %1301 = vset.pattern.permute.xlu0 0
      %1302 = vperm.xlu0 %1301, %v1191
      %v1303 = vpop.permute.xlu0 %1302
      %1304 = vset.pattern.permute.xlu0 0
      %1305 = vperm.xlu0 %1304, %v1192
      %v1306 = vpop.permute.xlu0 %1305
      %1307 = vset.pattern.permute.xlu0 0
      %1308 = vperm.xlu0 %1307, %v1193
      %v1309 = vpop.permute.xlu0 %1308
      %1310 = vset.pattern.permute.xlu0 0
      %1311 = vperm.xlu0 %1310, %v1194
      %v1312 = vpop.permute.xlu0 %1311
      %1313 = vset.pattern.permute.xlu0 0
      %1314 = vperm.xlu0 %1313, %v1195
      %v1315 = vpop.permute.xlu0 %1314
      %1316 = vset.pattern.permute.xlu0 0
      %1317 = vperm.xlu0 %1316, %v1196
      %v1318 = vpop.permute.xlu0 %1317
      %1319 = vset.pattern.permute.xlu0 0
      %1320 = vperm.xlu0 %1319, %v1197
      %v1321 = vpop.permute.xlu0 %1320
      %1322 = vset.pattern.permute.xlu0 0
      %1323 = vperm.xlu0 %1322, %v1198
      %v1324 = vpop.permute.xlu0 %1323
      %1325 = vset.pattern.permute.xlu0 0
      %1326 = vperm.xlu0 %1325, %v1199
      %v1327 = vpop.permute.xlu0 %1326
      %1328 = vset.pattern.permute.xlu0 0
      %1329 = vperm.xlu0 %1328, %v1200
      %v1330 = vpop.permute.xlu0 %1329
      %1331 = vset.pattern.permute.xlu0 0
      %1332 = vperm.xlu0 %1331, %v1201
      %v1333 = vpop.permute.xlu0 %1332
      %1334 = vset.pattern.permute.xlu0 0
      %1335 = vperm.xlu0 %1334, %v1202
      %v1336 = vpop.permute.xlu0 %1335
      %1337 = vset.pattern.permute.xlu0 0
      %1338 = vperm.xlu0 %1337, %v1203
      %v1339 = vpop.permute.xlu0 %1338
      %1340 = vset.pattern.permute.xlu0 0
      %1341 = vperm.xlu0 %1340, %v1204
      %v1342 = vpop.permute.xlu0 %1341
      %1343 = vset.pattern.permute.xlu0 0
      %1344 = vperm.xlu0 %1343, %v1205
      %v1345 = vpop.permute.xlu0 %1344
      %1346 = vset.pattern.permute.xlu0 0
      %1347 = vperm.xlu0 %1346, %v1206
      %v1348 = vpop.permute.xlu0 %1347
      %1349 = vset.pattern.permute.xlu0 0
      %1350 = vperm.xlu0 %1349, %v1207
      %v1351 = vpop.permute.xlu0 %1350
      %1352 = vset.pattern.permute.xlu0 0
      %1353 = vperm.xlu0 %1352, %v1208
      %v1354 = vpop.permute.xlu0 %1353
      %1355 = vset.pattern.permute.xlu0 0
      %1356 = vperm.xlu0 %1355, %v1209
      %v1357 = vpop.permute.xlu0 %1356
      %1358 = vset.pattern.permute.xlu0 0
      %1359 = vperm.xlu0 %1358, %v1210
      %v1360 = vpop.permute.xlu0 %1359
      %1361 = vset.pattern.permute.xlu0 0
      %1362 = vperm.xlu0 %1361, %v1211
      %v1363 = vpop.permute.xlu0 %1362
      %1364 = vset.pattern.permute.xlu0 0
      %1365 = vperm.xlu0 %1364, %v1212
      %v1366 = vpop.permute.xlu0 %1365
      %1367 = vset.pattern.permute.xlu0 0
      %1368 = vperm.xlu0 %1367, %v1213
      %v1369 = vpop.permute.xlu0 %1368
      %1370 = vset.pattern.permute.xlu0 0
      %1371 = vperm.xlu0 %1370, %v1214
      %v1372 = vpop.permute.xlu0 %1371
      %1373 = vset.pattern.permute.xlu0 0
      %1374 = vperm.xlu0 %1373, %v1215
      %v1375 = vpop.permute.xlu0 %1374
      %1376 = vset.pattern.permute.xlu0 0
      %1377 = vperm.xlu0 %1376, %v1216
      %v1378 = vpop.permute.xlu0 %1377
      %1379 = vset.pattern.permute.xlu0 0
      %1380 = vperm.xlu0 %1379, %v1217
      %v1381 = vpop.permute.xlu0 %1380
      %1382 = vset.pattern.permute.xlu0 0
      %1383 = vperm.xlu0 %1382, %v1218
      %v1384 = vpop.permute.xlu0 %1383
      %1385 = vset.pattern.permute.xlu0 0
      %1386 = vperm.xlu0 %1385, %v1219
      %v1387 = vpop.permute.xlu0 %1386
      %1388 = vset.pattern.permute.xlu0 0
      %1389 = vperm.xlu0 %1388, %v1220
      %v1390 = vpop.permute.xlu0 %1389
      %1391 = vset.pattern.permute.xlu0 0
      %1392 = vperm.xlu0 %1391, %v1221
      %v1393 = vpop.permute.xlu0 %1392
      %1394 = vset.pattern.permute.xlu0 0
      %1395 = vperm.xlu0 %1394, %v1222
      %v1396 = vpop.permute.xlu0 %1395
      %1397 = vset.pattern.permute.xlu0 0
      %1398 = vperm.xlu0 %1397, %v1223
      %v1399 = vpop.permute.xlu0 %1398
      %1400 = vset.pattern.permute.xlu0 0
      %1401 = vperm.xlu0 %1400, %v1224
      %v1402 = vpop.permute.xlu0 %1401
      %1403 = vset.pattern.permute.xlu0 0
      %1404 = vperm.xlu0 %1403, %v1225
      %v1405 = vpop.permute.xlu0 %1404
      %1406 = vset.pattern.permute.xlu0 0
      %1407 = vperm.xlu0 %1406, %v1226
      %v1408 = vpop.permute.xlu0 %1407
      %1409 = vset.pattern.permute.xlu0 0
      %1410 = vperm.xlu0 %1409, %v1227
      %v1411 = vpop.permute.xlu0 %1410
      %1412 = vset.pattern.permute.xlu0 0
      %1413 = vperm.xlu0 %1412, %v1228
      %v1414 = vpop.permute.xlu0 %1413
      %1415 = vset.pattern.permute.xlu0 0
      %1416 = vperm.xlu0 %1415, %v1229
      %v1417 = vpop.permute.xlu0 %1416
      %1418 = vset.pattern.permute.xlu0 0
      %1419 = vperm.xlu0 %1418, %v1230
      %v1420 = vpop.permute.xlu0 %1419
      %1421 = vset.pattern.permute.xlu0 0
      %1422 = vperm.xlu0 %1421, %v1231
      %v1423 = vpop.permute.xlu0 %1422
      %vm1424 = vcmp.eq.s32.totalorder %v1234, 1
      %vm1425 = vcmp.eq.s32.totalorder %v1237, 1
      %vm1426 = vcmp.eq.s32.totalorder %v1240, 1
      %vm1427 = vcmp.eq.s32.totalorder %v1243, 1
      %vm1428 = vcmp.eq.s32.totalorder %v1246, 1
      %vm1429 = vcmp.eq.s32.totalorder %v1249, 1
      %vm1430 = vcmp.eq.s32.totalorder %v1252, 1
      %vm1431 = vcmp.eq.s32.totalorder %v1255, 1
      %vm1432 = vcmp.eq.s32.totalorder %v1258, 1
      %vm1433 = vcmp.eq.s32.totalorder %v1261, 1
      %vm1434 = vcmp.eq.s32.totalorder %v1264, 1
      %vm1435 = vcmp.eq.s32.totalorder %v1267, 1
      %vm1436 = vcmp.eq.s32.totalorder %v1270, 1
      %vm1437 = vcmp.eq.s32.totalorder %v1273, 1
      %vm1438 = vcmp.eq.s32.totalorder %v1276, 1
      %vm1439 = vcmp.eq.s32.totalorder %v1279, 1
      %vm1440 = vcmp.eq.s32.totalorder %v1282, 1
      %vm1441 = vcmp.eq.s32.totalorder %v1285, 1
      %vm1442 = vcmp.eq.s32.totalorder %v1288, 1
      %vm1443 = vcmp.eq.s32.totalorder %v1291, 1
      %vm1444 = vcmp.eq.s32.totalorder %v1294, 1
      %vm1445 = vcmp.eq.s32.totalorder %v1297, 1
      %vm1446 = vcmp.eq.s32.totalorder %v1300, 1
      %vm1447 = vcmp.eq.s32.totalorder %v1303, 1
      %vm1448 = vcmp.eq.s32.totalorder %v1306, 1
      %vm1449 = vcmp.eq.s32.totalorder %v1309, 1
      %vm1450 = vcmp.eq.s32.totalorder %v1312, 1
      %vm1451 = vcmp.eq.s32.totalorder %v1315, 1
      %vm1452 = vcmp.eq.s32.totalorder %v1318, 1
      %vm1453 = vcmp.eq.s32.totalorder %v1321, 1
      %vm1454 = vcmp.eq.s32.totalorder %v1324, 1
      %vm1455 = vcmp.eq.s32.totalorder %v1327, 1
      %vm1456 = vcmp.eq.s32.totalorder %v1330, 1
      %vm1457 = vcmp.eq.s32.totalorder %v1333, 1
      %vm1458 = vcmp.eq.s32.totalorder %v1336, 1
      %vm1459 = vcmp.eq.s32.totalorder %v1339, 1
      %vm1460 = vcmp.eq.s32.totalorder %v1342, 1
      %vm1461 = vcmp.eq.s32.totalorder %v1345, 1
      %vm1462 = vcmp.eq.s32.totalorder %v1348, 1
      %vm1463 = vcmp.eq.s32.totalorder %v1351, 1
      %vm1464 = vcmp.eq.s32.totalorder %v1354, 1
      %vm1465 = vcmp.eq.s32.totalorder %v1357, 1
      %vm1466 = vcmp.eq.s32.totalorder %v1360, 1
      %vm1467 = vcmp.eq.s32.totalorder %v1363, 1
      %vm1468 = vcmp.eq.s32.totalorder %v1366, 1
      %vm1469 = vcmp.eq.s32.totalorder %v1369, 1
      %vm1470 = vcmp.eq.s32.totalorder %v1372, 1
      %vm1471 = vcmp.eq.s32.totalorder %v1375, 1
      %vm1472 = vcmp.eq.s32.totalorder %v1378, 1
      %vm1473 = vcmp.eq.s32.totalorder %v1381, 1
      %vm1474 = vcmp.eq.s32.totalorder %v1384, 1
      %vm1475 = vcmp.eq.s32.totalorder %v1387, 1
      %vm1476 = vcmp.eq.s32.totalorder %v1390, 1
      %vm1477 = vcmp.eq.s32.totalorder %v1393, 1
      %vm1478 = vcmp.eq.s32.totalorder %v1396, 1
      %vm1479 = vcmp.eq.s32.totalorder %v1399, 1
      %vm1480 = vcmp.eq.s32.totalorder %v1402, 1
      %vm1481 = vcmp.eq.s32.totalorder %v1405, 1
      %vm1482 = vcmp.eq.s32.totalorder %v1408, 1
      %vm1483 = vcmp.eq.s32.totalorder %v1411, 1
      %vm1484 = vcmp.eq.s32.totalorder %v1414, 1
      %vm1485 = vcmp.eq.s32.totalorder %v1417, 1
      %vm1486 = vcmp.eq.s32.totalorder %v1420, 1
      %vm1487 = vcmp.eq.s32.totalorder %v1423, 1
      %v1488 = vsel %vm1424, %v1104, 0.0
      %v1489 = vsel %vm1425, %v1105, 0.0
      %v1490 = vsel %vm1426, %v1106, 0.0
      %v1491 = vsel %vm1427, %v1107, 0.0
      %v1492 = vsel %vm1428, %v1108, 0.0
      %v1493 = vsel %vm1429, %v1109, 0.0
      %v1494 = vsel %vm1430, %v1110, 0.0
      %v1495 = vsel %vm1431, %v1111, 0.0
      %v1496 = vsel %vm1432, %v1112, 0.0
      %v1497 = vsel %vm1433, %v1113, 0.0
      %v1498 = vsel %vm1434, %v1114, 0.0
      %v1499 = vsel %vm1435, %v1115, 0.0
      %v1500 = vsel %vm1436, %v1116, 0.0
      %v1501 = vsel %vm1437, %v1117, 0.0
      %v1502 = vsel %vm1438, %v1118, 0.0
      %v1503 = vsel %vm1439, %v1119, 0.0
      %v1504 = vsel %vm1440, %v1120, 0.0
      %v1505 = vsel %vm1441, %v1121, 0.0
      %v1506 = vsel %vm1442, %v1122, 0.0
      %v1507 = vsel %vm1443, %v1123, 0.0
      %v1508 = vsel %vm1444, %v1124, 0.0
      %v1509 = vsel %vm1445, %v1125, 0.0
      %v1510 = vsel %vm1446, %v1126, 0.0
      %v1511 = vsel %vm1447, %v1127, 0.0
      %v1512 = vsel %vm1448, %v1128, 0.0
      %v1513 = vsel %vm1449, %v1129, 0.0
      %v1514 = vsel %vm1450, %v1130, 0.0
      %v1515 = vsel %vm1451, %v1131, 0.0
      %v1516 = vsel %vm1452, %v1132, 0.0
      %v1517 = vsel %vm1453, %v1133, 0.0
      %v1518 = vsel %vm1454, %v1134, 0.0
      %v1519 = vsel %vm1455, %v1135, 0.0
      %v1520 = vsel %vm1456, %v1136, 0.0
      %v1521 = vsel %vm1457, %v1137, 0.0
      %v1522 = vsel %vm1458, %v1138, 0.0
      %v1523 = vsel %vm1459, %v1139, 0.0
      %v1524 = vsel %vm1460, %v1140, 0.0
      %v1525 = vsel %vm1461, %v1141, 0.0
      %v1526 = vsel %vm1462, %v1142, 0.0
      %v1527 = vsel %vm1463, %v1143, 0.0
      %v1528 = vsel %vm1464, %v1144, 0.0
      %v1529 = vsel %vm1465, %v1145, 0.0
      %v1530 = vsel %vm1466, %v1146, 0.0
      %v1531 = vsel %vm1467, %v1147, 0.0
      %v1532 = vsel %vm1468, %v1148, 0.0
      %v1533 = vsel %vm1469, %v1149, 0.0
      %v1534 = vsel %vm1470, %v1150, 0.0
      %v1535 = vsel %vm1471, %v1151, 0.0
      %v1536 = vsel %vm1472, %v1152, 0.0
      %v1537 = vsel %vm1473, %v1153, 0.0
      %v1538 = vsel %vm1474, %v1154, 0.0
      %v1539 = vsel %vm1475, %v1155, 0.0
      %v1540 = vsel %vm1476, %v1156, 0.0
      %v1541 = vsel %vm1477, %v1157, 0.0
      %v1542 = vsel %vm1478, %v1158, 0.0
      %v1543 = vsel %vm1479, %v1159, 0.0
      %v1544 = vsel %vm1480, %v1160, 0.0
      %v1545 = vsel %vm1481, %v1161, 0.0
      %v1546 = vsel %vm1482, %v1162, 0.0
      %v1547 = vsel %vm1483, %v1163, 0.0
      %v1548 = vsel %vm1484, %v1164, 0.0
      %v1549 = vsel %vm1485, %v1165, 0.0
      %v1550 = vsel %vm1486, %v1166, 0.0
      %v1551 = vsel %vm1487, %v1167, 0.0
      %v1552 = vpack.c.bf16 %v1489, %v1488
      %v1553 = vpack.c.bf16 %v1491, %v1490
      %v1554 = vpack.c.bf16 %v1493, %v1492
      %v1555 = vpack.c.bf16 %v1495, %v1494
      %v1556 = vpack.c.bf16 %v1497, %v1496
      %v1557 = vpack.c.bf16 %v1499, %v1498
      %v1558 = vpack.c.bf16 %v1501, %v1500
      %v1559 = vpack.c.bf16 %v1503, %v1502
      %v1560 = vpack.c.bf16 %v1505, %v1504
      %v1561 = vpack.c.bf16 %v1507, %v1506
      %v1562 = vpack.c.bf16 %v1509, %v1508
      %v1563 = vpack.c.bf16 %v1511, %v1510
      %v1564 = vpack.c.bf16 %v1513, %v1512
      %v1565 = vpack.c.bf16 %v1515, %v1514
      %v1566 = vpack.c.bf16 %v1517, %v1516
      %v1567 = vpack.c.bf16 %v1519, %v1518
      %v1568 = vpack.c.bf16 %v1521, %v1520
      %v1569 = vpack.c.bf16 %v1523, %v1522
      %v1570 = vpack.c.bf16 %v1525, %v1524
      %v1571 = vpack.c.bf16 %v1527, %v1526
      %v1572 = vpack.c.bf16 %v1529, %v1528
      %v1573 = vpack.c.bf16 %v1531, %v1530
      %v1574 = vpack.c.bf16 %v1533, %v1532
      %v1575 = vpack.c.bf16 %v1535, %v1534
      %v1576 = vpack.c.bf16 %v1537, %v1536
      %v1577 = vpack.c.bf16 %v1539, %v1538
      %v1578 = vpack.c.bf16 %v1541, %v1540
      %v1579 = vpack.c.bf16 %v1543, %v1542
      %v1580 = vpack.c.bf16 %v1545, %v1544
      %v1581 = vpack.c.bf16 %v1547, %v1546
      %v1582 = vpack.c.bf16 %v1549, %v1548
      %v1583 = vpack.c.bf16 %v1551, %v1550
      %1584 = vst.msk [vmem:[#allocation2 + $0x18] sm:$0xff] %vm351, %v1552
      %1585 = vst.msk [vmem:[#allocation2 + $0x20] sm:$0xff] %vm351, %v1553
      %1586 = vst.msk [vmem:[#allocation2 + $0x28] sm:$0xff] %vm351, %v1554
      %1587 = vst.msk [vmem:[#allocation2 + $0x30] sm:$0xff] %vm351, %v1555
      %1588 = vst.msk [vmem:[#allocation2 + $0x38] sm:$0xff] %vm351, %v1556
      %1589 = vst.msk [vmem:[#allocation2 + $0x40] sm:$0xff] %vm351, %v1557
      %1590 = vst.msk [vmem:[#allocation2 + $0x48] sm:$0xff] %vm351, %v1558
      %1591 = vst.msk [vmem:[#allocation2 + $0x50] sm:$0xff] %vm351, %v1559
      %1592 = vst.msk [vmem:[#allocation2 + $0x58] sm:$0xff] %vm351, %v1560
      %1593 = vst.msk [vmem:[#allocation2 + $0x60] sm:$0xff] %vm351, %v1561
      %1594 = vst.msk [vmem:[#allocation2 + $0x68] sm:$0xff] %vm351, %v1562
      %1595 = vst.msk [vmem:[#allocation2 + $0x70] sm:$0xff] %vm351, %v1563
      %1596 = vst.msk [vmem:[#allocation2 + $0x78] sm:$0xff] %vm351, %v1564
      %1597 = vst.msk [vmem:[#allocation2 + $0x80] sm:$0xff] %vm351, %v1565
      %1598 = vst.msk [vmem:[#allocation2 + $0x88] sm:$0xff] %vm351, %v1566
      %1599 = vst.msk [vmem:[#allocation2 + $0x90] sm:$0xff] %vm351, %v1567
      %1600 = vst.msk [vmem:[#allocation2 + $0x98] sm:$0xff] %vm351, %v1568
      %1601 = vst.msk [vmem:[#allocation2 + $0xa0] sm:$0xff] %vm351, %v1569
      %1602 = vst.msk [vmem:[#allocation2 + $0xa8] sm:$0xff] %vm351, %v1570
      %1603 = vst.msk [vmem:[#allocation2 + $0xb0] sm:$0xff] %vm351, %v1571
      %1604 = vst.msk [vmem:[#allocation2 + $0xb8] sm:$0xff] %vm351, %v1572
      %1605 = vst.msk [vmem:[#allocation2 + $0xc0] sm:$0xff] %vm351, %v1573
      %1606 = vst.msk [vmem:[#allocation2 + $0xc8] sm:$0xff] %vm351, %v1574
      %1607 = vst.msk [vmem:[#allocation2 + $0xd0] sm:$0xff] %vm351, %v1575
      %1608 = vst.msk [vmem:[#allocation2 + $0xd8] sm:$0xff] %vm351, %v1576
      %1609 = vst.msk [vmem:[#allocation2 + $0xe0] sm:$0xff] %vm351, %v1577
      %1610 = vst.msk [vmem:[#allocation2 + $0xe8] sm:$0xff] %vm351, %v1578
      %1611 = vst.msk [vmem:[#allocation2 + $0xf0] sm:$0xff] %vm351, %v1579
      %1612 = vst.msk [vmem:[#allocation2 + $0xf8] sm:$0xff] %vm351, %v1580
      %1613 = vst.msk [vmem:[#allocation2 + $0x100] sm:$0xff] %vm351, %v1581
      %1614 = vst.msk [vmem:[#allocation2 + $0x108] sm:$0xff] %vm351, %v1582
      %1615 = vst.msk [vmem:[#allocation2 + $0x110] sm:$0xff] %vm351, %v1583
      %1616 = vst.msk [vmem:[#allocation2 + $0x8] sm:$0xff] %vm351, 0
      %1617 = vst.msk [vmem:[#allocation2 + $0x10] sm:$0xff] %vm351, 0
      %1618 = vst.msk [vmem:[#allocation2 + $0x118] sm:$0xff] %vm351, 0
      %1619 = vst.msk [vmem:[#allocation2 + $0x120] sm:$0xff] %vm351, 0
      %v1620 = vld [vmem:[#allocation2] sm:$0x80]
      %v1621 = vld [vmem:[#allocation2 + $0x8] sm:$0xff]
      %v1622 = vld [vmem:[#allocation2 + $0x10] sm:$0xff]
      %v1623 = vld [vmem:[#allocation2 + $0x18] sm:$0xff]
      %v1624 = vld [vmem:[#allocation2 + $0x20] sm:$0xff]
      %v1625 = vld [vmem:[#allocation2 + $0x28] sm:$0xff]
      %v1626 = vld [vmem:[#allocation2 + $0x30] sm:$0xff]
      %v1627 = vld [vmem:[#allocation2 + $0x38] sm:$0xff]
      %v1628 = vld [vmem:[#allocation2 + $0x40] sm:$0xff]
      %v1629 = vld [vmem:[#allocation2 + $0x48] sm:$0xff]
      %v1630 = vld [vmem:[#allocation2 + $0x50] sm:$0xff]
      %v1631 = vld [vmem:[#allocation2 + $0x58] sm:$0xff]
      %v1632 = vld [vmem:[#allocation2 + $0x60] sm:$0xff]
      %v1633 = vld [vmem:[#allocation2 + $0x68] sm:$0xff]
      %v1634 = vld [vmem:[#allocation2 + $0x70] sm:$0xff]
      %v1635 = vld [vmem:[#allocation2 + $0x78] sm:$0xff]
      %v1636 = vld [vmem:[#allocation2 + $0x80] sm:$0xff]
      %v1637 = vld [vmem:[#allocation2 + $0x88] sm:$0xff]
      %v1638 = vld [vmem:[#allocation2 + $0x90] sm:$0xff]
      %v1639 = vld [vmem:[#allocation2 + $0x98] sm:$0xff]
      %v1640 = vld [vmem:[#allocation2 + $0xa0] sm:$0xff]
      %v1641 = vld [vmem:[#allocation2 + $0xa8] sm:$0xff]
      %v1642 = vld [vmem:[#allocation2 + $0xb0] sm:$0xff]
      %v1643 = vld [vmem:[#allocation2 + $0xb8] sm:$0xff]
      %v1644 = vld [vmem:[#allocation2 + $0xc0] sm:$0xff]
      %v1645 = vld [vmem:[#allocation2 + $0xc8] sm:$0xff]
      %v1646 = vld [vmem:[#allocation2 + $0xd0] sm:$0xff]
      %v1647 = vld [vmem:[#allocation2 + $0xd8] sm:$0xff]
      %v1648 = vld [vmem:[#allocation2 + $0xe0] sm:$0xff]
      %v1649 = vld [vmem:[#allocation2 + $0xe8] sm:$0xff]
      %v1650 = vld [vmem:[#allocation2 + $0xf0] sm:$0xff]
      %v1651 = vld [vmem:[#allocation2 + $0xf8] sm:$0xff]
      %v1652 = vld [vmem:[#allocation2 + $0x100] sm:$0xff]
      %v1653 = vld [vmem:[#allocation2 + $0x108] sm:$0xff]
      %v1654 = vld [vmem:[#allocation2 + $0x110] sm:$0xff]
      %v1655 = vld [vmem:[#allocation2 + $0x118] sm:$0xff]
      %v1656 = vld [vmem:[#allocation2 + $0x120] sm:$0xff]
      %v1657 = vld [vmem:[#allocation2 + $0x128] sm:$0x1]
      %vm1658 = vsmask.f32 7424
      %v1660 = vshll.u32 %v1621, 16
      %v1662 = vrot.slane %v1660, 1
      %v1663 = vshrl.u32 %v1621, 16
      %v1665 = vor.u32 %v1663, %v1662
      %v1667 = vshll.u32 %v1622, 16
      %v1669 = vrot.slane %v1667, 1
      %v1670 = vsel %vm1658, %v1665, %v1669
      %v1671 = vshrl.u32 %v1622, 16
      %v1673 = vor.u32 %v1671, %v1669
      %v1675 = vshll.u32 %v1623, 16
      %v1677 = vrot.slane %v1675, 1
      %v1678 = vsel %vm1658, %v1673, %v1677
      %v1679 = vshrl.u32 %v1623, 16
      %v1681 = vor.u32 %v1679, %v1677
      %v1683 = vshll.u32 %v1624, 16
      %v1685 = vrot.slane %v1683, 1
      %v1686 = vsel %vm1658, %v1681, %v1685
      %v1687 = vshrl.u32 %v1624, 16
      %v1689 = vor.u32 %v1687, %v1685
      %v1691 = vshll.u32 %v1625, 16
      %v1693 = vrot.slane %v1691, 1
      %v1694 = vsel %vm1658, %v1689, %v1693
      %v1695 = vshrl.u32 %v1625, 16
      %v1697 = vor.u32 %v1695, %v1693
      %v1699 = vshll.u32 %v1626, 16
      %v1701 = vrot.slane %v1699, 1
      %v1702 = vsel %vm1658, %v1697, %v1701
      %v1703 = vshrl.u32 %v1626, 16
      %v1705 = vor.u32 %v1703, %v1701
      %v1707 = vshll.u32 %v1627, 16
      %v1709 = vrot.slane %v1707, 1
      %v1710 = vsel %vm1658, %v1705, %v1709
      %v1711 = vshrl.u32 %v1627, 16
      %v1713 = vor.u32 %v1711, %v1709
      %v1715 = vshll.u32 %v1628, 16
      %v1717 = vrot.slane %v1715, 1
      %v1718 = vsel %vm1658, %v1713, %v1717
      %v1719 = vshrl.u32 %v1628, 16
      %v1721 = vor.u32 %v1719, %v1717
      %v1723 = vshll.u32 %v1629, 16
      %v1725 = vrot.slane %v1723, 1
      %v1726 = vsel %vm1658, %v1721, %v1725
      %v1727 = vshrl.u32 %v1629, 16
      %v1729 = vor.u32 %v1727, %v1725
      %v1731 = vshll.u32 %v1630, 16
      %v1733 = vrot.slane %v1731, 1
      %v1734 = vsel %vm1658, %v1729, %v1733
      %v1735 = vshrl.u32 %v1630, 16
      %v1737 = vor.u32 %v1735, %v1733
      %v1739 = vshll.u32 %v1631, 16
      %v1741 = vrot.slane %v1739, 1
      %v1742 = vsel %vm1658, %v1737, %v1741
      %v1743 = vshrl.u32 %v1631, 16
      %v1745 = vor.u32 %v1743, %v1741
      %v1747 = vshll.u32 %v1632, 16
      %v1749 = vrot.slane %v1747, 1
      %v1750 = vsel %vm1658, %v1745, %v1749
      %v1751 = vshrl.u32 %v1632, 16
      %v1753 = vor.u32 %v1751, %v1749
      %v1755 = vshll.u32 %v1633, 16
      %v1757 = vrot.slane %v1755, 1
      %v1758 = vsel %vm1658, %v1753, %v1757
      %v1759 = vshrl.u32 %v1633, 16
      %v1761 = vor.u32 %v1759, %v1757
      %v1763 = vshll.u32 %v1634, 16
      %v1765 = vrot.slane %v1763, 1
      %v1766 = vsel %vm1658, %v1761, %v1765
      %v1767 = vshrl.u32 %v1634, 16
      %v1769 = vor.u32 %v1767, %v1765
      %v1771 = vshll.u32 %v1635, 16
      %v1773 = vrot.slane %v1771, 1
      %v1774 = vsel %vm1658, %v1769, %v1773
      %v1775 = vshrl.u32 %v1635, 16
      %v1777 = vor.u32 %v1775, %v1773
      %v1779 = vshll.u32 %v1636, 16
      %v1781 = vrot.slane %v1779, 1
      %v1782 = vsel %vm1658, %v1777, %v1781
      %v1783 = vshrl.u32 %v1636, 16
      %v1785 = vor.u32 %v1783, %v1781
      %v1787 = vshll.u32 %v1637, 16
      %v1789 = vrot.slane %v1787, 1
      %v1790 = vsel %vm1658, %v1785, %v1789
      %v1791 = vshrl.u32 %v1637, 16
      %v1793 = vor.u32 %v1791, %v1789
      %v1795 = vshll.u32 %v1638, 16
      %v1797 = vrot.slane %v1795, 1
      %v1798 = vsel %vm1658, %v1793, %v1797
      %v1799 = vshrl.u32 %v1638, 16
      %v1801 = vor.u32 %v1799, %v1797
      %v1803 = vshll.u32 %v1639, 16
      %v1805 = vrot.slane %v1803, 1
      %v1806 = vsel %vm1658, %v1801, %v1805
      %v1807 = vshrl.u32 %v1639, 16
      %v1809 = vor.u32 %v1807, %v1805
      %v1811 = vshll.u32 %v1640, 16
      %v1813 = vrot.slane %v1811, 1
      %v1814 = vsel %vm1658, %v1809, %v1813
      %v1815 = vshrl.u32 %v1640, 16
      %v1817 = vor.u32 %v1815, %v1813
      %v1819 = vshll.u32 %v1641, 16
      %v1821 = vrot.slane %v1819, 1
      %v1822 = vsel %vm1658, %v1817, %v1821
      %v1823 = vshrl.u32 %v1641, 16
      %v1825 = vor.u32 %v1823, %v1821
      %v1827 = vshll.u32 %v1642, 16
      %v1829 = vrot.slane %v1827, 1
      %v1830 = vsel %vm1658, %v1825, %v1829
      %v1831 = vshrl.u32 %v1642, 16
      %v1833 = vor.u32 %v1831, %v1829
      %v1835 = vshll.u32 %v1643, 16
      %v1837 = vrot.slane %v1835, 1
      %v1838 = vsel %vm1658, %v1833, %v1837
      %v1839 = vshrl.u32 %v1643, 16
      %v1841 = vor.u32 %v1839, %v1837
      %v1843 = vshll.u32 %v1644, 16
      %v1845 = vrot.slane %v1843, 1
      %v1846 = vsel %vm1658, %v1841, %v1845
      %v1847 = vshrl.u32 %v1644, 16
      %v1849 = vor.u32 %v1847, %v1845
      %v1851 = vshll.u32 %v1645, 16
      %v1853 = vrot.slane %v1851, 1
      %v1854 = vsel %vm1658, %v1849, %v1853
      %v1855 = vshrl.u32 %v1645, 16
      %v1857 = vor.u32 %v1855, %v1853
      %v1859 = vshll.u32 %v1646, 16
      %v1861 = vrot.slane %v1859, 1
      %v1862 = vsel %vm1658, %v1857, %v1861
      %v1863 = vshrl.u32 %v1646, 16
      %v1865 = vor.u32 %v1863, %v1861
      %v1867 = vshll.u32 %v1647, 16
      %v1869 = vrot.slane %v1867, 1
      %v1870 = vsel %vm1658, %v1865, %v1869
      %v1871 = vshrl.u32 %v1647, 16
      %v1873 = vor.u32 %v1871, %v1869
      %v1875 = vshll.u32 %v1648, 16
      %v1877 = vrot.slane %v1875, 1
      %v1878 = vsel %vm1658, %v1873, %v1877
      %v1879 = vshrl.u32 %v1648, 16
      %v1881 = vor.u32 %v1879, %v1877
      %v1883 = vshll.u32 %v1649, 16
      %v1885 = vrot.slane %v1883, 1
      %v1886 = vsel %vm1658, %v1881, %v1885
      %v1887 = vshrl.u32 %v1649, 16
      %v1889 = vor.u32 %v1887, %v1885
      %v1891 = vshll.u32 %v1650, 16
      %v1893 = vrot.slane %v1891, 1
      %v1894 = vsel %vm1658, %v1889, %v1893
      %v1895 = vshrl.u32 %v1650, 16
      %v1897 = vor.u32 %v1895, %v1893
      %v1899 = vshll.u32 %v1651, 16
      %v1901 = vrot.slane %v1899, 1
      %v1902 = vsel %vm1658, %v1897, %v1901
      %v1903 = vshrl.u32 %v1651, 16
      %v1905 = vor.u32 %v1903, %v1901
      %v1907 = vshll.u32 %v1652, 16
      %v1909 = vrot.slane %v1907, 1
      %v1910 = vsel %vm1658, %v1905, %v1909
      %v1911 = vshrl.u32 %v1652, 16
      %v1913 = vor.u32 %v1911, %v1909
      %v1915 = vshll.u32 %v1653, 16
      %v1917 = vrot.slane %v1915, 1
      %v1918 = vsel %vm1658, %v1913, %v1917
      %v1919 = vshrl.u32 %v1653, 16
      %v1921 = vor.u32 %v1919, %v1917
      %v1923 = vshll.u32 %v1654, 16
      %v1925 = vrot.slane %v1923, 1
      %v1926 = vsel %vm1658, %v1921, %v1925
      %v1927 = vshrl.u32 %v1654, 16
      %v1929 = vor.u32 %v1927, %v1925
      %v1931 = vshll.u32 %v1655, 16
      %v1933 = vrot.slane %v1931, 1
      %v1934 = vsel %vm1658, %v1929, %v1933
      %v1935 = vshrl.u32 %v1655, 16
      %v1937 = vor.u32 %v1935, %v1933
      %v1939 = vshll.u32 %v1656, 16
      %v1941 = vrot.slane %v1939, 1
      %v1942 = vsel %vm1658, %v1937, %v1941
      %v1943 = vshrl.u32 %v1656, 16
      %v1945 = vor.u32 %v1943, %v1941
      %1946 = vrot.lane.b32.xlu0 %v1662, 4
      %v1947 = vpop.permute.xlu0 %1946
      %1948 = vrot.lane.b32.xlu0 %v1670, 4
      %v1949 = vpop.permute.xlu0 %1948
      %1950 = vrot.lane.b32.xlu0 %v1678, 4
      %v1951 = vpop.permute.xlu0 %1950
      %1952 = vrot.lane.b32.xlu0 %v1686, 4
      %v1953 = vpop.permute.xlu0 %1952
      %1954 = vrot.lane.b32.xlu0 %v1694, 4
      %v1955 = vpop.permute.xlu0 %1954
      %1956 = vrot.lane.b32.xlu0 %v1702, 4
      %v1957 = vpop.permute.xlu0 %1956
      %1958 = vrot.lane.b32.xlu0 %v1710, 4
      %v1959 = vpop.permute.xlu0 %1958
      %1960 = vrot.lane.b32.xlu0 %v1718, 4
      %v1961 = vpop.permute.xlu0 %1960
      %1962 = vrot.lane.b32.xlu0 %v1726, 4
      %v1963 = vpop.permute.xlu0 %1962
      %1964 = vrot.lane.b32.xlu0 %v1734, 4
      %v1965 = vpop.permute.xlu0 %1964
      %1966 = vrot.lane.b32.xlu0 %v1742, 4
      %v1967 = vpop.permute.xlu0 %1966
      %1968 = vrot.lane.b32.xlu0 %v1750, 4
      %v1969 = vpop.permute.xlu0 %1968
      %1970 = vrot.lane.b32.xlu0 %v1758, 4
      %v1971 = vpop.permute.xlu0 %1970
      %1972 = vrot.lane.b32.xlu0 %v1766, 4
      %v1973 = vpop.permute.xlu0 %1972
      %1974 = vrot.lane.b32.xlu0 %v1774, 4
      %v1975 = vpop.permute.xlu0 %1974
      %1976 = vrot.lane.b32.xlu0 %v1782, 4
      %v1977 = vpop.permute.xlu0 %1976
      %1978 = vrot.lane.b32.xlu0 %v1790, 4
      %v1979 = vpop.permute.xlu0 %1978
      %1980 = vrot.lane.b32.xlu0 %v1798, 4
      %v1981 = vpop.permute.xlu0 %1980
      %1982 = vrot.lane.b32.xlu0 %v1806, 4
      %v1983 = vpop.permute.xlu0 %1982
      %1984 = vrot.lane.b32.xlu0 %v1814, 4
      %v1985 = vpop.permute.xlu0 %1984
      %1986 = vrot.lane.b32.xlu0 %v1822, 4
      %v1987 = vpop.permute.xlu0 %1986
      %1988 = vrot.lane.b32.xlu0 %v1830, 4
      %v1989 = vpop.permute.xlu0 %1988
      %1990 = vrot.lane.b32.xlu0 %v1838, 4
      %v1991 = vpop.permute.xlu0 %1990
      %1992 = vrot.lane.b32.xlu0 %v1846, 4
      %v1993 = vpop.permute.xlu0 %1992
      %1994 = vrot.lane.b32.xlu0 %v1854, 4
      %v1995 = vpop.permute.xlu0 %1994
      %1996 = vrot.lane.b32.xlu0 %v1862, 4
      %v1997 = vpop.permute.xlu0 %1996
      %1998 = vrot.lane.b32.xlu0 %v1870, 4
      %v1999 = vpop.permute.xlu0 %1998
      %2000 = vrot.lane.b32.xlu0 %v1878, 4
      %v2001 = vpop.permute.xlu0 %2000
      %2002 = vrot.lane.b32.xlu0 %v1886, 4
      %v2003 = vpop.permute.xlu0 %2002
      %2004 = vrot.lane.b32.xlu0 %v1894, 4
      %v2005 = vpop.permute.xlu0 %2004
      %2006 = vrot.lane.b32.xlu0 %v1902, 4
      %v2007 = vpop.permute.xlu0 %2006
      %2008 = vrot.lane.b32.xlu0 %v1910, 4
      %v2009 = vpop.permute.xlu0 %2008
      %2010 = vrot.lane.b32.xlu0 %v1918, 4
      %v2011 = vpop.permute.xlu0 %2010
      %2012 = vrot.lane.b32.xlu0 %v1926, 4
      %v2013 = vpop.permute.xlu0 %2012
      %2014 = vrot.lane.b32.xlu0 %v1934, 4
      %v2015 = vpop.permute.xlu0 %2014
      %2016 = vrot.lane.b32.xlu0 %v1942, 4
      %v2017 = vpop.permute.xlu0 %2016
      %2018 = vrot.lane.b32.xlu0 %v1945, 4
      %v2019 = vpop.permute.xlu0 %2018
      %vm2057 = vcmask 1046528
      %v2058 = vrot.slane %v1621, 1
      %v2059 = vrot.slane %v1622, 1
      %v2060 = vsel %vm2057, %v2058, %v2059
      %v2061 = vrot.slane %v1623, 1
      %v2062 = vsel %vm2057, %v2059, %v2061
      %v2063 = vrot.slane %v1624, 1
      %v2064 = vsel %vm2057, %v2061, %v2063
      %v2065 = vrot.slane %v1625, 1
      %v2066 = vsel %vm2057, %v2063, %v2065
      %v2067 = vrot.slane %v1626, 1
      %v2068 = vsel %vm2057, %v2065, %v2067
      %v2069 = vrot.slane %v1627, 1
      %v2070 = vsel %vm2057, %v2067, %v2069
      %v2071 = vrot.slane %v1628, 1
      %v2072 = vsel %vm2057, %v2069, %v2071
      %v2073 = vrot.slane %v1629, 1
      %v2074 = vsel %vm2057, %v2071, %v2073
      %v2075 = vrot.slane %v1630, 1
      %v2076 = vsel %vm2057, %v2073, %v2075
      %v2077 = vrot.slane %v1631, 1
      %v2078 = vsel %vm2057, %v2075, %v2077
      %v2079 = vrot.slane %v1632, 1
      %v2080 = vsel %vm2057, %v2077, %v2079
      %v2081 = vrot.slane %v1633, 1
      %v2082 = vsel %vm2057, %v2079, %v2081
      %v2083 = vrot.slane %v1634, 1
      %v2084 = vsel %vm2057, %v2081, %v2083
      %v2085 = vrot.slane %v1635, 1
      %v2086 = vsel %vm2057, %v2083, %v2085
      %v2087 = vrot.slane %v1636, 1
      %v2088 = vsel %vm2057, %v2085, %v2087
      %v2089 = vrot.slane %v1637, 1
      %v2090 = vsel %vm2057, %v2087, %v2089
      %v2091 = vrot.slane %v1638, 1
      %v2092 = vsel %vm2057, %v2089, %v2091
      %v2093 = vrot.slane %v1639, 1
      %v2094 = vsel %vm2057, %v2091, %v2093
      %v2095 = vrot.slane %v1640, 1
      %v2096 = vsel %vm2057, %v2093, %v2095
      %v2097 = vrot.slane %v1641, 1
      %v2098 = vsel %vm2057, %v2095, %v2097
      %v2099 = vrot.slane %v1642, 1
      %v2100 = vsel %vm2057, %v2097, %v2099
      %v2101 = vrot.slane %v1643, 1
      %v2102 = vsel %vm2057, %v2099, %v2101
      %v2103 = vrot.slane %v1644, 1
      %v2104 = vsel %vm2057, %v2101, %v2103
      %v2105 = vrot.slane %v1645, 1
      %v2106 = vsel %vm2057, %v2103, %v2105
      %v2107 = vrot.slane %v1646, 1
      %v2108 = vsel %vm2057, %v2105, %v2107
      %v2109 = vrot.slane %v1647, 1
      %v2110 = vsel %vm2057, %v2107, %v2109
      %v2111 = vrot.slane %v1648, 1
      %v2112 = vsel %vm2057, %v2109, %v2111
      %v2113 = vrot.slane %v1649, 1
      %v2114 = vsel %vm2057, %v2111, %v2113
      %v2115 = vrot.slane %v1650, 1
      %v2116 = vsel %vm2057, %v2113, %v2115
      %v2117 = vrot.slane %v1651, 1
      %v2118 = vsel %vm2057, %v2115, %v2117
      %v2119 = vrot.slane %v1652, 1
      %v2120 = vsel %vm2057, %v2117, %v2119
      %v2121 = vrot.slane %v1653, 1
      %v2122 = vsel %vm2057, %v2119, %v2121
      %v2123 = vrot.slane %v1654, 1
      %v2124 = vsel %vm2057, %v2121, %v2123
      %v2125 = vrot.slane %v1655, 1
      %v2126 = vsel %vm2057, %v2123, %v2125
      %v2127 = vrot.slane %v1656, 1
      %v2128 = vsel %vm2057, %v2125, %v2127
      %v2129 = vrot.slane %v1657, 1
      %v2130 = vsel %vm2057, %v2127, %v2129
      %2131 = vrot.lane.b32.xlu0 %v2058, 8
      %v2132 = vpop.permute.xlu0 %2131
      %2133 = vrot.lane.b32.xlu0 %v2060, 8
      %v2134 = vpop.permute.xlu0 %2133
      %2135 = vrot.lane.b32.xlu0 %v2062, 8
      %v2136 = vpop.permute.xlu0 %2135
      %2137 = vrot.lane.b32.xlu0 %v2064, 8
      %v2138 = vpop.permute.xlu0 %2137
      %2139 = vrot.lane.b32.xlu0 %v2066, 8
      %v2140 = vpop.permute.xlu0 %2139
      %2141 = vrot.lane.b32.xlu0 %v2068, 8
      %v2142 = vpop.permute.xlu0 %2141
      %2143 = vrot.lane.b32.xlu0 %v2070, 8
      %v2144 = vpop.permute.xlu0 %2143
      %2145 = vrot.lane.b32.xlu0 %v2072, 8
      %v2146 = vpop.permute.xlu0 %2145
      %2147 = vrot.lane.b32.xlu0 %v2074, 8
      %v2148 = vpop.permute.xlu0 %2147
      %2149 = vrot.lane.b32.xlu0 %v2076, 8
      %v2150 = vpop.permute.xlu0 %2149
      %2151 = vrot.lane.b32.xlu0 %v2078, 8
      %v2152 = vpop.permute.xlu0 %2151
      %2153 = vrot.lane.b32.xlu0 %v2080, 8
      %v2154 = vpop.permute.xlu0 %2153
      %2155 = vrot.lane.b32.xlu0 %v2082, 8
      %v2156 = vpop.permute.xlu0 %2155
      %2157 = vrot.lane.b32.xlu0 %v2084, 8
      %v2158 = vpop.permute.xlu0 %2157
      %2159 = vrot.lane.b32.xlu0 %v2086, 8
      %v2160 = vpop.permute.xlu0 %2159
      %2161 = vrot.lane.b32.xlu0 %v2088, 8
      %v2162 = vpop.permute.xlu0 %2161
      %2163 = vrot.lane.b32.xlu0 %v2090, 8
      %v2164 = vpop.permute.xlu0 %2163
      %2165 = vrot.lane.b32.xlu0 %v2092, 8
      %v2166 = vpop.permute.xlu0 %2165
      %2167 = vrot.lane.b32.xlu0 %v2094, 8
      %v2168 = vpop.permute.xlu0 %2167
      %2169 = vrot.lane.b32.xlu0 %v2096, 8
      %v2170 = vpop.permute.xlu0 %2169
      %2171 = vrot.lane.b32.xlu0 %v2098, 8
      %v2172 = vpop.permute.xlu0 %2171
      %2173 = vrot.lane.b32.xlu0 %v2100, 8
      %v2174 = vpop.permute.xlu0 %2173
      %2175 = vrot.lane.b32.xlu0 %v2102, 8
      %v2176 = vpop.permute.xlu0 %2175
      %2177 = vrot.lane.b32.xlu0 %v2104, 8
      %v2178 = vpop.permute.xlu0 %2177
      %2179 = vrot.lane.b32.xlu0 %v2106, 8
      %v2180 = vpop.permute.xlu0 %2179
      %2181 = vrot.lane.b32.xlu0 %v2108, 8
      %v2182 = vpop.permute.xlu0 %2181
      %2183 = vrot.lane.b32.xlu0 %v2110, 8
      %v2184 = vpop.permute.xlu0 %2183
      %2185 = vrot.lane.b32.xlu0 %v2112, 8
      %v2186 = vpop.permute.xlu0 %2185
      %2187 = vrot.lane.b32.xlu0 %v2114, 8
      %v2188 = vpop.permute.xlu0 %2187
      %2189 = vrot.lane.b32.xlu0 %v2116, 8
      %v2190 = vpop.permute.xlu0 %2189
      %2191 = vrot.lane.b32.xlu0 %v2118, 8
      %v2192 = vpop.permute.xlu0 %2191
      %2193 = vrot.lane.b32.xlu0 %v2120, 8
      %v2194 = vpop.permute.xlu0 %2193
      %2195 = vrot.lane.b32.xlu0 %v2122, 8
      %v2196 = vpop.permute.xlu0 %2195
      %2197 = vrot.lane.b32.xlu0 %v2124, 8
      %v2198 = vpop.permute.xlu0 %2197
      %2199 = vrot.lane.b32.xlu0 %v2126, 8
      %v2200 = vpop.permute.xlu0 %2199
      %2201 = vrot.lane.b32.xlu0 %v2128, 8
      %v2202 = vpop.permute.xlu0 %2201
      %2203 = vrot.lane.b32.xlu0 %v2130, 8
      %v2204 = vpop.permute.xlu0 %2203
      %v2207 = vsel %vm351, %v1620, %v1947
      %v2209 = vsel %vm351, %v1621, %v1949
      %v2211 = vsel %vm351, %v1622, %v1951
      %v2213 = vsel %vm351, %v1623, %v1953
      %v2215 = vsel %vm351, %v1624, %v1955
      %v2217 = vsel %vm351, %v1625, %v1957
      %v2219 = vsel %vm351, %v1626, %v1959
      %v2221 = vsel %vm351, %v1627, %v1961
      %v2223 = vsel %vm351, %v1628, %v1963
      %v2225 = vsel %vm351, %v1629, %v1965
      %v2227 = vsel %vm351, %v1630, %v1967
      %v2229 = vsel %vm351, %v1631, %v1969
      %v2231 = vsel %vm351, %v1632, %v1971
      %v2233 = vsel %vm351, %v1633, %v1973
      %v2235 = vsel %vm351, %v1634, %v1975
      %v2237 = vsel %vm351, %v1635, %v1977
      %v2239 = vsel %vm351, %v1636, %v1979
      %v2241 = vsel %vm351, %v1637, %v1981
      %v2243 = vsel %vm351, %v1638, %v1983
      %v2245 = vsel %vm351, %v1639, %v1985
      %v2247 = vsel %vm351, %v1640, %v1987
      %v2249 = vsel %vm351, %v1641, %v1989
      %v2251 = vsel %vm351, %v1642, %v1991
      %v2253 = vsel %vm351, %v1643, %v1993
      %v2255 = vsel %vm351, %v1644, %v1995
      %v2257 = vsel %vm351, %v1645, %v1997
      %v2259 = vsel %vm351, %v1646, %v1999
      %v2261 = vsel %vm351, %v1647, %v2001
      %v2263 = vsel %vm351, %v1648, %v2003
      %v2265 = vsel %vm351, %v1649, %v2005
      %v2267 = vsel %vm351, %v1650, %v2007
      %v2269 = vsel %vm351, %v1651, %v2009
      %v2271 = vsel %vm351, %v1652, %v2011
      %v2273 = vsel %vm351, %v1653, %v2013
      %v2275 = vsel %vm351, %v1654, %v2015
      %v2277 = vsel %vm351, %v1655, %v2017
      %v2279 = vsel %vm351, %v1656, %v2019
      %vm2280 = vcmask 64512
      %v2282 = vsel %vm2280, %v2207, %v2132
      %v2284 = vsel %vm2280, %v2209, %v2134
      %v2286 = vsel %vm2280, %v2211, %v2136
      %v2288 = vsel %vm2280, %v2213, %v2138
      %v2290 = vsel %vm2280, %v2215, %v2140
      %v2292 = vsel %vm2280, %v2217, %v2142
      %v2294 = vsel %vm2280, %v2219, %v2144
      %v2296 = vsel %vm2280, %v2221, %v2146
      %v2298 = vsel %vm2280, %v2223, %v2148
      %v2300 = vsel %vm2280, %v2225, %v2150
      %v2302 = vsel %vm2280, %v2227, %v2152
      %v2304 = vsel %vm2280, %v2229, %v2154
      %v2306 = vsel %vm2280, %v2231, %v2156
      %v2308 = vsel %vm2280, %v2233, %v2158
      %v2310 = vsel %vm2280, %v2235, %v2160
      %v2312 = vsel %vm2280, %v2237, %v2162
      %v2314 = vsel %vm2280, %v2239, %v2164
      %v2316 = vsel %vm2280, %v2241, %v2166
      %v2318 = vsel %vm2280, %v2243, %v2168
      %v2320 = vsel %vm2280, %v2245, %v2170
      %v2322 = vsel %vm2280, %v2247, %v2172
      %v2324 = vsel %vm2280, %v2249, %v2174
      %v2326 = vsel %vm2280, %v2251, %v2176
      %v2328 = vsel %vm2280, %v2253, %v2178
      %v2330 = vsel %vm2280, %v2255, %v2180
      %v2332 = vsel %vm2280, %v2257, %v2182
      %v2334 = vsel %vm2280, %v2259, %v2184
      %v2336 = vsel %vm2280, %v2261, %v2186
      %v2338 = vsel %vm2280, %v2263, %v2188
      %v2340 = vsel %vm2280, %v2265, %v2190
      %v2342 = vsel %vm2280, %v2267, %v2192
      %v2344 = vsel %vm2280, %v2269, %v2194
      %v2346 = vsel %vm2280, %v2271, %v2196
      %v2348 = vsel %vm2280, %v2273, %v2198
      %v2350 = vsel %vm2280, %v2275, %v2200
      %v2352 = vsel %vm2280, %v2277, %v2202
      %v2354 = vsel %vm2280, %v2279, %v2204
      %v2355 = vld [vmem:[%s2] sm:$0xf]
      %v2356 = vld [vmem:[%s2 + $0x4] sm:$0x3]
      %s2357 = scalar_lea.vmem %s2, 8
      %v2358 = vld [vmem:[%s2357] sm:$0xf]
      %v2359 = vld [vmem:[%s2357 + $0x4] sm:$0x3]
      %vm2360 = vsmask.f32 256
      %v2361 = vshrl.u32 %v2286, 16
      %v2363 = vrot.slane %v2361, 7
      %v2364 = vshrl.u32 %v2288, 16
      %v2366 = vrot.slane %v2364, 7
      %v2367 = vshll.u32 %v2288, 16
      %v2369 = vor.u32 %v2366, %v2367
      %v2370 = vsel %vm2360, %v2363, %v2369
      %v2371 = vshrl.u32 %v2290, 16
      %v2373 = vrot.slane %v2371, 7
      %v2374 = vshll.u32 %v2290, 16
      %v2376 = vor.u32 %v2373, %v2374
      %v2377 = vsel %vm2360, %v2366, %v2376
      %v2378 = vshrl.u32 %v2292, 16
      %v2380 = vrot.slane %v2378, 7
      %v2381 = vshll.u32 %v2292, 16
      %v2383 = vor.u32 %v2380, %v2381
      %v2384 = vsel %vm2360, %v2373, %v2383
      %v2385 = vshrl.u32 %v2294, 16
      %v2387 = vrot.slane %v2385, 7
      %v2388 = vshll.u32 %v2294, 16
      %v2390 = vor.u32 %v2387, %v2388
      %v2391 = vsel %vm2360, %v2380, %v2390
      %v2392 = vshrl.u32 %v2296, 16
      %v2394 = vrot.slane %v2392, 7
      %v2395 = vshll.u32 %v2296, 16
      %v2397 = vor.u32 %v2394, %v2395
      %v2398 = vsel %vm2360, %v2387, %v2397
      %v2399 = vshrl.u32 %v2298, 16
      %v2401 = vrot.slane %v2399, 7
      %v2402 = vshll.u32 %v2298, 16
      %v2404 = vor.u32 %v2401, %v2402
      %v2405 = vsel %vm2360, %v2394, %v2404
      %v2406 = vshrl.u32 %v2300, 16
      %v2408 = vrot.slane %v2406, 7
      %v2409 = vshll.u32 %v2300, 16
      %v2411 = vor.u32 %v2408, %v2409
      %v2412 = vsel %vm2360, %v2401, %v2411
      %v2413 = vshrl.u32 %v2302, 16
      %v2415 = vrot.slane %v2413, 7
      %v2416 = vshll.u32 %v2302, 16
      %v2418 = vor.u32 %v2415, %v2416
      %v2419 = vsel %vm2360, %v2408, %v2418
      %v2420 = vshrl.u32 %v2304, 16
      %v2422 = vrot.slane %v2420, 7
      %v2423 = vshll.u32 %v2304, 16
      %v2425 = vor.u32 %v2422, %v2423
      %v2426 = vsel %vm2360, %v2415, %v2425
      %v2427 = vshrl.u32 %v2306, 16
      %v2429 = vrot.slane %v2427, 7
      %v2430 = vshll.u32 %v2306, 16
      %v2432 = vor.u32 %v2429, %v2430
      %v2433 = vsel %vm2360, %v2422, %v2432
      %v2434 = vshrl.u32 %v2308, 16
      %v2436 = vrot.slane %v2434, 7
      %v2437 = vshll.u32 %v2308, 16
      %v2439 = vor.u32 %v2436, %v2437
      %v2440 = vsel %vm2360, %v2429, %v2439
      %v2441 = vshrl.u32 %v2310, 16
      %v2443 = vrot.slane %v2441, 7
      %v2444 = vshll.u32 %v2310, 16
      %v2446 = vor.u32 %v2443, %v2444
      %v2447 = vsel %vm2360, %v2436, %v2446
      %v2448 = vshrl.u32 %v2312, 16
      %v2450 = vrot.slane %v2448, 7
      %v2451 = vshll.u32 %v2312, 16
      %v2453 = vor.u32 %v2450, %v2451
      %v2454 = vsel %vm2360, %v2443, %v2453
      %v2455 = vshrl.u32 %v2314, 16
      %v2457 = vrot.slane %v2455, 7
      %v2458 = vshll.u32 %v2314, 16
      %v2460 = vor.u32 %v2457, %v2458
      %v2461 = vsel %vm2360, %v2450, %v2460
      %v2462 = vshrl.u32 %v2316, 16
      %v2464 = vrot.slane %v2462, 7
      %v2465 = vshll.u32 %v2316, 16
      %v2467 = vor.u32 %v2464, %v2465
      %v2468 = vsel %vm2360, %v2457, %v2467
      %v2469 = vshrl.u32 %v2318, 16
      %v2471 = vrot.slane %v2469, 7
      %v2472 = vshll.u32 %v2318, 16
      %v2474 = vor.u32 %v2471, %v2472
      %v2475 = vsel %vm2360, %v2464, %v2474
      %v2476 = vshrl.u32 %v2320, 16
      %v2478 = vrot.slane %v2476, 7
      %v2479 = vshll.u32 %v2320, 16
      %v2481 = vor.u32 %v2478, %v2479
      %v2482 = vsel %vm2360, %v2471, %v2481
      %v2483 = vshrl.u32 %v2322, 16
      %v2485 = vrot.slane %v2483, 7
      %v2486 = vshll.u32 %v2322, 16
      %v2488 = vor.u32 %v2485, %v2486
      %v2489 = vsel %vm2360, %v2478, %v2488
      %v2490 = vshrl.u32 %v2324, 16
      %v2492 = vrot.slane %v2490, 7
      %v2493 = vshll.u32 %v2324, 16
      %v2495 = vor.u32 %v2492, %v2493
      %v2496 = vsel %vm2360, %v2485, %v2495
      %v2497 = vshrl.u32 %v2326, 16
      %v2499 = vrot.slane %v2497, 7
      %v2500 = vshll.u32 %v2326, 16
      %v2502 = vor.u32 %v2499, %v2500
      %v2503 = vsel %vm2360, %v2492, %v2502
      %v2504 = vshrl.u32 %v2328, 16
      %v2506 = vrot.slane %v2504, 7
      %v2507 = vshll.u32 %v2328, 16
      %v2509 = vor.u32 %v2506, %v2507
      %v2510 = vsel %vm2360, %v2499, %v2509
      %v2511 = vshrl.u32 %v2330, 16
      %v2513 = vrot.slane %v2511, 7
      %v2514 = vshll.u32 %v2330, 16
      %v2516 = vor.u32 %v2513, %v2514
      %v2517 = vsel %vm2360, %v2506, %v2516
      %v2518 = vshrl.u32 %v2332, 16
      %v2520 = vrot.slane %v2518, 7
      %v2521 = vshll.u32 %v2332, 16
      %v2523 = vor.u32 %v2520, %v2521
      %v2524 = vsel %vm2360, %v2513, %v2523
      %v2525 = vshrl.u32 %v2334, 16
      %v2527 = vrot.slane %v2525, 7
      %v2528 = vshll.u32 %v2334, 16
      %v2530 = vor.u32 %v2527, %v2528
      %v2531 = vsel %vm2360, %v2520, %v2530
      %v2532 = vshrl.u32 %v2336, 16
      %v2534 = vrot.slane %v2532, 7
      %v2535 = vshll.u32 %v2336, 16
      %v2537 = vor.u32 %v2534, %v2535
      %v2538 = vsel %vm2360, %v2527, %v2537
      %v2539 = vshrl.u32 %v2338, 16
      %v2541 = vrot.slane %v2539, 7
      %v2542 = vshll.u32 %v2338, 16
      %v2544 = vor.u32 %v2541, %v2542
      %v2545 = vsel %vm2360, %v2534, %v2544
      %v2546 = vshrl.u32 %v2340, 16
      %v2548 = vrot.slane %v2546, 7
      %v2549 = vshll.u32 %v2340, 16
      %v2551 = vor.u32 %v2548, %v2549
      %v2552 = vsel %vm2360, %v2541, %v2551
      %v2553 = vshrl.u32 %v2342, 16
      %v2555 = vrot.slane %v2553, 7
      %v2556 = vshll.u32 %v2342, 16
      %v2558 = vor.u32 %v2555, %v2556
      %v2559 = vsel %vm2360, %v2548, %v2558
      %v2560 = vshrl.u32 %v2344, 16
      %v2562 = vrot.slane %v2560, 7
      %v2563 = vshll.u32 %v2344, 16
      %v2565 = vor.u32 %v2562, %v2563
      %v2566 = vsel %vm2360, %v2555, %v2565
      %v2567 = vshrl.u32 %v2346, 16
      %v2569 = vrot.slane %v2567, 7
      %v2570 = vshll.u32 %v2346, 16
      %v2572 = vor.u32 %v2569, %v2570
      %v2573 = vsel %vm2360, %v2562, %v2572
      %v2574 = vshrl.u32 %v2348, 16
      %v2576 = vrot.slane %v2574, 7
      %v2577 = vshll.u32 %v2348, 16
      %v2579 = vor.u32 %v2576, %v2577
      %v2580 = vsel %vm2360, %v2569, %v2579
      %v2581 = vshrl.u32 %v2350, 16
      %v2583 = vrot.slane %v2581, 7
      %v2584 = vshll.u32 %v2350, 16
      %v2586 = vor.u32 %v2583, %v2584
      %v2587 = vsel %vm2360, %v2576, %v2586
      %v2590 = vunpack.c.l.b16 %v2358
      %v2591 = vunpack.c.l.b16 %v2359
      %v2592 = vpack.c.b16 %v2591, %v2590
      %vm2593 = vcmask 97280
      %v2595 = vsel %vm2593, %v2370, 0
      %v2598 = vsel %vm2593, %v2377, 0
      %v2601 = vsel %vm2593, %v2384, 0
      %v2604 = vsel %vm2593, %v2391, 0
      %v2607 = vsel %vm2593, %v2398, 0
      %v2610 = vsel %vm2593, %v2405, 0
      %v2613 = vsel %vm2593, %v2412, 0
      %v2616 = vsel %vm2593, %v2419, 0
      %v2619 = vsel %vm2593, %v2426, 0
      %v2622 = vsel %vm2593, %v2433, 0
      %v2625 = vsel %vm2593, %v2440, 0
      %v2628 = vsel %vm2593, %v2447, 0
      %v2631 = vsel %vm2593, %v2454, 0
      %v2634 = vsel %vm2593, %v2461, 0
      %v2637 = vsel %vm2593, %v2468, 0
      %v2640 = vsel %vm2593, %v2475, 0
      %v2643 = vsel %vm2593, %v2482, 0
      %v2646 = vsel %vm2593, %v2489, 0
      %v2649 = vsel %vm2593, %v2496, 0
      %v2652 = vsel %vm2593, %v2503, 0
      %v2655 = vsel %vm2593, %v2510, 0
      %v2658 = vsel %vm2593, %v2517, 0
      %v2661 = vsel %vm2593, %v2524, 0
      %v2664 = vsel %vm2593, %v2531, 0
      %v2667 = vsel %vm2593, %v2538, 0
      %v2670 = vsel %vm2593, %v2545, 0
      %v2673 = vsel %vm2593, %v2552, 0
      %v2676 = vsel %vm2593, %v2559, 0
      %v2679 = vsel %vm2593, %v2566, 0
      %v2682 = vsel %vm2593, %v2573, 0
      %v2685 = vsel %vm2593, %v2580, 0
      %v2688 = vsel %vm2593, %v2587, 0
      %vm2690 = vcmask 1045504
      %v2692 = vsel %vm2690, %v2592, 0
      %2694 = vmatprep.subr.bf16.mxu0 0
      %2695 = vmatpush1.bf16.msra.mxu0 %v2692
      %2696 = vmatprep.subr.bf16.mxu0 0
      %2697 = vmatpush1.bf16.msra.mxu0 0
      %2698 = vmatprep.subr.bf16.mxu0 0
      %2699 = vmatpush1.bf16.msra.mxu0 0
      %2700 = vmatprep.subr.bf16.mxu0 0
      %2701 = vmatpush1.bf16.msra.mxu0 0
      %2702 = vmatprep.subr.bf16.mxu0 0
      %2703 = vmatpush1.bf16.msra.mxu0 0
      %2704 = vmatprep.subr.bf16.mxu0 0
      %2705 = vmatpush1.bf16.msra.mxu0 0
      %2706 = vmatprep.subr.bf16.mxu0 0
      %2707 = vmatpush1.bf16.msra.mxu0 0
      %2708 = vmatprep.subr.bf16.mxu0 0
      %2709 = vmatpush1.bf16.msra.mxu0 0
      %2710 = vmatprep.subr.bf16.mxu0 0
      %2711 = vmatpush1.bf16.msra.mxu0 0
      %2712 = vmatprep.subr.bf16.mxu0 0
      %2713 = vmatpush1.bf16.msra.mxu0 0
      %2714 = vmatprep.subr.bf16.mxu0 0
      %2715 = vmatpush1.bf16.msra.mxu0 0
      %2716 = vmatprep.subr.bf16.mxu0 0
      %2717 = vmatpush1.bf16.msra.mxu0 0
      %2718 = vmatprep.subr.bf16.mxu0 0
      %2719 = vmatpush1.bf16.msra.mxu0 0
      %2720 = vmatprep.subr.bf16.mxu0 0
      %2721 = vmatpush1.bf16.msra.mxu0 0
      %2722 = vmatprep.subr.bf16.mxu0 0
      %2723 = vmatpush1.bf16.msra.mxu0 0
      %2724 = vmatprep.subr.bf16.mxu0 0
      %2725 = vmatpush1.bf16.msra.mxu0 0
      %2726 = vmatprep.mubr.bf16.mxu0 0
      %2727 = vmatmul.mubr.bf16.gmra.mrb[0].mxu0 %v2595
      %v2728 = vpop.f32.mrb[0].mxu0
      %v2729 = vadd.f32 0.0, %v2728
      %v2730 = vpop.f32.mrb[0].mxu0
      %v2731 = vpop.f32.mrb[0].mxu0
      %v2732 = vadd.f32 0.0, %v2731
      %v2733 = vpop.f32.mrb[0].mxu0
      %2734 = vmatprep.mubr.bf16.mxu0 0
      %2735 = vmatmul.mubr.bf16.gmra.mrb[0].mxu0 %v2598
      %v2736 = vpop.f32.mrb[0].mxu0
      %v2737 = vadd.f32 0.0, %v2736
      %v2738 = vpop.f32.mrb[0].mxu0
      %v2739 = vpop.f32.mrb[0].mxu0
      %v2740 = vadd.f32 0.0, %v2739
      %v2741 = vpop.f32.mrb[0].mxu0
      %2742 = vmatprep.mubr.bf16.mxu0 0
      %2743 = vmatmul.mubr.bf16.gmra.mrb[0].mxu0 %v2601
      %v2744 = vpop.f32.mrb[0].mxu0
      %v2745 = vadd.f32 0.0, %v2744
      %v2746 = vpop.f32.mrb[0].mxu0
      %v2747 = vpop.f32.mrb[0].mxu0
      %v2748 = vadd.f32 0.0, %v2747
      %v2749 = vpop.f32.mrb[0].mxu0
      %2750 = vmatprep.mubr.bf16.mxu0 0
      %2751 = vmatmul.mubr.bf16.gmra.mrb[0].mxu0 %v2604
      %v2752 = vpop.f32.mrb[0].mxu0
      %v2753 = vadd.f32 0.0, %v2752
      %v2754 = vpop.f32.mrb[0].mxu0
      %v2755 = vpop.f32.mrb[0].mxu0
      %v2756 = vadd.f32 0.0, %v2755
      %v2757 = vpop.f32.mrb[0].mxu0
      %2758 = vmatprep.mubr.bf16.mxu0 0
      %2759 = vmatmul.mubr.bf16.gmra.mrb[0].mxu0 %v2607
      %v2760 = vpop.f32.mrb[0].mxu0
      %v2761 = vadd.f32 0.0, %v2760
      %v2762 = vpop.f32.mrb[0].mxu0
      %v2763 = vpop.f32.mrb[0].mxu0
      %v2764 = vadd.f32 0.0, %v2763
      %v2765 = vpop.f32.mrb[0].mxu0
      %2766 = vmatprep.mubr.bf16.mxu0 0
      %2767 = vmatmul.mubr.bf16.gmra.mrb[0].mxu0 %v2610
      %v2768 = vpop.f32.mrb[0].mxu0
      %v2769 = vadd.f32 0.0, %v2768
      %v2770 = vpop.f32.mrb[0].mxu0
      %v2771 = vpop.f32.mrb[0].mxu0
      %v2772 = vadd.f32 0.0, %v2771
      %v2773 = vpop.f32.mrb[0].mxu0
      %2774 = vmatprep.mubr.bf16.mxu0 0
      %2775 = vmatmul.mubr.bf16.gmra.mrb[0].mxu0 %v2613
      %v2776 = vpop.f32.mrb[0].mxu0
      %v2777 = vadd.f32 0.0, %v2776
      %v2778 = vpop.f32.mrb[0].mxu0
      %v2779 = vpop.f32.mrb[0].mxu0
      %v2780 = vadd.f32 0.0, %v2779
      %v2781 = vpop.f32.mrb[0].mxu0
      %2782 = vmatprep.mubr.bf16.mxu0 0
      %2783 = vmatmul.mubr.bf16.gmra.mrb[0].mxu0 %v2616
      %v2784 = vpop.f32.mrb[0].mxu0
      %v2785 = vadd.f32 0.0, %v2784
      %v2786 = vpop.f32.mrb[0].mxu0
      %v2787 = vpop.f32.mrb[0].mxu0
      %v2788 = vadd.f32 0.0, %v2787
      %v2789 = vpop.f32.mrb[0].mxu0
      %2790 = vmatprep.mubr.bf16.mxu0 0
      %2791 = vmatmul.mubr.bf16.gmra.mrb[0].mxu0 %v2619
      %v2792 = vpop.f32.mrb[0].mxu0
      %v2793 = vadd.f32 0.0, %v2792
      %v2794 = vpop.f32.mrb[0].mxu0
      %v2795 = vpop.f32.mrb[0].mxu0
      %v2796 = vadd.f32 0.0, %v2795
      %v2797 = vpop.f32.mrb[0].mxu0
      %2798 = vmatprep.mubr.bf16.mxu0 0
      %2799 = vmatmul.mubr.bf16.gmra.mrb[0].mxu0 %v2622
      %v2800 = vpop.f32.mrb[0].mxu0
      %v2801 = vadd.f32 0.0, %v2800
      %v2802 = vpop.f32.mrb[0].mxu0
      %v2803 = vpop.f32.mrb[0].mxu0
      %v2804 = vadd.f32 0.0, %v2803
      %v2805 = vpop.f32.mrb[0].mxu0
      %2806 = vmatprep.mubr.bf16.mxu0 0
      %2807 = vmatmul.mubr.bf16.gmra.mrb[0].mxu0 %v2625
      %v2808 = vpop.f32.mrb[0].mxu0
      %v2809 = vadd.f32 0.0, %v2808
      %v2810 = vpop.f32.mrb[0].mxu0
      %v2811 = vpop.f32.mrb[0].mxu0
      %v2812 = vadd.f32 0.0, %v2811
      %v2813 = vpop.f32.mrb[0].mxu0
      %2814 = vmatprep.mubr.bf16.mxu0 0
      %2815 = vmatmul.mubr.bf16.gmra.mrb[0].mxu0 %v2628
      %v2816 = vpop.f32.mrb[0].mxu0
      %v2817 = vadd.f32 0.0, %v2816
      %v2818 = vpop.f32.mrb[0].mxu0
      %v2819 = vpop.f32.mrb[0].mxu0
      %v2820 = vadd.f32 0.0, %v2819
      %v2821 = vpop.f32.mrb[0].mxu0
      %2822 = vmatprep.mubr.bf16.mxu0 0
      %2823 = vmatmul.mubr.bf16.gmra.mrb[0].mxu0 %v2631
      %v2824 = vpop.f32.mrb[0].mxu0
      %v2825 = vadd.f32 0.0, %v2824
      %v2826 = vpop.f32.mrb[0].mxu0
      %v2827 = vpop.f32.mrb[0].mxu0
      %v2828 = vadd.f32 0.0, %v2827
      %v2829 = vpop.f32.mrb[0].mxu0
      %2830 = vmatprep.mubr.bf16.mxu0 0
      %2831 = vmatmul.mubr.bf16.gmra.mrb[0].mxu0 %v2634
      %v2832 = vpop.f32.mrb[0].mxu0
      %v2833 = vadd.f32 0.0, %v2832
      %v2834 = vpop.f32.mrb[0].mxu0
      %v2835 = vpop.f32.mrb[0].mxu0
      %v2836 = vadd.f32 0.0, %v2835
      %v2837 = vpop.f32.mrb[0].mxu0
      %2838 = vmatprep.mubr.bf16.mxu0 0
      %2839 = vmatmul.mubr.bf16.gmra.mrb[0].mxu0 %v2637
      %v2840 = vpop.f32.mrb[0].mxu0
      %v2841 = vadd.f32 0.0, %v2840
      %v2842 = vpop.f32.mrb[0].mxu0
      %v2843 = vpop.f32.mrb[0].mxu0
      %v2844 = vadd.f32 0.0, %v2843
      %v2845 = vpop.f32.mrb[0].mxu0
      %2846 = vmatprep.mubr.bf16.mxu0 0
      %2847 = vmatmul.mubr.bf16.gmra.mrb[0].mxu0 %v2640
      %v2848 = vpop.f32.mrb[0].mxu0
      %v2849 = vadd.f32 0.0, %v2848
      %v2850 = vpop.f32.mrb[0].mxu0
      %v2851 = vpop.f32.mrb[0].mxu0
      %v2852 = vadd.f32 0.0, %v2851
      %v2853 = vpop.f32.mrb[0].mxu0
      %2854 = vmatprep.mubr.bf16.mxu0 0
      %2855 = vmatmul.mubr.bf16.gmra.mrb[0].mxu0 %v2643
      %v2856 = vpop.f32.mrb[0].mxu0
      %v2857 = vadd.f32 0.0, %v2856
      %v2858 = vpop.f32.mrb[0].mxu0
      %v2859 = vpop.f32.mrb[0].mxu0
      %v2860 = vadd.f32 0.0, %v2859
      %v2861 = vpop.f32.mrb[0].mxu0
      %2862 = vmatprep.mubr.bf16.mxu0 0
      %2863 = vmatmul.mubr.bf16.gmra.mrb[0].mxu0 %v2646
      %v2864 = vpop.f32.mrb[0].mxu0
      %v2865 = vadd.f32 0.0, %v2864
      %v2866 = vpop.f32.mrb[0].mxu0
      %v2867 = vpop.f32.mrb[0].mxu0
      %v2868 = vadd.f32 0.0, %v2867
      %v2869 = vpop.f32.mrb[0].mxu0
      %2870 = vmatprep.mubr.bf16.mxu0 0
      %2871 = vmatmul.mubr.bf16.gmra.mrb[0].mxu0 %v2649
      %v2872 = vpop.f32.mrb[0].mxu0
      %v2873 = vadd.f32 0.0, %v2872
      %v2874 = vpop.f32.mrb[0].mxu0
      %v2875 = vpop.f32.mrb[0].mxu0
      %v2876 = vadd.f32 0.0, %v2875
      %v2877 = vpop.f32.mrb[0].mxu0
      %2878 = vmatprep.mubr.bf16.mxu0 0
      %2879 = vmatmul.mubr.bf16.gmra.mrb[0].mxu0 %v2652
      %v2880 = vpop.f32.mrb[0].mxu0
      %v2881 = vadd.f32 0.0, %v2880
      %v2882 = vpop.f32.mrb[0].mxu0
      %v2883 = vpop.f32.mrb[0].mxu0
      %v2884 = vadd.f32 0.0, %v2883
      %v2885 = vpop.f32.mrb[0].mxu0
      %2886 = vmatprep.mubr.bf16.mxu0 0
      %2887 = vmatmul.mubr.bf16.gmra.mrb[0].mxu0 %v2655
      %v2888 = vpop.f32.mrb[0].mxu0
      %v2889 = vadd.f32 0.0, %v2888
      %v2890 = vpop.f32.mrb[0].mxu0
      %v2891 = vpop.f32.mrb[0].mxu0
      %v2892 = vadd.f32 0.0, %v2891
      %v2893 = vpop.f32.mrb[0].mxu0
      %2894 = vmatprep.mubr.bf16.mxu0 0
      %2895 = vmatmul.mubr.bf16.gmra.mrb[0].mxu0 %v2658
      %v2896 = vpop.f32.mrb[0].mxu0
      %v2897 = vadd.f32 0.0, %v2896
      %v2898 = vpop.f32.mrb[0].mxu0
      %v2899 = vpop.f32.mrb[0].mxu0
      %v2900 = vadd.f32 0.0, %v2899
      %v2901 = vpop.f32.mrb[0].mxu0
      %2902 = vmatprep.mubr.bf16.mxu0 0
      %2903 = vmatmul.mubr.bf16.gmra.mrb[0].mxu0 %v2661
      %v2904 = vpop.f32.mrb[0].mxu0
      %v2905 = vadd.f32 0.0, %v2904
      %v2906 = vpop.f32.mrb[0].mxu0
      %v2907 = vpop.f32.mrb[0].mxu0
      %v2908 = vadd.f32 0.0, %v2907
      %v2909 = vpop.f32.mrb[0].mxu0
      %2910 = vmatprep.mubr.bf16.mxu0 0
      %2911 = vmatmul.mubr.bf16.gmra.mrb[0].mxu0 %v2664
      %v2912 = vpop.f32.mrb[0].mxu0
      %v2913 = vadd.f32 0.0, %v2912
      %v2914 = vpop.f32.mrb[0].mxu0
      %v2915 = vpop.f32.mrb[0].mxu0
      %v2916 = vadd.f32 0.0, %v2915
      %v2917 = vpop.f32.mrb[0].mxu0
      %2918 = vmatprep.mubr.bf16.mxu0 0
      %2919 = vmatmul.mubr.bf16.gmra.mrb[0].mxu0 %v2667
      %v2920 = vpop.f32.mrb[0].mxu0
      %v2921 = vadd.f32 0.0, %v2920
      %v2922 = vpop.f32.mrb[0].mxu0
      %v2923 = vpop.f32.mrb[0].mxu0
      %v2924 = vadd.f32 0.0, %v2923
      %v2925 = vpop.f32.mrb[0].mxu0
      %2926 = vmatprep.mubr.bf16.mxu0 0
      %2927 = vmatmul.mubr.bf16.gmra.mrb[0].mxu0 %v2670
      %v2928 = vpop.f32.mrb[0].mxu0
      %v2929 = vadd.f32 0.0, %v2928
      %v2930 = vpop.f32.mrb[0].mxu0
      %v2931 = vpop.f32.mrb[0].mxu0
      %v2932 = vadd.f32 0.0, %v2931
      %v2933 = vpop.f32.mrb[0].mxu0
      %2934 = vmatprep.mubr.bf16.mxu0 0
      %2935 = vmatmul.mubr.bf16.gmra.mrb[0].mxu0 %v2673
      %v2936 = vpop.f32.mrb[0].mxu0
      %v2937 = vadd.f32 0.0, %v2936
      %v2938 = vpop.f32.mrb[0].mxu0
      %v2939 = vpop.f32.mrb[0].mxu0
      %v2940 = vadd.f32 0.0, %v2939
      %v2941 = vpop.f32.mrb[0].mxu0
      %2942 = vmatprep.mubr.bf16.mxu0 0
      %2943 = vmatmul.mubr.bf16.gmra.mrb[0].mxu0 %v2676
      %v2944 = vpop.f32.mrb[0].mxu0
      %v2945 = vadd.f32 0.0, %v2944
      %v2946 = vpop.f32.mrb[0].mxu0
      %v2947 = vpop.f32.mrb[0].mxu0
      %v2948 = vadd.f32 0.0, %v2947
      %v2949 = vpop.f32.mrb[0].mxu0
      %2950 = vmatprep.mubr.bf16.mxu0 0
      %2951 = vmatmul.mubr.bf16.gmra.mrb[0].mxu0 %v2679
      %v2952 = vpop.f32.mrb[0].mxu0
      %v2953 = vadd.f32 0.0, %v2952
      %v2954 = vpop.f32.mrb[0].mxu0
      %v2955 = vpop.f32.mrb[0].mxu0
      %v2956 = vadd.f32 0.0, %v2955
      %v2957 = vpop.f32.mrb[0].mxu0
      %2958 = vmatprep.mubr.bf16.mxu0 0
      %2959 = vmatmul.mubr.bf16.gmra.mrb[0].mxu0 %v2682
      %v2960 = vpop.f32.mrb[0].mxu0
      %v2961 = vadd.f32 0.0, %v2960
      %v2962 = vpop.f32.mrb[0].mxu0
      %v2963 = vpop.f32.mrb[0].mxu0
      %v2964 = vadd.f32 0.0, %v2963
      %v2965 = vpop.f32.mrb[0].mxu0
      %2966 = vmatprep.mubr.bf16.mxu0 0
      %2967 = vmatmul.mubr.bf16.gmra.mrb[0].mxu0 %v2685
      %v2968 = vpop.f32.mrb[0].mxu0
      %v2969 = vadd.f32 0.0, %v2968
      %v2970 = vpop.f32.mrb[0].mxu0
      %v2971 = vpop.f32.mrb[0].mxu0
      %v2972 = vadd.f32 0.0, %v2971
      %v2973 = vpop.f32.mrb[0].mxu0
      %2974 = vmatprep.mubr.bf16.mxu0 0
      %2975 = vmatmul.mubr.bf16.gmra.mrb[0].mxu0 %v2688
      %v2976 = vpop.f32.mrb[0].mxu0
      %v2977 = vadd.f32 0.0, %v2976
      %v2978 = vpop.f32.mrb[0].mxu0
      %v2979 = vpop.f32.mrb[0].mxu0
      %v2980 = vadd.f32 0.0, %v2979
      %v2981 = vpop.f32.mrb[0].mxu0
      %2982 = vdwg.mxu0
      %v2983 = vshrl.u32 %v2282, 16
      %v2985 = vrot.slane %v2983, 7
      %v2986 = vshrl.u32 %v2284, 16
      %v2988 = vrot.slane %v2986, 7
      %v2989 = vshll.u32 %v2284, 16
      %v2991 = vor.u32 %v2988, %v2989
      %v2992 = vsel %vm2360, %v2985, %v2991
      %v2993 = vshll.u32 %v2286, 16
      %v2995 = vor.u32 %v2363, %v2993
      %v2996 = vsel %vm2360, %v2988, %v2995
      %v2999 = vunpack.c.l.b16 %v2355
      %v3000 = vunpack.c.l.b16 %v2356
      %v3001 = vpack.c.b16 %v3000, %v2999
      %v3003 = vsel %vm2593, %v2992, 0
      %v3006 = vsel %vm2593, %v2996, 0
      %v3009 = vsel %vm2690, %v3001, 0
      %3011 = vmatprep.subr.bf16.mxu0 0
      %3012 = vmatpush1.bf16.msra.mxu0 %v3009
      %3013 = vmatprep.subr.bf16.mxu0 0
      %3014 = vmatpush1.bf16.msra.mxu0 0
      %3015 = vmatprep.subr.bf16.mxu0 0
      %3016 = vmatpush1.bf16.msra.mxu0 0
      %3017 = vmatprep.subr.bf16.mxu0 0
      %3018 = vmatpush1.bf16.msra.mxu0 0
      %3019 = vmatprep.subr.bf16.mxu0 0
      %3020 = vmatpush1.bf16.msra.mxu0 0
      %3021 = vmatprep.subr.bf16.mxu0 0
      %3022 = vmatpush1.bf16.msra.mxu0 0
      %3023 = vmatprep.subr.bf16.mxu0 0
      %3024 = vmatpush1.bf16.msra.mxu0 0
      %3025 = vmatprep.subr.bf16.mxu0 0
      %3026 = vmatpush1.bf16.msra.mxu0 0
      %3027 = vmatprep.subr.bf16.mxu0 0
      %3028 = vmatpush1.bf16.msra.mxu0 0
      %3029 = vmatprep.subr.bf16.mxu0 0
      %3030 = vmatpush1.bf16.msra.mxu0 0
      %3031 = vmatprep.subr.bf16.mxu0 0
      %3032 = vmatpush1.bf16.msra.mxu0 0
      %3033 = vmatprep.subr.bf16.mxu0 0
      %3034 = vmatpush1.bf16.msra.mxu0 0
      %3035 = vmatprep.subr.bf16.mxu0 0
      %3036 = vmatpush1.bf16.msra.mxu0 0
      %3037 = vmatprep.subr.bf16.mxu0 0
      %3038 = vmatpush1.bf16.msra.mxu0 0
      %3039 = vmatprep.subr.bf16.mxu0 0
      %3040 = vmatpush1.bf16.msra.mxu0 0
      %3041 = vmatprep.subr.bf16.mxu0 0
      %3042 = vmatpush1.bf16.msra.mxu0 0
      %3043 = vmatprep.mubr.bf16.mxu0 0
      %3044 = vmatmul.mubr.bf16.gmra.mrb[0].mxu0 %v3003
      %v3045 = vpop.f32.mrb[0].mxu0
      %v3046 = vadd.f32 %v2729, %v3045
      %v3047 = vpop.f32.mrb[0].mxu0
      %v3048 = vpop.f32.mrb[0].mxu0
      %v3049 = vadd.f32 %v2732, %v3048
      %v3050 = vpop.f32.mrb[0].mxu0
      %3051 = vmatprep.mubr.bf16.mxu0 0
      %3052 = vmatmul.mubr.bf16.gmra.mrb[0].mxu0 %v3006
      %v3053 = vpop.f32.mrb[0].mxu0
      %v3054 = vadd.f32 %v2737, %v3053
      %v3055 = vpop.f32.mrb[0].mxu0
      %v3056 = vpop.f32.mrb[0].mxu0
      %v3057 = vadd.f32 %v2740, %v3056
      %v3058 = vpop.f32.mrb[0].mxu0
      %3059 = vmatprep.mubr.bf16.mxu0 0
      %3060 = vmatmul.mubr.bf16.gmra.mrb[0].mxu0 %v2595
      %v3061 = vpop.f32.mrb[0].mxu0
      %v3062 = vadd.f32 %v2745, %v3061
      %v3063 = vpop.f32.mrb[0].mxu0
      %v3064 = vpop.f32.mrb[0].mxu0
      %v3065 = vadd.f32 %v2748, %v3064
      %v3066 = vpop.f32.mrb[0].mxu0
      %3067 = vmatprep.mubr.bf16.mxu0 0
      %3068 = vmatmul.mubr.bf16.gmra.mrb[0].mxu0 %v2598
      %v3069 = vpop.f32.mrb[0].mxu0
      %v3070 = vadd.f32 %v2753, %v3069
      %v3071 = vpop.f32.mrb[0].mxu0
      %v3072 = vpop.f32.mrb[0].mxu0
      %v3073 = vadd.f32 %v2756, %v3072
      %v3074 = vpop.f32.mrb[0].mxu0
      %3075 = vmatprep.mubr.bf16.mxu0 0
      %3076 = vmatmul.mubr.bf16.gmra.mrb[0].mxu0 %v2601
      %v3077 = vpop.f32.mrb[0].mxu0
      %v3078 = vadd.f32 %v2761, %v3077
      %v3079 = vpop.f32.mrb[0].mxu0
      %v3080 = vpop.f32.mrb[0].mxu0
      %v3081 = vadd.f32 %v2764, %v3080
      %v3082 = vpop.f32.mrb[0].mxu0
      %3083 = vmatprep.mubr.bf16.mxu0 0
      %3084 = vmatmul.mubr.bf16.gmra.mrb[0].mxu0 %v2604
      %v3085 = vpop.f32.mrb[0].mxu0
      %v3086 = vadd.f32 %v2769, %v3085
      %v3087 = vpop.f32.mrb[0].mxu0
      %v3088 = vpop.f32.mrb[0].mxu0
      %v3089 = vadd.f32 %v2772, %v3088
      %v3090 = vpop.f32.mrb[0].mxu0
      %3091 = vmatprep.mubr.bf16.mxu0 0
      %3092 = vmatmul.mubr.bf16.gmra.mrb[0].mxu0 %v2607
      %v3093 = vpop.f32.mrb[0].mxu0
      %v3094 = vadd.f32 %v2777, %v3093
      %v3095 = vpop.f32.mrb[0].mxu0
      %v3096 = vpop.f32.mrb[0].mxu0
      %v3097 = vadd.f32 %v2780, %v3096
      %v3098 = vpop.f32.mrb[0].mxu0
      %3099 = vmatprep.mubr.bf16.mxu0 0
      %3100 = vmatmul.mubr.bf16.gmra.mrb[0].mxu0 %v2610
      %v3101 = vpop.f32.mrb[0].mxu0
      %v3102 = vadd.f32 %v2785, %v3101
      %v3103 = vpop.f32.mrb[0].mxu0
      %v3104 = vpop.f32.mrb[0].mxu0
      %v3105 = vadd.f32 %v2788, %v3104
      %v3106 = vpop.f32.mrb[0].mxu0
      %3107 = vmatprep.mubr.bf16.mxu0 0
      %3108 = vmatmul.mubr.bf16.gmra.mrb[0].mxu0 %v2613
      %v3109 = vpop.f32.mrb[0].mxu0
      %v3110 = vadd.f32 %v2793, %v3109
      %v3111 = vpop.f32.mrb[0].mxu0
      %v3112 = vpop.f32.mrb[0].mxu0
      %v3113 = vadd.f32 %v2796, %v3112
      %v3114 = vpop.f32.mrb[0].mxu0
      %3115 = vmatprep.mubr.bf16.mxu0 0
      %3116 = vmatmul.mubr.bf16.gmra.mrb[0].mxu0 %v2616
      %v3117 = vpop.f32.mrb[0].mxu0
      %v3118 = vadd.f32 %v2801, %v3117
      %v3119 = vpop.f32.mrb[0].mxu0
      %v3120 = vpop.f32.mrb[0].mxu0
      %v3121 = vadd.f32 %v2804, %v3120
      %v3122 = vpop.f32.mrb[0].mxu0
      %3123 = vmatprep.mubr.bf16.mxu0 0
      %3124 = vmatmul.mubr.bf16.gmra.mrb[0].mxu0 %v2619
      %v3125 = vpop.f32.mrb[0].mxu0
      %v3126 = vadd.f32 %v2809, %v3125
      %v3127 = vpop.f32.mrb[0].mxu0
      %v3128 = vpop.f32.mrb[0].mxu0
      %v3129 = vadd.f32 %v2812, %v3128
      %v3130 = vpop.f32.mrb[0].mxu0
      %3131 = vmatprep.mubr.bf16.mxu0 0
      %3132 = vmatmul.mubr.bf16.gmra.mrb[0].mxu0 %v2622
      %v3133 = vpop.f32.mrb[0].mxu0
      %v3134 = vadd.f32 %v2817, %v3133
      %v3135 = vpop.f32.mrb[0].mxu0
      %v3136 = vpop.f32.mrb[0].mxu0
      %v3137 = vadd.f32 %v2820, %v3136
      %v3138 = vpop.f32.mrb[0].mxu0
      %3139 = vmatprep.mubr.bf16.mxu0 0
      %3140 = vmatmul.mubr.bf16.gmra.mrb[0].mxu0 %v2625
      %v3141 = vpop.f32.mrb[0].mxu0
      %v3142 = vadd.f32 %v2825, %v3141
      %v3143 = vpop.f32.mrb[0].mxu0
      %v3144 = vpop.f32.mrb[0].mxu0
      %v3145 = vadd.f32 %v2828, %v3144
      %v3146 = vpop.f32.mrb[0].mxu0
      %3147 = vmatprep.mubr.bf16.mxu0 0
      %3148 = vmatmul.mubr.bf16.gmra.mrb[0].mxu0 %v2628
      %v3149 = vpop.f32.mrb[0].mxu0
      %v3150 = vadd.f32 %v2833, %v3149
      %v3151 = vpop.f32.mrb[0].mxu0
      %v3152 = vpop.f32.mrb[0].mxu0
      %v3153 = vadd.f32 %v2836, %v3152
      %v3154 = vpop.f32.mrb[0].mxu0
      %3155 = vmatprep.mubr.bf16.mxu0 0
      %3156 = vmatmul.mubr.bf16.gmra.mrb[0].mxu0 %v2631
      %v3157 = vpop.f32.mrb[0].mxu0
      %v3158 = vadd.f32 %v2841, %v3157
      %v3159 = vpop.f32.mrb[0].mxu0
      %v3160 = vpop.f32.mrb[0].mxu0
      %v3161 = vadd.f32 %v2844, %v3160
      %v3162 = vpop.f32.mrb[0].mxu0
      %3163 = vmatprep.mubr.bf16.mxu0 0
      %3164 = vmatmul.mubr.bf16.gmra.mrb[0].mxu0 %v2634
      %v3165 = vpop.f32.mrb[0].mxu0
      %v3166 = vadd.f32 %v2849, %v3165
      %v3167 = vpop.f32.mrb[0].mxu0
      %v3168 = vpop.f32.mrb[0].mxu0
      %v3169 = vadd.f32 %v2852, %v3168
      %v3170 = vpop.f32.mrb[0].mxu0
      %3171 = vmatprep.mubr.bf16.mxu0 0
      %3172 = vmatmul.mubr.bf16.gmra.mrb[0].mxu0 %v2637
      %v3173 = vpop.f32.mrb[0].mxu0
      %v3174 = vadd.f32 %v2857, %v3173
      %v3175 = vpop.f32.mrb[0].mxu0
      %v3176 = vpop.f32.mrb[0].mxu0
      %v3177 = vadd.f32 %v2860, %v3176
      %v3178 = vpop.f32.mrb[0].mxu0
      %3179 = vmatprep.mubr.bf16.mxu0 0
      %3180 = vmatmul.mubr.bf16.gmra.mrb[0].mxu0 %v2640
      %v3181 = vpop.f32.mrb[0].mxu0
      %v3182 = vadd.f32 %v2865, %v3181
      %v3183 = vpop.f32.mrb[0].mxu0
      %v3184 = vpop.f32.mrb[0].mxu0
      %v3185 = vadd.f32 %v2868, %v3184
      %v3186 = vpop.f32.mrb[0].mxu0
      %3187 = vmatprep.mubr.bf16.mxu0 0
      %3188 = vmatmul.mubr.bf16.gmra.mrb[0].mxu0 %v2643
      %v3189 = vpop.f32.mrb[0].mxu0
      %v3190 = vadd.f32 %v2873, %v3189
      %v3191 = vpop.f32.mrb[0].mxu0
      %v3192 = vpop.f32.mrb[0].mxu0
      %v3193 = vadd.f32 %v2876, %v3192
      %v3194 = vpop.f32.mrb[0].mxu0
      %3195 = vmatprep.mubr.bf16.mxu0 0
      %3196 = vmatmul.mubr.bf16.gmra.mrb[0].mxu0 %v2646
      %v3197 = vpop.f32.mrb[0].mxu0
      %v3198 = vadd.f32 %v2881, %v3197
      %v3199 = vpop.f32.mrb[0].mxu0
      %v3200 = vpop.f32.mrb[0].mxu0
      %v3201 = vadd.f32 %v2884, %v3200
      %v3202 = vpop.f32.mrb[0].mxu0
      %3203 = vmatprep.mubr.bf16.mxu0 0
      %3204 = vmatmul.mubr.bf16.gmra.mrb[0].mxu0 %v2649
      %v3205 = vpop.f32.mrb[0].mxu0
      %v3206 = vadd.f32 %v2889, %v3205
      %v3207 = vpop.f32.mrb[0].mxu0
      %v3208 = vpop.f32.mrb[0].mxu0
      %v3209 = vadd.f32 %v2892, %v3208
      %v3210 = vpop.f32.mrb[0].mxu0
      %3211 = vmatprep.mubr.bf16.mxu0 0
      %3212 = vmatmul.mubr.bf16.gmra.mrb[0].mxu0 %v2652
      %v3213 = vpop.f32.mrb[0].mxu0
      %v3214 = vadd.f32 %v2897, %v3213
      %v3215 = vpop.f32.mrb[0].mxu0
      %v3216 = vpop.f32.mrb[0].mxu0
      %v3217 = vadd.f32 %v2900, %v3216
      %v3218 = vpop.f32.mrb[0].mxu0
      %3219 = vmatprep.mubr.bf16.mxu0 0
      %3220 = vmatmul.mubr.bf16.gmra.mrb[0].mxu0 %v2655
      %v3221 = vpop.f32.mrb[0].mxu0
      %v3222 = vadd.f32 %v2905, %v3221
      %v3223 = vpop.f32.mrb[0].mxu0
      %v3224 = vpop.f32.mrb[0].mxu0
      %v3225 = vadd.f32 %v2908, %v3224
      %v3226 = vpop.f32.mrb[0].mxu0
      %3227 = vmatprep.mubr.bf16.mxu0 0
      %3228 = vmatmul.mubr.bf16.gmra.mrb[0].mxu0 %v2658
      %v3229 = vpop.f32.mrb[0].mxu0
      %v3230 = vadd.f32 %v2913, %v3229
      %v3231 = vpop.f32.mrb[0].mxu0
      %v3232 = vpop.f32.mrb[0].mxu0
      %v3233 = vadd.f32 %v2916, %v3232
      %v3234 = vpop.f32.mrb[0].mxu0
      %3235 = vmatprep.mubr.bf16.mxu0 0
      %3236 = vmatmul.mubr.bf16.gmra.mrb[0].mxu0 %v2661
      %v3237 = vpop.f32.mrb[0].mxu0
      %v3238 = vadd.f32 %v2921, %v3237
      %v3239 = vpop.f32.mrb[0].mxu0
      %v3240 = vpop.f32.mrb[0].mxu0
      %v3241 = vadd.f32 %v2924, %v3240
      %v3242 = vpop.f32.mrb[0].mxu0
      %3243 = vmatprep.mubr.bf16.mxu0 0
      %3244 = vmatmul.mubr.bf16.gmra.mrb[0].mxu0 %v2664
      %v3245 = vpop.f32.mrb[0].mxu0
      %v3246 = vadd.f32 %v2929, %v3245
      %v3247 = vpop.f32.mrb[0].mxu0
      %v3248 = vpop.f32.mrb[0].mxu0
      %v3249 = vadd.f32 %v2932, %v3248
      %v3250 = vpop.f32.mrb[0].mxu0
      %3251 = vmatprep.mubr.bf16.mxu0 0
      %3252 = vmatmul.mubr.bf16.gmra.mrb[0].mxu0 %v2667
      %v3253 = vpop.f32.mrb[0].mxu0
      %v3254 = vadd.f32 %v2937, %v3253
      %v3255 = vpop.f32.mrb[0].mxu0
      %v3256 = vpop.f32.mrb[0].mxu0
      %v3257 = vadd.f32 %v2940, %v3256
      %v3258 = vpop.f32.mrb[0].mxu0
      %3259 = vmatprep.mubr.bf16.mxu0 0
      %3260 = vmatmul.mubr.bf16.gmra.mrb[0].mxu0 %v2670
      %v3261 = vpop.f32.mrb[0].mxu0
      %v3262 = vadd.f32 %v2945, %v3261
      %v3263 = vpop.f32.mrb[0].mxu0
      %v3264 = vpop.f32.mrb[0].mxu0
      %v3265 = vadd.f32 %v2948, %v3264
      %v3266 = vpop.f32.mrb[0].mxu0
      %3267 = vmatprep.mubr.bf16.mxu0 0
      %3268 = vmatmul.mubr.bf16.gmra.mrb[0].mxu0 %v2673
      %v3269 = vpop.f32.mrb[0].mxu0
      %v3270 = vadd.f32 %v2953, %v3269
      %v3271 = vpop.f32.mrb[0].mxu0
      %v3272 = vpop.f32.mrb[0].mxu0
      %v3273 = vadd.f32 %v2956, %v3272
      %v3274 = vpop.f32.mrb[0].mxu0
      %3275 = vmatprep.mubr.bf16.mxu0 0
      %3276 = vmatmul.mubr.bf16.gmra.mrb[0].mxu0 %v2676
      %v3277 = vpop.f32.mrb[0].mxu0
      %v3278 = vadd.f32 %v2961, %v3277
      %v3279 = vpop.f32.mrb[0].mxu0
      %v3280 = vpop.f32.mrb[0].mxu0
      %v3281 = vadd.f32 %v2964, %v3280
      %v3282 = vpop.f32.mrb[0].mxu0
      %3283 = vmatprep.mubr.bf16.mxu0 0
      %3284 = vmatmul.mubr.bf16.gmra.mrb[0].mxu0 %v2679
      %v3285 = vpop.f32.mrb[0].mxu0
      %v3286 = vadd.f32 %v2969, %v3285
      %v3287 = vpop.f32.mrb[0].mxu0
      %v3288 = vpop.f32.mrb[0].mxu0
      %v3289 = vadd.f32 %v2972, %v3288
      %v3290 = vpop.f32.mrb[0].mxu0
      %3291 = vmatprep.mubr.bf16.mxu0 0
      %3292 = vmatmul.mubr.bf16.gmra.mrb[0].mxu0 %v2682
      %v3293 = vpop.f32.mrb[0].mxu0
      %v3294 = vadd.f32 %v2977, %v3293
      %v3295 = vpop.f32.mrb[0].mxu0
      %v3296 = vpop.f32.mrb[0].mxu0
      %v3297 = vadd.f32 %v2980, %v3296
      %v3298 = vpop.f32.mrb[0].mxu0
      %3299 = vdwg.mxu0
      %s3300 = scalar_lea.vmem %s2, 16
      %v3301 = vld [vmem:[%s3300] sm:$0xf]
      %v3302 = vld [vmem:[%s3300 + $0x4] sm:$0x3]
      %v3303 = vshrl.u32 %v2352, 16
      %v3305 = vrot.slane %v3303, 7
      %v3306 = vshll.u32 %v2352, 16
      %v3308 = vor.u32 %v3305, %v3306
      %v3309 = vsel %vm2360, %v2583, %v3308
      %v3310 = vshrl.u32 %v2354, 16
      %v3312 = vrot.slane %v3310, 7
      %v3313 = vshll.u32 %v2354, 16
      %v3315 = vor.u32 %v3312, %v3313
      %v3316 = vsel %vm2360, %v3305, %v3315
      %v3319 = vunpack.c.l.b16 %v3301
      %v3320 = vunpack.c.l.b16 %v3302
      %v3321 = vpack.c.b16 %v3320, %v3319
      %v3323 = vsel %vm2593, %v3309, 0
      %v3326 = vsel %vm2593, %v3316, 0
      %v3329 = vsel %vm2690, %v3321, 0
      %3331 = vmatprep.subr.bf16.mxu0 0
      %3332 = vmatpush1.bf16.msra.mxu0 %v3329
      %3333 = vmatprep.subr.bf16.mxu0 0
      %3334 = vmatpush1.bf16.msra.mxu0 0
      %3335 = vmatprep.subr.bf16.mxu0 0
      %3336 = vmatpush1.bf16.msra.mxu0 0
      %3337 = vmatprep.subr.bf16.mxu0 0
      %3338 = vmatpush1.bf16.msra.mxu0 0
      %3339 = vmatprep.subr.bf16.mxu0 0
      %3340 = vmatpush1.bf16.msra.mxu0 0
      %3341 = vmatprep.subr.bf16.mxu0 0
      %3342 = vmatpush1.bf16.msra.mxu0 0
      %3343 = vmatprep.subr.bf16.mxu0 0
      %3344 = vmatpush1.bf16.msra.mxu0 0
      %3345 = vmatprep.subr.bf16.mxu0 0
      %3346 = vmatpush1.bf16.msra.mxu0 0
      %3347 = vmatprep.subr.bf16.mxu0 0
      %3348 = vmatpush1.bf16.msra.mxu0 0
      %3349 = vmatprep.subr.bf16.mxu0 0
      %3350 = vmatpush1.bf16.msra.mxu0 0
      %3351 = vmatprep.subr.bf16.mxu0 0
      %3352 = vmatpush1.bf16.msra.mxu0 0
      %3353 = vmatprep.subr.bf16.mxu0 0
      %3354 = vmatpush1.bf16.msra.mxu0 0
      %3355 = vmatprep.subr.bf16.mxu0 0
      %3356 = vmatpush1.bf16.msra.mxu0 0
      %3357 = vmatprep.subr.bf16.mxu0 0
      %3358 = vmatpush1.bf16.msra.mxu0 0
      %3359 = vmatprep.subr.bf16.mxu0 0
      %3360 = vmatpush1.bf16.msra.mxu0 0
      %3361 = vmatprep.subr.bf16.mxu0 0
      %3362 = vmatpush1.bf16.msra.mxu0 0
      %3363 = vmatprep.mubr.bf16.mxu0 0
      %3364 = vmatmul.mubr.bf16.gmra.mrb[0].mxu0 %v2601
      %v3365 = vpop.f32.mrb[0].mxu0
      %v3366 = vadd.f32 0.0, %v3365
      %v3367 = vpop.f32.mrb[0].mxu0
      %v3368 = vpop.f32.mrb[0].mxu0
      %v3369 = vadd.f32 0.0, %v3368
      %v3370 = vpop.f32.mrb[0].mxu0
      %3371 = vmatprep.mubr.bf16.mxu0 0
      %3372 = vmatmul.mubr.bf16.gmra.mrb[0].mxu0 %v2604
      %v3373 = vpop.f32.mrb[0].mxu0
      %v3374 = vadd.f32 0.0, %v3373
      %v3375 = vpop.f32.mrb[0].mxu0
      %v3376 = vpop.f32.mrb[0].mxu0
      %v3377 = vadd.f32 0.0, %v3376
      %v3378 = vpop.f32.mrb[0].mxu0
      %3379 = vmatprep.mubr.bf16.mxu0 0
      %3380 = vmatmul.mubr.bf16.gmra.mrb[0].mxu0 %v2607
      %v3381 = vpop.f32.mrb[0].mxu0
      %v3382 = vadd.f32 0.0, %v3381
      %v3383 = vpop.f32.mrb[0].mxu0
      %v3384 = vpop.f32.mrb[0].mxu0
      %v3385 = vadd.f32 0.0, %v3384
      %v3386 = vpop.f32.mrb[0].mxu0
      %3387 = vmatprep.mubr.bf16.mxu0 0
      %3388 = vmatmul.mubr.bf16.gmra.mrb[0].mxu0 %v2610
      %v3389 = vpop.f32.mrb[0].mxu0
      %v3390 = vadd.f32 0.0, %v3389
      %v3391 = vpop.f32.mrb[0].mxu0
      %v3392 = vpop.f32.mrb[0].mxu0
      %v3393 = vadd.f32 0.0, %v3392
      %v3394 = vpop.f32.mrb[0].mxu0
      %3395 = vmatprep.mubr.bf16.mxu0 0
      %3396 = vmatmul.mubr.bf16.gmra.mrb[0].mxu0 %v2613
      %v3397 = vpop.f32.mrb[0].mxu0
      %v3398 = vadd.f32 0.0, %v3397
      %v3399 = vpop.f32.mrb[0].mxu0
      %v3400 = vpop.f32.mrb[0].mxu0
      %v3401 = vadd.f32 0.0, %v3400
      %v3402 = vpop.f32.mrb[0].mxu0
      %3403 = vmatprep.mubr.bf16.mxu0 0
      %3404 = vmatmul.mubr.bf16.gmra.mrb[0].mxu0 %v2616
      %v3405 = vpop.f32.mrb[0].mxu0
      %v3406 = vadd.f32 0.0, %v3405
      %v3407 = vpop.f32.mrb[0].mxu0
      %v3408 = vpop.f32.mrb[0].mxu0
      %v3409 = vadd.f32 0.0, %v3408
      %v3410 = vpop.f32.mrb[0].mxu0
      %3411 = vmatprep.mubr.bf16.mxu0 0
      %3412 = vmatmul.mubr.bf16.gmra.mrb[0].mxu0 %v2619
      %v3413 = vpop.f32.mrb[0].mxu0
      %v3414 = vadd.f32 0.0, %v3413
      %v3415 = vpop.f32.mrb[0].mxu0
      %v3416 = vpop.f32.mrb[0].mxu0
      %v3417 = vadd.f32 0.0, %v3416
      %v3418 = vpop.f32.mrb[0].mxu0
      %3419 = vmatprep.mubr.bf16.mxu0 0
      %3420 = vmatmul.mubr.bf16.gmra.mrb[0].mxu0 %v2622
      %v3421 = vpop.f32.mrb[0].mxu0
      %v3422 = vadd.f32 0.0, %v3421
      %v3423 = vpop.f32.mrb[0].mxu0
      %v3424 = vpop.f32.mrb[0].mxu0
      %v3425 = vadd.f32 0.0, %v3424
      %v3426 = vpop.f32.mrb[0].mxu0
      %3427 = vmatprep.mubr.bf16.mxu0 0
      %3428 = vmatmul.mubr.bf16.gmra.mrb[0].mxu0 %v2625
      %v3429 = vpop.f32.mrb[0].mxu0
      %v3430 = vadd.f32 0.0, %v3429
      %v3431 = vpop.f32.mrb[0].mxu0
      %v3432 = vpop.f32.mrb[0].mxu0
      %v3433 = vadd.f32 0.0, %v3432
      %v3434 = vpop.f32.mrb[0].mxu0
      %3435 = vmatprep.mubr.bf16.mxu0 0
      %3436 = vmatmul.mubr.bf16.gmra.mrb[0].mxu0 %v2628
      %v3437 = vpop.f32.mrb[0].mxu0
      %v3438 = vadd.f32 0.0, %v3437
      %v3439 = vpop.f32.mrb[0].mxu0
      %v3440 = vpop.f32.mrb[0].mxu0
      %v3441 = vadd.f32 0.0, %v3440
      %v3442 = vpop.f32.mrb[0].mxu0
      %3443 = vmatprep.mubr.bf16.mxu0 0
      %3444 = vmatmul.mubr.bf16.gmra.mrb[0].mxu0 %v2631
      %v3445 = vpop.f32.mrb[0].mxu0
      %v3446 = vadd.f32 0.0, %v3445
      %v3447 = vpop.f32.mrb[0].mxu0
      %v3448 = vpop.f32.mrb[0].mxu0
      %v3449 = vadd.f32 0.0, %v3448
      %v3450 = vpop.f32.mrb[0].mxu0
      %3451 = vmatprep.mubr.bf16.mxu0 0
      %3452 = vmatmul.mubr.bf16.gmra.mrb[0].mxu0 %v2634
      %v3453 = vpop.f32.mrb[0].mxu0
      %v3454 = vadd.f32 0.0, %v3453
      %v3455 = vpop.f32.mrb[0].mxu0
      %v3456 = vpop.f32.mrb[0].mxu0
      %v3457 = vadd.f32 0.0, %v3456
      %v3458 = vpop.f32.mrb[0].mxu0
      %3459 = vmatprep.mubr.bf16.mxu0 0
      %3460 = vmatmul.mubr.bf16.gmra.mrb[0].mxu0 %v2637
      %v3461 = vpop.f32.mrb[0].mxu0
      %v3462 = vadd.f32 0.0, %v3461
      %v3463 = vpop.f32.mrb[0].mxu0
      %v3464 = vpop.f32.mrb[0].mxu0
      %v3465 = vadd.f32 0.0, %v3464
      %v3466 = vpop.f32.mrb[0].mxu0
      %3467 = vmatprep.mubr.bf16.mxu0 0
      %3468 = vmatmul.mubr.bf16.gmra.mrb[0].mxu0 %v2640
      %v3469 = vpop.f32.mrb[0].mxu0
      %v3470 = vadd.f32 0.0, %v3469
      %v3471 = vpop.f32.mrb[0].mxu0
      %v3472 = vpop.f32.mrb[0].mxu0
      %v3473 = vadd.f32 0.0, %v3472
      %v3474 = vpop.f32.mrb[0].mxu0
      %3475 = vmatprep.mubr.bf16.mxu0 0
      %3476 = vmatmul.mubr.bf16.gmra.mrb[0].mxu0 %v2643
      %v3477 = vpop.f32.mrb[0].mxu0
      %v3478 = vadd.f32 0.0, %v3477
      %v3479 = vpop.f32.mrb[0].mxu0
      %v3480 = vpop.f32.mrb[0].mxu0
      %v3481 = vadd.f32 0.0, %v3480
      %v3482 = vpop.f32.mrb[0].mxu0
      %3483 = vmatprep.mubr.bf16.mxu0 0
      %3484 = vmatmul.mubr.bf16.gmra.mrb[0].mxu0 %v2646
      %v3485 = vpop.f32.mrb[0].mxu0
      %v3486 = vadd.f32 0.0, %v3485
      %v3487 = vpop.f32.mrb[0].mxu0
      %v3488 = vpop.f32.mrb[0].mxu0
      %v3489 = vadd.f32 0.0, %v3488
      %v3490 = vpop.f32.mrb[0].mxu0
      %3491 = vmatprep.mubr.bf16.mxu0 0
      %3492 = vmatmul.mubr.bf16.gmra.mrb[0].mxu0 %v2649
      %v3493 = vpop.f32.mrb[0].mxu0
      %v3494 = vadd.f32 0.0, %v3493
      %v3495 = vpop.f32.mrb[0].mxu0
      %v3496 = vpop.f32.mrb[0].mxu0
      %v3497 = vadd.f32 0.0, %v3496
      %v3498 = vpop.f32.mrb[0].mxu0
      %3499 = vmatprep.mubr.bf16.mxu0 0
      %3500 = vmatmul.mubr.bf16.gmra.mrb[0].mxu0 %v2652
      %v3501 = vpop.f32.mrb[0].mxu0
      %v3502 = vadd.f32 0.0, %v3501
      %v3503 = vpop.f32.mrb[0].mxu0
      %v3504 = vpop.f32.mrb[0].mxu0
      %v3505 = vadd.f32 0.0, %v3504
      %v3506 = vpop.f32.mrb[0].mxu0
      %3507 = vmatprep.mubr.bf16.mxu0 0
      %3508 = vmatmul.mubr.bf16.gmra.mrb[0].mxu0 %v2655
      %v3509 = vpop.f32.mrb[0].mxu0
      %v3510 = vadd.f32 0.0, %v3509
      %v3511 = vpop.f32.mrb[0].mxu0
      %v3512 = vpop.f32.mrb[0].mxu0
      %v3513 = vadd.f32 0.0, %v3512
      %v3514 = vpop.f32.mrb[0].mxu0
      %3515 = vmatprep.mubr.bf16.mxu0 0
      %3516 = vmatmul.mubr.bf16.gmra.mrb[0].mxu0 %v2658
      %v3517 = vpop.f32.mrb[0].mxu0
      %v3518 = vadd.f32 0.0, %v3517
      %v3519 = vpop.f32.mrb[0].mxu0
      %v3520 = vpop.f32.mrb[0].mxu0
      %v3521 = vadd.f32 0.0, %v3520
      %v3522 = vpop.f32.mrb[0].mxu0
      %3523 = vmatprep.mubr.bf16.mxu0 0
      %3524 = vmatmul.mubr.bf16.gmra.mrb[0].mxu0 %v2661
      %v3525 = vpop.f32.mrb[0].mxu0
      %v3526 = vadd.f32 0.0, %v3525
      %v3527 = vpop.f32.mrb[0].mxu0
      %v3528 = vpop.f32.mrb[0].mxu0
      %v3529 = vadd.f32 0.0, %v3528
      %v3530 = vpop.f32.mrb[0].mxu0
      %3531 = vmatprep.mubr.bf16.mxu0 0
      %3532 = vmatmul.mubr.bf16.gmra.mrb[0].mxu0 %v2664
      %v3533 = vpop.f32.mrb[0].mxu0
      %v3534 = vadd.f32 0.0, %v3533
      %v3535 = vpop.f32.mrb[0].mxu0
      %v3536 = vpop.f32.mrb[0].mxu0
      %v3537 = vadd.f32 0.0, %v3536
      %v3538 = vpop.f32.mrb[0].mxu0
      %3539 = vmatprep.mubr.bf16.mxu0 0
      %3540 = vmatmul.mubr.bf16.gmra.mrb[0].mxu0 %v2667
      %v3541 = vpop.f32.mrb[0].mxu0
      %v3542 = vadd.f32 0.0, %v3541
      %v3543 = vpop.f32.mrb[0].mxu0
      %v3544 = vpop.f32.mrb[0].mxu0
      %v3545 = vadd.f32 0.0, %v3544
      %v3546 = vpop.f32.mrb[0].mxu0
      %3547 = vmatprep.mubr.bf16.mxu0 0
      %3548 = vmatmul.mubr.bf16.gmra.mrb[0].mxu0 %v2670
      %v3549 = vpop.f32.mrb[0].mxu0
      %v3550 = vadd.f32 0.0, %v3549
      %v3551 = vpop.f32.mrb[0].mxu0
      %v3552 = vpop.f32.mrb[0].mxu0
      %v3553 = vadd.f32 0.0, %v3552
      %v3554 = vpop.f32.mrb[0].mxu0
      %3555 = vmatprep.mubr.bf16.mxu0 0
      %3556 = vmatmul.mubr.bf16.gmra.mrb[0].mxu0 %v2673
      %v3557 = vpop.f32.mrb[0].mxu0
      %v3558 = vadd.f32 0.0, %v3557
      %v3559 = vpop.f32.mrb[0].mxu0
      %v3560 = vpop.f32.mrb[0].mxu0
      %v3561 = vadd.f32 0.0, %v3560
      %v3562 = vpop.f32.mrb[0].mxu0
      %3563 = vmatprep.mubr.bf16.mxu0 0
      %3564 = vmatmul.mubr.bf16.gmra.mrb[0].mxu0 %v2676
      %v3565 = vpop.f32.mrb[0].mxu0
      %v3566 = vadd.f32 0.0, %v3565
      %v3567 = vpop.f32.mrb[0].mxu0
      %v3568 = vpop.f32.mrb[0].mxu0
      %v3569 = vadd.f32 0.0, %v3568
      %v3570 = vpop.f32.mrb[0].mxu0
      %3571 = vmatprep.mubr.bf16.mxu0 0
      %3572 = vmatmul.mubr.bf16.gmra.mrb[0].mxu0 %v2679
      %v3573 = vpop.f32.mrb[0].mxu0
      %v3574 = vadd.f32 0.0, %v3573
      %v3575 = vpop.f32.mrb[0].mxu0
      %v3576 = vpop.f32.mrb[0].mxu0
      %v3577 = vadd.f32 0.0, %v3576
      %v3578 = vpop.f32.mrb[0].mxu0
      %3579 = vmatprep.mubr.bf16.mxu0 0
      %3580 = vmatmul.mubr.bf16.gmra.mrb[0].mxu0 %v2682
      %v3581 = vpop.f32.mrb[0].mxu0
      %v3582 = vadd.f32 0.0, %v3581
      %v3583 = vpop.f32.mrb[0].mxu0
      %v3584 = vpop.f32.mrb[0].mxu0
      %v3585 = vadd.f32 0.0, %v3584
      %v3586 = vpop.f32.mrb[0].mxu0
      %3587 = vmatprep.mubr.bf16.mxu0 0
      %3588 = vmatmul.mubr.bf16.gmra.mrb[0].mxu0 %v2685
      %v3589 = vpop.f32.mrb[0].mxu0
      %v3590 = vadd.f32 0.0, %v3589
      %v3591 = vpop.f32.mrb[0].mxu0
      %v3592 = vpop.f32.mrb[0].mxu0
      %v3593 = vadd.f32 0.0, %v3592
      %v3594 = vpop.f32.mrb[0].mxu0
      %3595 = vmatprep.mubr.bf16.mxu0 0
      %3596 = vmatmul.mubr.bf16.gmra.mrb[0].mxu0 %v2688
      %v3597 = vpop.f32.mrb[0].mxu0
      %v3598 = vadd.f32 0.0, %v3597
      %v3599 = vpop.f32.mrb[0].mxu0
      %v3600 = vpop.f32.mrb[0].mxu0
      %v3601 = vadd.f32 0.0, %v3600
      %v3602 = vpop.f32.mrb[0].mxu0
      %3603 = vmatprep.mubr.bf16.mxu0 0
      %3604 = vmatmul.mubr.bf16.gmra.mrb[0].mxu0 %v3323
      %v3605 = vpop.f32.mrb[0].mxu0
      %v3606 = vadd.f32 0.0, %v3605
      %v3607 = vpop.f32.mrb[0].mxu0
      %v3608 = vpop.f32.mrb[0].mxu0
      %v3609 = vadd.f32 0.0, %v3608
      %v3610 = vpop.f32.mrb[0].mxu0
      %3611 = vmatprep.mubr.bf16.mxu0 0
      %3612 = vmatmul.mubr.bf16.gmra.mrb[0].mxu0 %v3326
      %v3613 = vpop.f32.mrb[0].mxu0
      %v3614 = vadd.f32 0.0, %v3613
      %v3615 = vpop.f32.mrb[0].mxu0
      %v3616 = vpop.f32.mrb[0].mxu0
      %v3617 = vadd.f32 0.0, %v3616
      %v3618 = vpop.f32.mrb[0].mxu0
      %3619 = vdwg.mxu0
      %v3620 = vadd.f32 %v3046, %v3366
      %v3621 = vadd.f32 %v3049, %v3369
      %v3622 = vadd.f32 %v3054, %v3374
      %v3623 = vadd.f32 %v3057, %v3377
      %v3624 = vadd.f32 %v3062, %v3382
      %v3625 = vadd.f32 %v3065, %v3385
      %v3626 = vadd.f32 %v3070, %v3390
      %v3627 = vadd.f32 %v3073, %v3393
      %v3628 = vadd.f32 %v3078, %v3398
      %v3629 = vadd.f32 %v3081, %v3401
      %v3630 = vadd.f32 %v3086, %v3406
      %v3631 = vadd.f32 %v3089, %v3409
      %v3632 = vadd.f32 %v3094, %v3414
      %v3633 = vadd.f32 %v3097, %v3417
      %v3634 = vadd.f32 %v3102, %v3422
      %v3635 = vadd.f32 %v3105, %v3425
      %v3636 = vadd.f32 %v3110, %v3430
      %v3637 = vadd.f32 %v3113, %v3433
      %v3638 = vadd.f32 %v3118, %v3438
      %v3639 = vadd.f32 %v3121, %v3441
      %v3640 = vadd.f32 %v3126, %v3446
      %v3641 = vadd.f32 %v3129, %v3449
      %v3642 = vadd.f32 %v3134, %v3454
      %v3643 = vadd.f32 %v3137, %v3457
      %v3644 = vadd.f32 %v3142, %v3462
      %v3645 = vadd.f32 %v3145, %v3465
      %v3646 = vadd.f32 %v3150, %v3470
      %v3647 = vadd.f32 %v3153, %v3473
      %v3648 = vadd.f32 %v3158, %v3478
      %v3649 = vadd.f32 %v3161, %v3481
      %v3650 = vadd.f32 %v3166, %v3486
      %v3651 = vadd.f32 %v3169, %v3489
      %v3652 = vadd.f32 %v3174, %v3494
      %v3653 = vadd.f32 %v3177, %v3497
      %v3654 = vadd.f32 %v3182, %v3502
      %v3655 = vadd.f32 %v3185, %v3505
      %v3656 = vadd.f32 %v3190, %v3510
      %v3657 = vadd.f32 %v3193, %v3513
      %v3658 = vadd.f32 %v3198, %v3518
      %v3659 = vadd.f32 %v3201, %v3521
      %v3660 = vadd.f32 %v3206, %v3526
      %v3661 = vadd.f32 %v3209, %v3529
      %v3662 = vadd.f32 %v3214, %v3534
      %v3663 = vadd.f32 %v3217, %v3537
      %v3664 = vadd.f32 %v3222, %v3542
      %v3665 = vadd.f32 %v3225, %v3545
      %v3666 = vadd.f32 %v3230, %v3550
      %v3667 = vadd.f32 %v3233, %v3553
      %v3668 = vadd.f32 %v3238, %v3558
      %v3669 = vadd.f32 %v3241, %v3561
      %v3670 = vadd.f32 %v3246, %v3566
      %v3671 = vadd.f32 %v3249, %v3569
      %v3672 = vadd.f32 %v3254, %v3574
      %v3673 = vadd.f32 %v3257, %v3577
      %v3674 = vadd.f32 %v3262, %v3582
      %v3675 = vadd.f32 %v3265, %v3585
      %v3676 = vadd.f32 %v3270, %v3590
      %v3677 = vadd.f32 %v3273, %v3593
      %v3678 = vadd.f32 %v3278, %v3598
      %v3679 = vadd.f32 %v3281, %v3601
      %v3680 = vadd.f32 %v3286, %v3606
      %v3681 = vadd.f32 %v3289, %v3609
      %v3682 = vadd.f32 %v3294, %v3614
      %v3683 = vadd.f32 %v3297, %v3617
      %v3684 = vld [vmem:[%s5] sm:$0x1]
      %v3686 = vlaneseq
      %v3687 = vshrl.u32 %v3686, 7
      %v3688 = vsub.s32 0, %v3687
      %v3689 = vrot.slane %v3684, %v3688
      %v3691 = vadd.f32 %v3620, %v3689
      %v3692 = vadd.f32 %v3621, %v3689
      %v3693 = vadd.f32 %v3622, %v3689
      %v3694 = vadd.f32 %v3623, %v3689
      %v3695 = vadd.f32 %v3624, %v3689
      %v3696 = vadd.f32 %v3625, %v3689
      %v3697 = vadd.f32 %v3626, %v3689
      %v3698 = vadd.f32 %v3627, %v3689
      %v3699 = vadd.f32 %v3628, %v3689
      %v3700 = vadd.f32 %v3629, %v3689
      %v3701 = vadd.f32 %v3630, %v3689
      %v3702 = vadd.f32 %v3631, %v3689
      %v3703 = vadd.f32 %v3632, %v3689
      %v3704 = vadd.f32 %v3633, %v3689
      %v3705 = vadd.f32 %v3634, %v3689
      %v3706 = vadd.f32 %v3635, %v3689
      %v3707 = vadd.f32 %v3636, %v3689
      %v3708 = vadd.f32 %v3637, %v3689
      %v3709 = vadd.f32 %v3638, %v3689
      %v3710 = vadd.f32 %v3639, %v3689
      %v3711 = vadd.f32 %v3640, %v3689
      %v3712 = vadd.f32 %v3641, %v3689
      %v3713 = vadd.f32 %v3642, %v3689
      %v3714 = vadd.f32 %v3643, %v3689
      %v3715 = vadd.f32 %v3644, %v3689
      %v3716 = vadd.f32 %v3645, %v3689
      %v3717 = vadd.f32 %v3646, %v3689
      %v3718 = vadd.f32 %v3647, %v3689
      %v3719 = vadd.f32 %v3648, %v3689
      %v3720 = vadd.f32 %v3649, %v3689
      %v3721 = vadd.f32 %v3650, %v3689
      %v3722 = vadd.f32 %v3651, %v3689
      %v3723 = vadd.f32 %v3652, %v3689
      %v3724 = vadd.f32 %v3653, %v3689
      %v3725 = vadd.f32 %v3654, %v3689
      %v3726 = vadd.f32 %v3655, %v3689
      %v3727 = vadd.f32 %v3656, %v3689
      %v3728 = vadd.f32 %v3657, %v3689
      %v3729 = vadd.f32 %v3658, %v3689
      %v3730 = vadd.f32 %v3659, %v3689
      %v3731 = vadd.f32 %v3660, %v3689
      %v3732 = vadd.f32 %v3661, %v3689
      %v3733 = vadd.f32 %v3662, %v3689
      %v3734 = vadd.f32 %v3663, %v3689
      %v3735 = vadd.f32 %v3664, %v3689
      %v3736 = vadd.f32 %v3665, %v3689
      %v3737 = vadd.f32 %v3666, %v3689
      %v3738 = vadd.f32 %v3667, %v3689
      %v3739 = vadd.f32 %v3668, %v3689
      %v3740 = vadd.f32 %v3669, %v3689
      %v3741 = vadd.f32 %v3670, %v3689
      %v3742 = vadd.f32 %v3671, %v3689
      %v3743 = vadd.f32 %v3672, %v3689
      %v3744 = vadd.f32 %v3673, %v3689
      %v3745 = vadd.f32 %v3674, %v3689
      %v3746 = vadd.f32 %v3675, %v3689
      %v3747 = vadd.f32 %v3676, %v3689
      %v3748 = vadd.f32 %v3677, %v3689
      %v3749 = vadd.f32 %v3678, %v3689
      %v3750 = vadd.f32 %v3679, %v3689
      %v3751 = vadd.f32 %v3680, %v3689
      %v3752 = vadd.f32 %v3681, %v3689
      %v3753 = vadd.f32 %v3682, %v3689
      %v3754 = vadd.f32 %v3683, %v3689
      %v3755 = vmax.f32 %v3691, 0.0
      %v3756 = vmax.f32 %v3692, 0.0
      %v3757 = vmax.f32 %v3693, 0.0
      %v3758 = vmax.f32 %v3694, 0.0
      %v3759 = vmax.f32 %v3695, 0.0
      %v3760 = vmax.f32 %v3696, 0.0
      %v3761 = vmax.f32 %v3697, 0.0
      %v3762 = vmax.f32 %v3698, 0.0
      %v3763 = vmax.f32 %v3699, 0.0
      %v3764 = vmax.f32 %v3700, 0.0
      %v3765 = vmax.f32 %v3701, 0.0
      %v3766 = vmax.f32 %v3702, 0.0
      %v3767 = vmax.f32 %v3703, 0.0
      %v3768 = vmax.f32 %v3704, 0.0
      %v3769 = vmax.f32 %v3705, 0.0
      %v3770 = vmax.f32 %v3706, 0.0
      %v3771 = vmax.f32 %v3707, 0.0
      %v3772 = vmax.f32 %v3708, 0.0
      %v3773 = vmax.f32 %v3709, 0.0
      %v3774 = vmax.f32 %v3710, 0.0
      %v3775 = vmax.f32 %v3711, 0.0
      %v3776 = vmax.f32 %v3712, 0.0
      %v3777 = vmax.f32 %v3713, 0.0
      %v3778 = vmax.f32 %v3714, 0.0
      %v3779 = vmax.f32 %v3715, 0.0
      %v3780 = vmax.f32 %v3716, 0.0
      %v3781 = vmax.f32 %v3717, 0.0
      %v3782 = vmax.f32 %v3718, 0.0
      %v3783 = vmax.f32 %v3719, 0.0
      %v3784 = vmax.f32 %v3720, 0.0
      %v3785 = vmax.f32 %v3721, 0.0
      %v3786 = vmax.f32 %v3722, 0.0
      %v3787 = vmax.f32 %v3723, 0.0
      %v3788 = vmax.f32 %v3724, 0.0
      %v3789 = vmax.f32 %v3725, 0.0
      %v3790 = vmax.f32 %v3726, 0.0
      %v3791 = vmax.f32 %v3727, 0.0
      %v3792 = vmax.f32 %v3728, 0.0
      %v3793 = vmax.f32 %v3729, 0.0
      %v3794 = vmax.f32 %v3730, 0.0
      %v3795 = vmax.f32 %v3731, 0.0
      %v3796 = vmax.f32 %v3732, 0.0
      %v3797 = vmax.f32 %v3733, 0.0
      %v3798 = vmax.f32 %v3734, 0.0
      %v3799 = vmax.f32 %v3735, 0.0
      %v3800 = vmax.f32 %v3736, 0.0
      %v3801 = vmax.f32 %v3737, 0.0
      %v3802 = vmax.f32 %v3738, 0.0
      %v3803 = vmax.f32 %v3739, 0.0
      %v3804 = vmax.f32 %v3740, 0.0
      %v3805 = vmax.f32 %v3741, 0.0
      %v3806 = vmax.f32 %v3742, 0.0
      %v3807 = vmax.f32 %v3743, 0.0
      %v3808 = vmax.f32 %v3744, 0.0
      %v3809 = vmax.f32 %v3745, 0.0
      %v3810 = vmax.f32 %v3746, 0.0
      %v3811 = vmax.f32 %v3747, 0.0
      %v3812 = vmax.f32 %v3748, 0.0
      %v3813 = vmax.f32 %v3749, 0.0
      %v3814 = vmax.f32 %v3750, 0.0
      %v3815 = vmax.f32 %v3751, 0.0
      %v3816 = vmax.f32 %v3752, 0.0
      %v3817 = vmax.f32 %v3753, 0.0
      %v3818 = vmax.f32 %v3754, 0.0
      %v3819 = vpack.c.bf16 %v3756, %v3755
      %v3820 = vpack.c.bf16 %v3758, %v3757
      %v3821 = vpack.c.bf16 %v3760, %v3759
      %v3822 = vpack.c.bf16 %v3762, %v3761
      %v3823 = vpack.c.bf16 %v3764, %v3763
      %v3824 = vpack.c.bf16 %v3766, %v3765
      %v3825 = vpack.c.bf16 %v3768, %v3767
      %v3826 = vpack.c.bf16 %v3770, %v3769
      %v3827 = vpack.c.bf16 %v3772, %v3771
      %v3828 = vpack.c.bf16 %v3774, %v3773
      %v3829 = vpack.c.bf16 %v3776, %v3775
      %v3830 = vpack.c.bf16 %v3778, %v3777
      %v3831 = vpack.c.bf16 %v3780, %v3779
      %v3832 = vpack.c.bf16 %v3782, %v3781
      %v3833 = vpack.c.bf16 %v3784, %v3783
      %v3834 = vpack.c.bf16 %v3786, %v3785
      %v3835 = vpack.c.bf16 %v3788, %v3787
      %v3836 = vpack.c.bf16 %v3790, %v3789
      %v3837 = vpack.c.bf16 %v3792, %v3791
      %v3838 = vpack.c.bf16 %v3794, %v3793
      %v3839 = vpack.c.bf16 %v3796, %v3795
      %v3840 = vpack.c.bf16 %v3798, %v3797
      %v3841 = vpack.c.bf16 %v3800, %v3799
      %v3842 = vpack.c.bf16 %v3802, %v3801
      %v3843 = vpack.c.bf16 %v3804, %v3803
      %v3844 = vpack.c.bf16 %v3806, %v3805
      %v3845 = vpack.c.bf16 %v3808, %v3807
      %v3846 = vpack.c.bf16 %v3810, %v3809
      %v3847 = vpack.c.bf16 %v3812, %v3811
      %v3848 = vpack.c.bf16 %v3814, %v3813
      %v3849 = vpack.c.bf16 %v3816, %v3815
      %v3850 = vpack.c.bf16 %v3818, %v3817
      %v3851 = vld [vmem:[%s3] sm:$0x3]
      %v3853 = vsel %vm351, %v3819, 0
      %v3856 = vsel %vm351, %v3820, 0
      %v3859 = vsel %vm351, %v3821, 0
      %v3862 = vsel %vm351, %v3822, 0
      %v3865 = vsel %vm351, %v3823, 0
      %v3868 = vsel %vm351, %v3824, 0
      %v3871 = vsel %vm351, %v3825, 0
      %v3874 = vsel %vm351, %v3826, 0
      %v3877 = vsel %vm351, %v3827, 0
      %v3880 = vsel %vm351, %v3828, 0
      %v3883 = vsel %vm351, %v3829, 0
      %v3886 = vsel %vm351, %v3830, 0
      %v3889 = vsel %vm351, %v3831, 0
      %v3892 = vsel %vm351, %v3832, 0
      %v3895 = vsel %vm351, %v3833, 0
      %v3898 = vsel %vm351, %v3834, 0
      %v3901 = vsel %vm351, %v3835, 0
      %v3904 = vsel %vm351, %v3836, 0
      %v3907 = vsel %vm351, %v3837, 0
      %v3910 = vsel %vm351, %v3838, 0
      %v3913 = vsel %vm351, %v3839, 0
      %v3916 = vsel %vm351, %v3840, 0
      %v3919 = vsel %vm351, %v3841, 0
      %v3922 = vsel %vm351, %v3842, 0
      %v3925 = vsel %vm351, %v3843, 0
      %v3928 = vsel %vm351, %v3844, 0
      %v3931 = vsel %vm351, %v3845, 0
      %v3934 = vsel %vm351, %v3846, 0
      %v3937 = vsel %vm351, %v3847, 0
      %v3940 = vsel %vm351, %v3848, 0
      %v3943 = vsel %vm351, %v3849, 0
      %v3946 = vsel %vm351, %v3850, 0
      %vm3948 = vcmask 1041408
      %v3950 = vsel %vm3948, %v3851, 0
      %3952 = vmatprep.subr.bf16.mxu0 0
      %3953 = vmatpush1.bf16.msra.mxu0 %v3950
      %3954 = vmatprep.subr.bf16.mxu0 0
      %3955 = vmatpush1.bf16.msra.mxu0 0
      %3956 = vmatprep.subr.bf16.mxu0 0
      %3957 = vmatpush1.bf16.msra.mxu0 0
      %3958 = vmatprep.subr.bf16.mxu0 0
      %3959 = vmatpush1.bf16.msra.mxu0 0
      %3960 = vmatprep.subr.bf16.mxu0 0
      %3961 = vmatpush1.bf16.msra.mxu0 0
      %3962 = vmatprep.subr.bf16.mxu0 0
      %3963 = vmatpush1.bf16.msra.mxu0 0
      %3964 = vmatprep.subr.bf16.mxu0 0
      %3965 = vmatpush1.bf16.msra.mxu0 0
      %3966 = vmatprep.subr.bf16.mxu0 0
      %3967 = vmatpush1.bf16.msra.mxu0 0
      %3968 = vmatprep.subr.bf16.mxu0 0
      %3969 = vmatpush1.bf16.msra.mxu0 0
      %3970 = vmatprep.subr.bf16.mxu0 0
      %3971 = vmatpush1.bf16.msra.mxu0 0
      %3972 = vmatprep.subr.bf16.mxu0 0
      %3973 = vmatpush1.bf16.msra.mxu0 0
      %3974 = vmatprep.subr.bf16.mxu0 0
      %3975 = vmatpush1.bf16.msra.mxu0 0
      %3976 = vmatprep.subr.bf16.mxu0 0
      %3977 = vmatpush1.bf16.msra.mxu0 0
      %3978 = vmatprep.subr.bf16.mxu0 0
      %3979 = vmatpush1.bf16.msra.mxu0 0
      %3980 = vmatprep.subr.bf16.mxu0 0
      %3981 = vmatpush1.bf16.msra.mxu0 0
      %3982 = vmatprep.subr.bf16.mxu0 0
      %3983 = vmatpush1.bf16.msra.mxu0 0
      %3984 = vmatprep.mubr.bf16.mxu0 0
      %3985 = vmatmul.mubr.bf16.gmra.mrb[0].mxu0 %v3853
      %v3986 = vpop.f32.mrb[0].mxu0
      %v3987 = vadd.f32 0.0, %v3986
      %v3988 = vpop.f32.mrb[0].mxu0
      %v3989 = vpop.f32.mrb[0].mxu0
      %v3990 = vadd.f32 0.0, %v3989
      %v3991 = vpop.f32.mrb[0].mxu0
      %3992 = vmatprep.mubr.bf16.mxu0 0
      %3993 = vmatmul.mubr.bf16.gmra.mrb[0].mxu0 %v3856
      %v3994 = vpop.f32.mrb[0].mxu0
      %v3995 = vpop.f32.mrb[0].mxu0
      %v3996 = vpop.f32.mrb[0].mxu0
      %v3997 = vpop.f32.mrb[0].mxu0
      %3998 = vmatprep.mubr.bf16.mxu0 0
      %3999 = vmatmul.mubr.bf16.gmra.mrb[0].mxu0 %v3859
      %v4000 = vpop.f32.mrb[0].mxu0
      %v4001 = vadd.f32 0.0, %v4000
      %v4002 = vpop.f32.mrb[0].mxu0
      %v4003 = vpop.f32.mrb[0].mxu0
      %v4004 = vadd.f32 0.0, %v4003
      %v4005 = vpop.f32.mrb[0].mxu0
      %4006 = vmatprep.mubr.bf16.mxu0 0
      %4007 = vmatmul.mubr.bf16.gmra.mrb[0].mxu0 %v3862
      %v4008 = vpop.f32.mrb[0].mxu0
      %v4009 = vpop.f32.mrb[0].mxu0
      %v4010 = vpop.f32.mrb[0].mxu0
      %v4011 = vpop.f32.mrb[0].mxu0
      %4012 = vmatprep.mubr.bf16.mxu0 0
      %4013 = vmatmul.mubr.bf16.gmra.mrb[0].mxu0 %v3865
      %v4014 = vpop.f32.mrb[0].mxu0
      %v4015 = vadd.f32 0.0, %v4014
      %v4016 = vpop.f32.mrb[0].mxu0
      %v4017 = vpop.f32.mrb[0].mxu0
      %v4018 = vadd.f32 0.0, %v4017
      %v4019 = vpop.f32.mrb[0].mxu0
      %4020 = vmatprep.mubr.bf16.mxu0 0
      %4021 = vmatmul.mubr.bf16.gmra.mrb[0].mxu0 %v3868
      %v4022 = vpop.f32.mrb[0].mxu0
      %v4023 = vpop.f32.mrb[0].mxu0
      %v4024 = vpop.f32.mrb[0].mxu0
      %v4025 = vpop.f32.mrb[0].mxu0
      %4026 = vmatprep.mubr.bf16.mxu0 0
      %4027 = vmatmul.mubr.bf16.gmra.mrb[0].mxu0 %v3871
      %v4028 = vpop.f32.mrb[0].mxu0
      %v4029 = vadd.f32 0.0, %v4028
      %v4030 = vpop.f32.mrb[0].mxu0
      %v4031 = vpop.f32.mrb[0].mxu0
      %v4032 = vadd.f32 0.0, %v4031
      %v4033 = vpop.f32.mrb[0].mxu0
      %4034 = vmatprep.mubr.bf16.mxu0 0
      %4035 = vmatmul.mubr.bf16.gmra.mrb[0].mxu0 %v3874
      %v4036 = vpop.f32.mrb[0].mxu0
      %v4037 = vpop.f32.mrb[0].mxu0
      %v4038 = vpop.f32.mrb[0].mxu0
      %v4039 = vpop.f32.mrb[0].mxu0
      %4040 = vmatprep.mubr.bf16.mxu0 0
      %4041 = vmatmul.mubr.bf16.gmra.mrb[0].mxu0 %v3877
      %v4042 = vpop.f32.mrb[0].mxu0
      %v4043 = vadd.f32 0.0, %v4042
      %v4044 = vpop.f32.mrb[0].mxu0
      %v4045 = vpop.f32.mrb[0].mxu0
      %v4046 = vadd.f32 0.0, %v4045
      %v4047 = vpop.f32.mrb[0].mxu0
      %4048 = vmatprep.mubr.bf16.mxu0 0
      %4049 = vmatmul.mubr.bf16.gmra.mrb[0].mxu0 %v3880
      %v4050 = vpop.f32.mrb[0].mxu0
      %v4051 = vpop.f32.mrb[0].mxu0
      %v4052 = vpop.f32.mrb[0].mxu0
      %v4053 = vpop.f32.mrb[0].mxu0
      %4054 = vmatprep.mubr.bf16.mxu0 0
      %4055 = vmatmul.mubr.bf16.gmra.mrb[0].mxu0 %v3883
      %v4056 = vpop.f32.mrb[0].mxu0
      %v4057 = vadd.f32 0.0, %v4056
      %v4058 = vpop.f32.mrb[0].mxu0
      %v4059 = vpop.f32.mrb[0].mxu0
      %v4060 = vadd.f32 0.0, %v4059
      %v4061 = vpop.f32.mrb[0].mxu0
      %4062 = vmatprep.mubr.bf16.mxu0 0
      %4063 = vmatmul.mubr.bf16.gmra.mrb[0].mxu0 %v3886
      %v4064 = vpop.f32.mrb[0].mxu0
      %v4065 = vpop.f32.mrb[0].mxu0
      %v4066 = vpop.f32.mrb[0].mxu0
      %v4067 = vpop.f32.mrb[0].mxu0
      %4068 = vmatprep.mubr.bf16.mxu0 0
      %4069 = vmatmul.mubr.bf16.gmra.mrb[0].mxu0 %v3889
      %v4070 = vpop.f32.mrb[0].mxu0
      %v4071 = vadd.f32 0.0, %v4070
      %v4072 = vpop.f32.mrb[0].mxu0
      %v4073 = vpop.f32.mrb[0].mxu0
      %v4074 = vadd.f32 0.0, %v4073
      %v4075 = vpop.f32.mrb[0].mxu0
      %4076 = vmatprep.mubr.bf16.mxu0 0
      %4077 = vmatmul.mubr.bf16.gmra.mrb[0].mxu0 %v3892
      %v4078 = vpop.f32.mrb[0].mxu0
      %v4079 = vpop.f32.mrb[0].mxu0
      %v4080 = vpop.f32.mrb[0].mxu0
      %v4081 = vpop.f32.mrb[0].mxu0
      %4082 = vmatprep.mubr.bf16.mxu0 0
      %4083 = vmatmul.mubr.bf16.gmra.mrb[0].mxu0 %v3895
      %v4084 = vpop.f32.mrb[0].mxu0
      %v4085 = vadd.f32 0.0, %v4084
      %v4086 = vpop.f32.mrb[0].mxu0
      %v4087 = vpop.f32.mrb[0].mxu0
      %v4088 = vadd.f32 0.0, %v4087
      %v4089 = vpop.f32.mrb[0].mxu0
      %4090 = vmatprep.mubr.bf16.mxu0 0
      %4091 = vmatmul.mubr.bf16.gmra.mrb[0].mxu0 %v3898
      %v4092 = vpop.f32.mrb[0].mxu0
      %v4093 = vpop.f32.mrb[0].mxu0
      %v4094 = vpop.f32.mrb[0].mxu0
      %v4095 = vpop.f32.mrb[0].mxu0
      %4096 = vmatprep.mubr.bf16.mxu0 0
      %4097 = vmatmul.mubr.bf16.gmra.mrb[0].mxu0 %v3901
      %v4098 = vpop.f32.mrb[0].mxu0
      %v4099 = vadd.f32 0.0, %v4098
      %v4100 = vpop.f32.mrb[0].mxu0
      %v4101 = vpop.f32.mrb[0].mxu0
      %v4102 = vadd.f32 0.0, %v4101
      %v4103 = vpop.f32.mrb[0].mxu0
      %4104 = vmatprep.mubr.bf16.mxu0 0
      %4105 = vmatmul.mubr.bf16.gmra.mrb[0].mxu0 %v3904
      %v4106 = vpop.f32.mrb[0].mxu0
      %v4107 = vpop.f32.mrb[0].mxu0
      %v4108 = vpop.f32.mrb[0].mxu0
      %v4109 = vpop.f32.mrb[0].mxu0
      %4110 = vmatprep.mubr.bf16.mxu0 0
      %4111 = vmatmul.mubr.bf16.gmra.mrb[0].mxu0 %v3907
      %v4112 = vpop.f32.mrb[0].mxu0
      %v4113 = vadd.f32 0.0, %v4112
      %v4114 = vpop.f32.mrb[0].mxu0
      %v4115 = vpop.f32.mrb[0].mxu0
      %v4116 = vadd.f32 0.0, %v4115
      %v4117 = vpop.f32.mrb[0].mxu0
      %4118 = vmatprep.mubr.bf16.mxu0 0
      %4119 = vmatmul.mubr.bf16.gmra.mrb[0].mxu0 %v3910
      %v4120 = vpop.f32.mrb[0].mxu0
      %v4121 = vpop.f32.mrb[0].mxu0
      %v4122 = vpop.f32.mrb[0].mxu0
      %v4123 = vpop.f32.mrb[0].mxu0
      %4124 = vmatprep.mubr.bf16.mxu0 0
      %4125 = vmatmul.mubr.bf16.gmra.mrb[0].mxu0 %v3913
      %v4126 = vpop.f32.mrb[0].mxu0
      %v4127 = vadd.f32 0.0, %v4126
      %v4128 = vpop.f32.mrb[0].mxu0
      %v4129 = vpop.f32.mrb[0].mxu0
      %v4130 = vadd.f32 0.0, %v4129
      %v4131 = vpop.f32.mrb[0].mxu0
      %4132 = vmatprep.mubr.bf16.mxu0 0
      %4133 = vmatmul.mubr.bf16.gmra.mrb[0].mxu0 %v3916
      %v4134 = vpop.f32.mrb[0].mxu0
      %v4135 = vpop.f32.mrb[0].mxu0
      %v4136 = vpop.f32.mrb[0].mxu0
      %v4137 = vpop.f32.mrb[0].mxu0
      %4138 = vmatprep.mubr.bf16.mxu0 0
      %4139 = vmatmul.mubr.bf16.gmra.mrb[0].mxu0 %v3919
      %v4140 = vpop.f32.mrb[0].mxu0
      %v4141 = vadd.f32 0.0, %v4140
      %v4142 = vpop.f32.mrb[0].mxu0
      %v4143 = vpop.f32.mrb[0].mxu0
      %v4144 = vadd.f32 0.0, %v4143
      %v4145 = vpop.f32.mrb[0].mxu0
      %4146 = vmatprep.mubr.bf16.mxu0 0
      %4147 = vmatmul.mubr.bf16.gmra.mrb[0].mxu0 %v3922
      %v4148 = vpop.f32.mrb[0].mxu0
      %v4149 = vpop.f32.mrb[0].mxu0
      %v4150 = vpop.f32.mrb[0].mxu0
      %v4151 = vpop.f32.mrb[0].mxu0
      %4152 = vmatprep.mubr.bf16.mxu0 0
      %4153 = vmatmul.mubr.bf16.gmra.mrb[0].mxu0 %v3925
      %v4154 = vpop.f32.mrb[0].mxu0
      %v4155 = vadd.f32 0.0, %v4154
      %v4156 = vpop.f32.mrb[0].mxu0
      %v4157 = vpop.f32.mrb[0].mxu0
      %v4158 = vadd.f32 0.0, %v4157
      %v4159 = vpop.f32.mrb[0].mxu0
      %4160 = vmatprep.mubr.bf16.mxu0 0
      %4161 = vmatmul.mubr.bf16.gmra.mrb[0].mxu0 %v3928
      %v4162 = vpop.f32.mrb[0].mxu0
      %v4163 = vpop.f32.mrb[0].mxu0
      %v4164 = vpop.f32.mrb[0].mxu0
      %v4165 = vpop.f32.mrb[0].mxu0
      %4166 = vmatprep.mubr.bf16.mxu0 0
      %4167 = vmatmul.mubr.bf16.gmra.mrb[0].mxu0 %v3931
      %v4168 = vpop.f32.mrb[0].mxu0
      %v4169 = vadd.f32 0.0, %v4168
      %v4170 = vpop.f32.mrb[0].mxu0
      %v4171 = vpop.f32.mrb[0].mxu0
      %v4172 = vadd.f32 0.0, %v4171
      %v4173 = vpop.f32.mrb[0].mxu0
      %4174 = vmatprep.mubr.bf16.mxu0 0
      %4175 = vmatmul.mubr.bf16.gmra.mrb[0].mxu0 %v3934
      %v4176 = vpop.f32.mrb[0].mxu0
      %v4177 = vpop.f32.mrb[0].mxu0
      %v4178 = vpop.f32.mrb[0].mxu0
      %v4179 = vpop.f32.mrb[0].mxu0
      %4180 = vmatprep.mubr.bf16.mxu0 0
      %4181 = vmatmul.mubr.bf16.gmra.mrb[0].mxu0 %v3937
      %v4182 = vpop.f32.mrb[0].mxu0
      %v4183 = vadd.f32 0.0, %v4182
      %v4184 = vpop.f32.mrb[0].mxu0
      %v4185 = vpop.f32.mrb[0].mxu0
      %v4186 = vadd.f32 0.0, %v4185
      %v4187 = vpop.f32.mrb[0].mxu0
      %4188 = vmatprep.mubr.bf16.mxu0 0
      %4189 = vmatmul.mubr.bf16.gmra.mrb[0].mxu0 %v3940
      %v4190 = vpop.f32.mrb[0].mxu0
      %v4191 = vpop.f32.mrb[0].mxu0
      %v4192 = vpop.f32.mrb[0].mxu0
      %v4193 = vpop.f32.mrb[0].mxu0
      %4194 = vmatprep.mubr.bf16.mxu0 0
      %4195 = vmatmul.mubr.bf16.gmra.mrb[0].mxu0 %v3943
      %v4196 = vpop.f32.mrb[0].mxu0
      %v4197 = vadd.f32 0.0, %v4196
      %v4198 = vpop.f32.mrb[0].mxu0
      %v4199 = vpop.f32.mrb[0].mxu0
      %v4200 = vadd.f32 0.0, %v4199
      %v4201 = vpop.f32.mrb[0].mxu0
      %4202 = vmatprep.mubr.bf16.mxu0 0
      %4203 = vmatmul.mubr.bf16.gmra.mrb[0].mxu0 %v3946
      %v4204 = vpop.f32.mrb[0].mxu0
      %v4205 = vpop.f32.mrb[0].mxu0
      %v4206 = vpop.f32.mrb[0].mxu0
      %v4207 = vpop.f32.mrb[0].mxu0
      %4208 = vdwg.mxu0
      %v4209 = vld [vmem:[%s334] sm:$0xf]
      %v4210 = vld [vmem:[%s334 + $0x4] sm:$0xf]
      %v4211 = vld [vmem:[%s334 + $0x10] sm:$0xf]
      %v4212 = vld [vmem:[%s334 + $0x14] sm:$0xf]
      %v4213 = vld [vmem:[%s334 + $0x20] sm:$0xf]
      %v4214 = vld [vmem:[%s334 + $0x24] sm:$0xf]
      %v4215 = vld [vmem:[%s334 + $0x30] sm:$0xf]
      %v4216 = vld [vmem:[%s334 + $0x34] sm:$0xf]
      %v4217 = vld [vmem:[%s334 + $0x40] sm:$0xf]
      %v4218 = vld [vmem:[%s334 + $0x44] sm:$0xf]
      %v4219 = vld [vmem:[%s334 + $0x50] sm:$0xf]
      %v4220 = vld [vmem:[%s334 + $0x54] sm:$0xf]
      %v4221 = vld [vmem:[%s334 + $0x60] sm:$0xf]
      %v4222 = vld [vmem:[%s334 + $0x64] sm:$0xf]
      %v4223 = vld [vmem:[%s334 + $0x70] sm:$0xf]
      %v4224 = vld [vmem:[%s334 + $0x74] sm:$0xf]
      %v4225 = vld [vmem:[%s334 + $0x80] sm:$0xf]
      %v4226 = vld [vmem:[%s334 + $0x84] sm:$0xf]
      %v4227 = vld [vmem:[%s334 + $0x90] sm:$0xf]
      %v4228 = vld [vmem:[%s334 + $0x94] sm:$0xf]
      %v4229 = vld [vmem:[%s334 + $0xa0] sm:$0xf]
      %v4230 = vld [vmem:[%s334 + $0xa4] sm:$0xf]
      %v4231 = vld [vmem:[%s334 + $0xb0] sm:$0xf]
      %v4232 = vld [vmem:[%s334 + $0xb4] sm:$0xf]
      %v4233 = vld [vmem:[%s334 + $0xc0] sm:$0xf]
      %v4234 = vld [vmem:[%s334 + $0xc4] sm:$0xf]
      %v4235 = vld [vmem:[%s334 + $0xd0] sm:$0xf]
      %v4236 = vld [vmem:[%s334 + $0xd4] sm:$0xf]
      %v4237 = vld [vmem:[%s334 + $0xe0] sm:$0xf]
      %v4238 = vld [vmem:[%s334 + $0xe4] sm:$0xf]
      %v4239 = vld [vmem:[%s334 + $0xf0] sm:$0xf]
      %v4240 = vld [vmem:[%s334 + $0xf4] sm:$0xf]
      %v4241 = vunpack.c.l.bf16 %v4209
      %v4242 = vunpack.c.l.bf16 %v4210
      %v4243 = vunpack.c.l.bf16 %v4211
      %v4244 = vunpack.c.l.bf16 %v4212
      %v4245 = vunpack.c.l.bf16 %v4213
      %v4246 = vunpack.c.l.bf16 %v4214
      %v4247 = vunpack.c.l.bf16 %v4215
      %v4248 = vunpack.c.l.bf16 %v4216
      %v4249 = vunpack.c.l.bf16 %v4217
      %v4250 = vunpack.c.l.bf16 %v4218
      %v4251 = vunpack.c.l.bf16 %v4219
      %v4252 = vunpack.c.l.bf16 %v4220
      %v4253 = vunpack.c.l.bf16 %v4221
      %v4254 = vunpack.c.l.bf16 %v4222
      %v4255 = vunpack.c.l.bf16 %v4223
      %v4256 = vunpack.c.l.bf16 %v4224
      %v4257 = vunpack.c.l.bf16 %v4225
      %v4258 = vunpack.c.l.bf16 %v4226
      %v4259 = vunpack.c.l.bf16 %v4227
      %v4260 = vunpack.c.l.bf16 %v4228
      %v4261 = vunpack.c.l.bf16 %v4229
      %v4262 = vunpack.c.l.bf16 %v4230
      %v4263 = vunpack.c.l.bf16 %v4231
      %v4264 = vunpack.c.l.bf16 %v4232
      %v4265 = vunpack.c.l.bf16 %v4233
      %v4266 = vunpack.c.l.bf16 %v4234
      %v4267 = vunpack.c.l.bf16 %v4235
      %v4268 = vunpack.c.l.bf16 %v4236
      %v4269 = vunpack.c.l.bf16 %v4237
      %v4270 = vunpack.c.l.bf16 %v4238
      %v4271 = vunpack.c.l.bf16 %v4239
      %v4272 = vunpack.c.l.bf16 %v4240
      %v4273 = vld [vmem:[%s6] sm:$0x1]
      %v4275 = vlaneseq
      %v4276 = vshrl.u32 %v4275, 7
      %v4277 = vsub.s32 0, %v4276
      %v4278 = vrot.slane %v4273, %v4277
      %v4280 = vadd.f32 %v3987, %v4278
      %v4281 = vadd.f32 %v3990, %v4278
      %v4282 = vadd.f32 %v4001, %v4278
      %v4283 = vadd.f32 %v4004, %v4278
      %v4284 = vadd.f32 %v4015, %v4278
      %v4285 = vadd.f32 %v4018, %v4278
      %v4286 = vadd.f32 %v4029, %v4278
      %v4287 = vadd.f32 %v4032, %v4278
      %v4288 = vadd.f32 %v4043, %v4278
      %v4289 = vadd.f32 %v4046, %v4278
      %v4290 = vadd.f32 %v4057, %v4278
      %v4291 = vadd.f32 %v4060, %v4278
      %v4292 = vadd.f32 %v4071, %v4278
      %v4293 = vadd.f32 %v4074, %v4278
      %v4294 = vadd.f32 %v4085, %v4278
      %v4295 = vadd.f32 %v4088, %v4278
      %v4296 = vadd.f32 %v4099, %v4278
      %v4297 = vadd.f32 %v4102, %v4278
      %v4298 = vadd.f32 %v4113, %v4278
      %v4299 = vadd.f32 %v4116, %v4278
      %v4300 = vadd.f32 %v4127, %v4278
      %v4301 = vadd.f32 %v4130, %v4278
      %v4302 = vadd.f32 %v4141, %v4278
      %v4303 = vadd.f32 %v4144, %v4278
      %v4304 = vadd.f32 %v4155, %v4278
      %v4305 = vadd.f32 %v4158, %v4278
      %v4306 = vadd.f32 %v4169, %v4278
      %v4307 = vadd.f32 %v4172, %v4278
      %v4308 = vadd.f32 %v4183, %v4278
      %v4309 = vadd.f32 %v4186, %v4278
      %v4310 = vadd.f32 %v4197, %v4278
      %v4311 = vadd.f32 %v4200, %v4278
      %v4312 = vadd.f32 %v4280, %v4241
      %v4313 = vadd.f32 %v4281, %v4242
      %v4314 = vadd.f32 %v4282, %v4243
      %v4315 = vadd.f32 %v4283, %v4244
      %v4316 = vadd.f32 %v4284, %v4245
      %v4317 = vadd.f32 %v4285, %v4246
      %v4318 = vadd.f32 %v4286, %v4247
      %v4319 = vadd.f32 %v4287, %v4248
      %v4320 = vadd.f32 %v4288, %v4249
      %v4321 = vadd.f32 %v4289, %v4250
      %v4322 = vadd.f32 %v4290, %v4251
      %v4323 = vadd.f32 %v4291, %v4252
      %v4324 = vadd.f32 %v4292, %v4253
      %v4325 = vadd.f32 %v4293, %v4254
      %v4326 = vadd.f32 %v4294, %v4255
      %v4327 = vadd.f32 %v4295, %v4256
      %v4328 = vadd.f32 %v4296, %v4257
      %v4329 = vadd.f32 %v4297, %v4258
      %v4330 = vadd.f32 %v4298, %v4259
      %v4331 = vadd.f32 %v4299, %v4260
      %v4332 = vadd.f32 %v4300, %v4261
      %v4333 = vadd.f32 %v4301, %v4262
      %v4334 = vadd.f32 %v4302, %v4263
      %v4335 = vadd.f32 %v4303, %v4264
      %v4336 = vadd.f32 %v4304, %v4265
      %v4337 = vadd.f32 %v4305, %v4266
      %v4338 = vadd.f32 %v4306, %v4267
      %v4339 = vadd.f32 %v4307, %v4268
      %v4340 = vadd.f32 %v4308, %v4269
      %v4341 = vadd.f32 %v4309, %v4270
      %v4342 = vadd.f32 %v4310, %v4271
      %v4343 = vadd.f32 %v4311, %v4272
      %v4344 = vmax.f32 %v4312, 0.0
      %v4345 = vmax.f32 %v4313, 0.0
      %v4346 = vmax.f32 %v4314, 0.0
      %v4347 = vmax.f32 %v4315, 0.0
      %v4348 = vmax.f32 %v4316, 0.0
      %v4349 = vmax.f32 %v4317, 0.0
      %v4350 = vmax.f32 %v4318, 0.0
      %v4351 = vmax.f32 %v4319, 0.0
      %v4352 = vmax.f32 %v4320, 0.0
      %v4353 = vmax.f32 %v4321, 0.0
      %v4354 = vmax.f32 %v4322, 0.0
      %v4355 = vmax.f32 %v4323, 0.0
      %v4356 = vmax.f32 %v4324, 0.0
      %v4357 = vmax.f32 %v4325, 0.0
      %v4358 = vmax.f32 %v4326, 0.0
      %v4359 = vmax.f32 %v4327, 0.0
      %v4360 = vmax.f32 %v4328, 0.0
      %v4361 = vmax.f32 %v4329, 0.0
      %v4362 = vmax.f32 %v4330, 0.0
      %v4363 = vmax.f32 %v4331, 0.0
      %v4364 = vmax.f32 %v4332, 0.0
      %v4365 = vmax.f32 %v4333, 0.0
      %v4366 = vmax.f32 %v4334, 0.0
      %v4367 = vmax.f32 %v4335, 0.0
      %v4368 = vmax.f32 %v4336, 0.0
      %v4369 = vmax.f32 %v4337, 0.0
      %v4370 = vmax.f32 %v4338, 0.0
      %v4371 = vmax.f32 %v4339, 0.0
      %v4372 = vmax.f32 %v4340, 0.0
      %v4373 = vmax.f32 %v4341, 0.0
      %v4374 = vmax.f32 %v4342, 0.0
      %v4375 = vmax.f32 %v4343, 0.0
      %v4376 = vpack.c.bf16 %v4345, %v4344
      %v4377 = vpack.c.bf16 %v4347, %v4346
      %v4378 = vpack.c.bf16 %v4349, %v4348
      %v4379 = vpack.c.bf16 %v4351, %v4350
      %v4380 = vpack.c.bf16 %v4353, %v4352
      %v4381 = vpack.c.bf16 %v4355, %v4354
      %v4382 = vpack.c.bf16 %v4357, %v4356
      %v4383 = vpack.c.bf16 %v4359, %v4358
      %v4384 = vpack.c.bf16 %v4361, %v4360
      %v4385 = vpack.c.bf16 %v4363, %v4362
      %v4386 = vpack.c.bf16 %v4365, %v4364
      %v4387 = vpack.c.bf16 %v4367, %v4366
      %v4388 = vpack.c.bf16 %v4369, %v4368
      %v4389 = vpack.c.bf16 %v4371, %v4370
      %v4390 = vpack.c.bf16 %v4373, %v4372
      %v4391 = vpack.c.bf16 %v4375, %v4374
      %v4408 = vunpack.c.l.b16 %v4376
      %v4409 = vunpack.c.h.b16 %v4376
      %v4410 = vunpack.c.l.b16 %v4377
      %v4411 = vunpack.c.h.b16 %v4377
      %v4412 = vunpack.c.l.b16 %v4378
      %v4413 = vunpack.c.h.b16 %v4378
      %v4414 = vunpack.c.l.b16 %v4379
      %v4415 = vunpack.c.h.b16 %v4379
      %v4416 = vunpack.c.l.b16 %v4380
      %v4417 = vunpack.c.h.b16 %v4380
      %v4418 = vunpack.c.l.b16 %v4381
      %v4419 = vunpack.c.h.b16 %v4381
      %v4420 = vunpack.c.l.b16 %v4382
      %v4421 = vunpack.c.h.b16 %v4382
      %v4422 = vunpack.c.l.b16 %v4383
      %v4423 = vunpack.c.h.b16 %v4383
      %v4424 = vunpack.c.l.b16 %v4384
      %v4425 = vunpack.c.h.b16 %v4384
      %v4426 = vunpack.c.l.b16 %v4385
      %v4427 = vunpack.c.h.b16 %v4385
      %v4428 = vunpack.c.l.b16 %v4386
      %v4429 = vunpack.c.h.b16 %v4386
      %v4430 = vunpack.c.l.b16 %v4387
      %v4431 = vunpack.c.h.b16 %v4387
      %v4432 = vunpack.c.l.b16 %v4388
      %v4433 = vunpack.c.h.b16 %v4388
      %v4434 = vunpack.c.l.b16 %v4389
      %v4435 = vunpack.c.h.b16 %v4389
      %v4436 = vunpack.c.l.b16 %v4390
      %v4437 = vunpack.c.h.b16 %v4390
      %v4438 = vunpack.c.l.b16 %v4391
      %v4439 = vunpack.c.h.b16 %v4391
      %v4440 = vpack.c.b16 %v4408, %v4408
      %v4441 = vpack.c.b16 %v4409, %v4409
      %v4442 = vpack.c.b16 %v4410, %v4410
      %v4443 = vpack.c.b16 %v4411, %v4411
      %v4444 = vpack.c.b16 %v4412, %v4412
      %v4445 = vpack.c.b16 %v4413, %v4413
      %v4446 = vpack.c.b16 %v4414, %v4414
      %v4447 = vpack.c.b16 %v4415, %v4415
      %v4448 = vpack.c.b16 %v4416, %v4416
      %v4449 = vpack.c.b16 %v4417, %v4417
      %v4450 = vpack.c.b16 %v4418, %v4418
      %v4451 = vpack.c.b16 %v4419, %v4419
      %v4452 = vpack.c.b16 %v4420, %v4420
      %v4453 = vpack.c.b16 %v4421, %v4421
      %v4454 = vpack.c.b16 %v4422, %v4422
      %v4455 = vpack.c.b16 %v4423, %v4423
      %v4456 = vpack.c.b16 %v4424, %v4424
      %v4457 = vpack.c.b16 %v4425, %v4425
      %v4458 = vpack.c.b16 %v4426, %v4426
      %v4459 = vpack.c.b16 %v4427, %v4427
      %v4460 = vpack.c.b16 %v4428, %v4428
      %v4461 = vpack.c.b16 %v4429, %v4429
      %v4462 = vpack.c.b16 %v4430, %v4430
      %v4463 = vpack.c.b16 %v4431, %v4431
      %v4464 = vpack.c.b16 %v4432, %v4432
      %v4465 = vpack.c.b16 %v4433, %v4433
      %v4466 = vpack.c.b16 %v4434, %v4434
      %v4467 = vpack.c.b16 %v4435, %v4435
      %v4468 = vpack.c.b16 %v4436, %v4436
      %v4469 = vpack.c.b16 %v4437, %v4437
      %v4470 = vpack.c.b16 %v4438, %v4438
      %v4471 = vpack.c.b16 %v4439, %v4439
      %vm4504 = vcmask 125952
      %4505 = vst.msk [vmem:[%s345] sm:$0xf] %vm4504, %v4440
      %4506 = vst.msk [vmem:[%s345 + $0x4] sm:$0xf] %vm4504, %v4441
      %4507 = vst.msk [vmem:[%s345 + $0x8] sm:$0xf] %vm4504, %v4442
      %4508 = vst.msk [vmem:[%s345 + $0xc] sm:$0xf] %vm4504, %v4443
      %4509 = vst.msk [vmem:[%s345 + $0x10] sm:$0xf] %vm4504, %v4444
      %4510 = vst.msk [vmem:[%s345 + $0x14] sm:$0xf] %vm4504, %v4445
      %4511 = vst.msk [vmem:[%s345 + $0x18] sm:$0xf] %vm4504, %v4446
      %4512 = vst.msk [vmem:[%s345 + $0x1c] sm:$0xf] %vm4504, %v4447
      %4513 = vst.msk [vmem:[%s345 + $0x20] sm:$0xf] %vm4504, %v4448
      %4514 = vst.msk [vmem:[%s345 + $0x24] sm:$0xf] %vm4504, %v4449
      %4515 = vst.msk [vmem:[%s345 + $0x28] sm:$0xf] %vm4504, %v4450
      %4516 = vst.msk [vmem:[%s345 + $0x2c] sm:$0xf] %vm4504, %v4451
      %4517 = vst.msk [vmem:[%s345 + $0x30] sm:$0xf] %vm4504, %v4452
      %4518 = vst.msk [vmem:[%s345 + $0x34] sm:$0xf] %vm4504, %v4453
      %4519 = vst.msk [vmem:[%s345 + $0x38] sm:$0xf] %vm4504, %v4454
      %4520 = vst.msk [vmem:[%s345 + $0x3c] sm:$0xf] %vm4504, %v4455
      %4521 = vst.msk [vmem:[%s345 + $0x40] sm:$0xf] %vm4504, %v4456
      %4522 = vst.msk [vmem:[%s345 + $0x44] sm:$0xf] %vm4504, %v4457
      %4523 = vst.msk [vmem:[%s345 + $0x48] sm:$0xf] %vm4504, %v4458
      %4524 = vst.msk [vmem:[%s345 + $0x4c] sm:$0xf] %vm4504, %v4459
      %4525 = vst.msk [vmem:[%s345 + $0x50] sm:$0xf] %vm4504, %v4460
      %4526 = vst.msk [vmem:[%s345 + $0x54] sm:$0xf] %vm4504, %v4461
      %4527 = vst.msk [vmem:[%s345 + $0x58] sm:$0xf] %vm4504, %v4462
      %4528 = vst.msk [vmem:[%s345 + $0x5c] sm:$0xf] %vm4504, %v4463
      %4529 = vst.msk [vmem:[%s345 + $0x60] sm:$0xf] %vm4504, %v4464
      %4530 = vst.msk [vmem:[%s345 + $0x64] sm:$0xf] %vm4504, %v4465
      %4531 = vst.msk [vmem:[%s345 + $0x68] sm:$0xf] %vm4504, %v4466
      %4532 = vst.msk [vmem:[%s345 + $0x6c] sm:$0xf] %vm4504, %v4467
      %4533 = vst.msk [vmem:[%s345 + $0x70] sm:$0xf] %vm4504, %v4468
      %4534 = vst.msk [vmem:[%s345 + $0x74] sm:$0xf] %vm4504, %v4469
      %4535 = vst.msk [vmem:[%s345 + $0x78] sm:$0xf] %vm4504, %v4470
      %4536 = vst.msk [vmem:[%s345 + $0x7c] sm:$0xf] %vm4504, %v4471
      %s4537 = smul.u32 16, %s24
      %p4538 = scmp.lt.s32.totalorder %s23, 1
      %s4539 = scalar_select %p4538, %s23, 1
      %p4540 = scmp.lt.s32.totalorder %s4537, 15
      %s4541 = scalar_select %p4540, %s4537, 15
      %s4542 = smul.addr %s4541, 2
      %s4543 = smul.addr %s4539, 32
      %s4544 = sadd.s32 %s4542, %s4543
      %s4545 = smul.addr %s4544, 4
      %s4546 = scalar_lea.vmem %s8, %s4545
      // Predicated region
      $region53: #{bottleneck_forward.1} parent=51 // pred_check
        %p4547 = pneg %p226
      $region54: #{bottleneck_forward.1} parent=51 // pred_check_branch
        %4549 = sbr.rel (%p4547) target = $region56
      $region55: #{bottleneck_forward.1} parent=51 // pred_region
        %s4550 = smul.u32 16, %s24
      $region56: #{bottleneck_forward.1} parent=51 // pred_fallthru
        _
    $region52: #{bottleneck_forward.1} parent=5 // pred_fallthru
      _
    %p4551 = scmp.le.s32.totalorder 2, %s14
    // Predicated region
    $region57: #{bottleneck_forward.1} parent=5 // pred_check
      %p4552 = pneg %p4551
    $region58: #{bottleneck_forward.1} parent=5 // pred_check_branch
      %4554 = sbr.rel (%p4552) target = $region60
    $region59: #{bottleneck_forward.1} parent=5 // pred_region
      %s4555 = ssub.s32 %s14, 2
      // Predicated region
      $region61: #{bottleneck_forward.1} parent=59 // pred_check
        %p4556 = pneg %p232
      $region62: #{bottleneck_forward.1} parent=59 // pred_check_branch
        %4558 = sbr.rel (%p4556) target = $region64
      $region63: #{bottleneck_forward.1} parent=59 // pred_region
        %s4559 = smul.u32 16, %s26
        %p4560 = scmp.lt.s32.totalorder %s25, 1
        %s4561 = scalar_select %p4560, %s25, 1
        %p4562 = scmp.lt.s32.totalorder %s4559, 15
        %s4563 = scalar_select %p4562, %s4559, 15
        %s4564 = smul.addr %s4563, 2
        %s4565 = smul.addr %s4561, 32
        %s4566 = sadd.s32 %s4564, %s4565
        %s4567 = smul.addr %s4566, 4
        %s4568 = scalar_lea.vmem %s8, %s4567
      $region64: #{bottleneck_forward.1} parent=59 // pred_fallthru
        _
    $region60: #{bottleneck_forward.1} parent=5 // pred_fallthru
      _
  $region6: #{bottleneck_forward.1} parent=0 // loop_footer
    %s18 = sadd.s32 1, %s14
  $region7: #{bottleneck_forward.1} parent=0 // loop_footer_branch
    %13 = sbr.rel target = $region3
  $region8: #{bottleneck_forward.1} parent=0 // loop_exit
    _

</llo_original>
